<compile_context>
chip_gen: v7x
topology: tpu7x:2x2x1
jax: 0.10.0
libtpu: 0.0.40
codegen_flags: <defaults>
</compile_context>

<pallas_src>
import functools

import jax
import jax.numpy as jnp
from jax import lax
from jax.experimental import pallas as pl
from jax.experimental.pallas import tpu as pltpu


def _spatial_attention_kernel(w_ref, b_ref, x_ref, o_ref, sum_ref, max_ref,
                              *, inv_total_c):
    # w_ref : (98,) f32 SMEM   -- 7x7 conv weights, flattened [cin, ky, kx]
    # b_ref : (1,)  f32 SMEM   -- conv bias
    # x_ref : (C_blk, H, W) VMEM -- one channel chunk of one image
    # o_ref : (H, W) VMEM      -- attention map for this image
    # sum_ref, max_ref: (H, W) f32 VMEM scratch (channel-pooling accumulators)
    c_idx = pl.program_id(1)
    n_c = pl.num_programs(1)
    c_blk, H, W = x_ref.shape
    f32 = jnp.float32

    @pl.when(c_idx == 0)
    def _init():
        sum_ref[...] = jnp.zeros((H, W), f32)
        max_ref[...] = jnp.full((H, W), -jnp.inf, f32)

    # ---- channel pooling: accumulate sum and max over this channel chunk (VPU) ----
    s = sum_ref[...]
    m = max_ref[...]
    for c in range(c_blk):
        xc = x_ref[c].astype(f32)
        s = s + xc
        m = jnp.maximum(m, xc)
    sum_ref[...] = s
    max_ref[...] = m

    @pl.when(c_idx == n_c - 1)
    def _finalize():
        avg = sum_ref[...] * inv_total_c          # mean over channels
        mx = max_ref[...]                         # max over channels
        planes = (avg, mx)                        # matches torch.cat([avg, max], dim=1)

        # Column-shift matrices: (p @ S_dx)[i, j] = p[i, j + dx], zero outside.
        col_diff = (lax.broadcasted_iota(jnp.int32, (W, W), 0)
                    - lax.broadcasted_iota(jnp.int32, (W, W), 1))
        s_mats = [(col_diff == dx).astype(f32) for dx in range(-3, 4)]
        # Row-shift matrices: (T_dy @ q)[i, j] = q[i + dy, j], zero outside.
        row_diff = (lax.broadcasted_iota(jnp.int32, (H, H), 1)
                    - lax.broadcasted_iota(jnp.int32, (H, H), 0))
        t_mats = [(row_diff == dy).astype(f32) for dy in range(-3, 4)]

        # out[i,j] = b + sum_{c,ky,kx} w[c,ky,kx] * plane_c[i+ky-3, j+kx-3]  (zeros outside)
        acc = jnp.zeros((H, W), f32) + b_ref[0]
        for ky in range(7):
            row_sum = jnp.zeros((H, W), f32)
            for ci in range(2):
                # Banded matrix combining the 7 kx taps of this (ci, ky).
                band = jnp.zeros((W, W), f32)
                for kx in range(7):
                    band = band + w_ref[ci * 49 + ky * 7 + kx] * s_mats[kx]
                row_sum = row_sum + jnp.dot(planes[ci], band,
                                            preferred_element_type=f32)
            acc = acc + jnp.dot(t_mats[ky], row_sum, preferred_element_type=f32)

        # sigmoid (exact; exp runs on the EUP)
        o_ref[...] = (1.0 / (1.0 + jnp.exp(-acc))).astype(o_ref.dtype)


def spatial_attention_pallas(x, w, b, *, max_c_chunk=16):
    """SpatialAttentionModule forward.

    x: (N, C, H, W).  w: (2, 7, 7) == conv2d.weight[0] (in-channel 0 = avg, 1 = max).
    b: (1,) conv2d.bias.  Returns (N, 1, H, W).
    """
    N, C, H, W = x.shape

    # Channel-chunk size: largest divisor of C that is <= max_c_chunk
    # (bounds the per-step VMEM block for large C; remainder-free by construction).
    c_chunk = 1
    for cand in range(min(C, max_c_chunk), 0, -1):
        if C % cand == 0:
            c_chunk = cand
            break
    num_c = C // c_chunk

    w_flat = jnp.asarray(w, jnp.float32).reshape(2 * 7 * 7)
    b_arr = jnp.asarray(b, jnp.float32).reshape(1)

    kernel = functools.partial(_spatial_attention_kernel, inv_total_c=1.0 / C)

    return pl.pallas_call(
        kernel,
        out_shape=jax.ShapeDtypeStruct((N, 1, H, W), x.dtype),
        grid=(N, num_c),
        in_specs=[
            pl.BlockSpec(memory_space=pltpu.MemorySpace.SMEM),   # conv weights (98,)
            pl.BlockSpec(memory_space=pltpu.MemorySpace.SMEM),   # conv bias (1,)
            pl.BlockSpec((None, c_chunk, H, W), lambda n, c: (n, c, 0, 0)),
        ],
        out_specs=pl.BlockSpec((None, None, H, W), lambda n, c: (n, 0, 0, 0)),
        scratch_shapes=[
            pltpu.VMEM((H, W), jnp.float32),    # running channel sum
            pltpu.VMEM((H, W), jnp.float32),    # running channel max
        ],
        compiler_params=pltpu.CompilerParams(
            dimension_semantics=("parallel", "arbitrary")),
    )(w_flat, b_arr, x)


def spatial_attention_reference(x, w, b):
    """Pure-JAX reference with identical semantics (for correctness check)."""
    xf = x.astype(jnp.float32)
    avg = jnp.mean(xf, axis=1, keepdims=True)
    mx = jnp.max(xf, axis=1, keepdims=True)
    feat = jnp.concatenate([avg, mx], axis=1)                    # (N, 2, H, W)
    y = lax.conv_general_dilated(
        feat, jnp.asarray(w, jnp.float32)[None],                 # (1, 2, 7, 7) OIHW
        window_strides=(1, 1), padding=((3, 3), (3, 3)),
        dimension_numbers=("NCHW", "OIHW", "NCHW"),
        precision=lax.Precision.HIGHEST)
    y = y + jnp.asarray(b, jnp.float32).reshape(1, 1, 1, 1)
    return (1.0 / (1.0 + jnp.exp(-y))).astype(x.dtype)


if __name__ == "__main__":
    N, C, H, W = 2, 4, 16, 16

    key = jax.random.PRNGKey(0)
    k_x, k_w, k_b = jax.random.split(key, 3)

    x = jax.random.normal(k_x, (N, C, H, W), jnp.float32)
    # nn.Conv2d(2, 1, 7, padding=3): weight (1, 2, 7, 7) -> we pass weight[0], bias (1,)
    w = jax.random.normal(k_w, (2, 7, 7), jnp.float32) * 0.15
    b = jax.random.normal(k_b, (1,), jnp.float32) * 0.1

    # max_c_chunk=2 forces a 2-step channel reduction so the accumulator path is exercised.
    out = spatial_attention_pallas(x, w, b, max_c_chunk=2)
    out = jax.block_until_ready(out)

    ref = spatial_attention_reference(x, w, b)
    assert out.shape == (N, 1, H, W)
    assert jnp.allclose(out, ref, atol=1e-4, rtol=1e-4), (
        "mismatch vs reference, max abs err = "
        f"{float(jnp.max(jnp.abs(out - ref)))}")

    print("KERNEL_OK")
</pallas_src>

<mosaic_0001>
module attributes {stable_mosaic.version = 11 : i64} {
  func.func @_spatial_attention_kernel(%arg0: i32, %arg1: i32, %arg2: memref<98xf32, #tpu.memory_space<smem>>, %arg3: memref<1xf32, #tpu.memory_space<smem>>, %arg4: memref<1x2x16x16xf32, #tpu.memory_space<vmem>>, %arg5: memref<1x1x16x16xf32, #tpu.memory_space<vmem>>, %arg6: memref<16x16xf32, #tpu.memory_space<vmem>>, %arg7: memref<16x16xf32, #tpu.memory_space<vmem>>) attributes {dimension_semantics = [#tpu.dimension_semantics<parallel>, #tpu.dimension_semantics<arbitrary>], iteration_bounds = array<i64: 2, 2>, scalar_prefetch = 0 : i64, scratch_operands = 2 : i64, tpu.core_type = #tpu.core_type<tc>, window_params = [{transform_indices = @transform_0, window_bounds = array<i64: 98>}, {transform_indices = @transform_1, window_bounds = array<i64: 1>}, {transform_indices = @transform_2, window_bounds = array<i64: 1, 2, 16, 16>}, {transform_indices = @transform_3, window_bounds = array<i64: 1, 1, 16, 16>}]} {
    %c0_i32 = arith.constant 0 : i32
    %0 = arith.cmpi eq, %arg1, %c0_i32 : i32
    %1 = arith.extui %0 : i1 to i32
    %c0_i32_0 = arith.constant 0 : i32
    %2 = arith.cmpi ne, %1, %c0_i32_0 : i32
    scf.if %2 {
      %cst = arith.constant 0.000000e+00 : f32
      %18 = vector.broadcast %cst : f32 to vector<16x16xf32>
      %c0_16 = arith.constant 0 : index
      %c0_17 = arith.constant 0 : index
      %19 = vector.load %arg6[%c0_16, %c0_17] : memref<16x16xf32, #tpu.memory_space<vmem>>, vector<16x16xf32>
      tpu.vector_store %arg6[%c0_16, %c0_17], %18 {strides = array<i32>} : memref<16x16xf32, #tpu.memory_space<vmem>>, vector<16x16xf32>,
      %cst_18 = arith.constant 0xFF800000 : f32
      %20 = vector.broadcast %cst_18 : f32 to vector<16x16xf32>
      %c0_19 = arith.constant 0 : index
      %c0_20 = arith.constant 0 : index
      %21 = vector.load %arg7[%c0_19, %c0_20] : memref<16x16xf32, #tpu.memory_space<vmem>>, vector<16x16xf32>
      tpu.vector_store %arg7[%c0_19, %c0_20], %20 {strides = array<i32>} : memref<16x16xf32, #tpu.memory_space<vmem>>, vector<16x16xf32>,
    } else {
    }
    %c0 = arith.constant 0 : index
    %c0_1 = arith.constant 0 : index
    %3 = vector.load %arg6[%c0, %c0_1] : memref<16x16xf32, #tpu.memory_space<vmem>>, vector<16x16xf32>
    %c0_2 = arith.constant 0 : index
    %c0_3 = arith.constant 0 : index
    %4 = vector.load %arg7[%c0_2, %c0_3] : memref<16x16xf32, #tpu.memory_space<vmem>>, vector<16x16xf32>
    %c0_4 = arith.constant 0 : index
    %c0_5 = arith.constant 0 : index
    %c0_6 = arith.constant 0 : index
    %c0_7 = arith.constant 0 : index
    %5 = vector.load %arg4[%c0_4, %c0_5, %c0_6, %c0_7] : memref<1x2x16x16xf32, #tpu.memory_space<vmem>>, vector<1x1x16x16xf32>
    %6 = vector.shape_cast %5 : vector<1x1x16x16xf32> to vector<16x16xf32>
    %7 = arith.addf %3, %6 : vector<16x16xf32>
    %8 = arith.maximumf %4, %6 : vector<16x16xf32>
    %c0_8 = arith.constant 0 : index
    %c1 = arith.constant 1 : index
    %c0_9 = arith.constant 0 : index
    %c0_10 = arith.constant 0 : index
    %9 = vector.load %arg4[%c0_8, %c1, %c0_9, %c0_10] : memref<1x2x16x16xf32, #tpu.memory_space<vmem>>, vector<1x1x16x16xf32>
    %10 = vector.shape_cast %9 : vector<1x1x16x16xf32> to vector<16x16xf32>
    %11 = arith.addf %7, %10 : vector<16x16xf32>
    %12 = arith.maximumf %8, %10 : vector<16x16xf32>
    %c0_11 = arith.constant 0 : index
    %c0_12 = arith.constant 0 : index
    %13 = vector.load %arg6[%c0_11, %c0_12] : memref<16x16xf32, #tpu.memory_space<vmem>>, vector<16x16xf32>
    tpu.vector_store %arg6[%c0_11, %c0_12], %11 {strides = array<i32>} : memref<16x16xf32, #tpu.memory_space<vmem>>, vector<16x16xf32>,
    %c0_13 = arith.constant 0 : index
    %c0_14 = arith.constant 0 : index
    %14 = vector.load %arg7[%c0_13, %c0_14] : memref<16x16xf32, #tpu.memory_space<vmem>>, vector<16x16xf32>
    tpu.vector_store %arg7[%c0_13, %c0_14], %12 {strides = array<i32>} : memref<16x16xf32, #tpu.memory_space<vmem>>, vector<16x16xf32>,
    %c1_i32 = arith.constant 1 : i32
    %15 = arith.cmpi eq, %arg1, %c1_i32 : i32
    %16 = arith.extui %15 : i1 to i32
    %c0_i32_15 = arith.constant 0 : i32
    %17 = arith.cmpi ne, %16, %c0_i32_15 : i32
    scf.if %17 {
      %c0_16 = arith.constant 0 : index
      %c0_17 = arith.constant 0 : index
      %18 = vector.load %arg6[%c0_16, %c0_17] : memref<16x16xf32, #tpu.memory_space<vmem>>, vector<16x16xf32>
      %cst = arith.constant 2.500000e-01 : f32
      %19 = vector.broadcast %cst : f32 to vector<16x16xf32>
      %20 = arith.mulf %18, %19 : vector<16x16xf32>
      %c0_18 = arith.constant 0 : index
      %c0_19 = arith.constant 0 : index
      %21 = vector.load %arg7[%c0_18, %c0_19] : memref<16x16xf32, #tpu.memory_space<vmem>>, vector<16x16xf32>
      %22 = tpu.iota {dimensions = array<i32: 0>} : vector<16x16xi32>
      %23 = tpu.iota {dimensions = array<i32: 1>} : vector<16x16xi32>
      %24 = arith.subi %22, %23 : vector<16x16xi32>
      %c-3_i32 = arith.constant -3 : i32
      %25 = vector.broadcast %c-3_i32 : i32 to vector<16x16xi32>
      %26 = arith.cmpi eq, %24, %25 : vector<16x16xi32>
      %27 = arith.extui %26 : vector<16x16xi1> to vector<16x16xi32>
      %28 = arith.sitofp %27 : vector<16x16xi32> to vector<16x16xf32>
      %c-2_i32 = arith.constant -2 : i32
      %29 = vector.broadcast %c-2_i32 : i32 to vector<16x16xi32>
      %30 = arith.cmpi eq, %24, %29 : vector<16x16xi32>
      %31 = arith.extui %30 : vector<16x16xi1> to vector<16x16xi32>
      %32 = arith.sitofp %31 : vector<16x16xi32> to vector<16x16xf32>
      %c-1_i32 = arith.constant -1 : i32
      %33 = vector.broadcast %c-1_i32 : i32 to vector<16x16xi32>
      %34 = arith.cmpi eq, %24, %33 : vector<16x16xi32>
      %35 = arith.extui %34 : vector<16x16xi1> to vector<16x16xi32>
      %36 = arith.sitofp %35 : vector<16x16xi32> to vector<16x16xf32>
      %c0_i32_20 = arith.constant 0 : i32
      %37 = vector.broadcast %c0_i32_20 : i32 to vector<16x16xi32>
      %38 = arith.cmpi eq, %24, %37 : vector<16x16xi32>
      %39 = arith.extui %38 : vector<16x16xi1> to vector<16x16xi32>
      %40 = arith.sitofp %39 : vector<16x16xi32> to vector<16x16xf32>
      %c1_i32_21 = arith.constant 1 : i32
      %41 = vector.broadcast %c1_i32_21 : i32 to vector<16x16xi32>
      %42 = arith.cmpi eq, %24, %41 : vector<16x16xi32>
      %43 = arith.extui %42 : vector<16x16xi1> to vector<16x16xi32>
      %44 = arith.sitofp %43 : vector<16x16xi32> to vector<16x16xf32>
      %c2_i32 = arith.constant 2 : i32
      %45 = vector.broadcast %c2_i32 : i32 to vector<16x16xi32>
      %46 = arith.cmpi eq, %24, %45 : vector<16x16xi32>
      %47 = arith.extui %46 : vector<16x16xi1> to vector<16x16xi32>
      %48 = arith.sitofp %47 : vector<16x16xi32> to vector<16x16xf32>
      %c3_i32 = arith.constant 3 : i32
      %49 = vector.broadcast %c3_i32 : i32 to vector<16x16xi32>
      %50 = arith.cmpi eq, %24, %49 : vector<16x16xi32>
      %51 = arith.extui %50 : vector<16x16xi1> to vector<16x16xi32>
      %52 = arith.sitofp %51 : vector<16x16xi32> to vector<16x16xf32>
      %53 = tpu.iota {dimensions = array<i32: 1>} : vector<16x16xi32>
      %54 = tpu.iota {dimensions = array<i32: 0>} : vector<16x16xi32>
      %55 = arith.subi %53, %54 : vector<16x16xi32>
      %c-3_i32_22 = arith.constant -3 : i32
      %56 = vector.broadcast %c-3_i32_22 : i32 to vector<16x16xi32>
      %57 = arith.cmpi eq, %55, %56 : vector<16x16xi32>
      %58 = arith.extui %57 : vector<16x16xi1> to vector<16x16xi32>
      %59 = arith.sitofp %58 : vector<16x16xi32> to vector<16x16xf32>
      %c-2_i32_23 = arith.constant -2 : i32
      %60 = vector.broadcast %c-2_i32_23 : i32 to vector<16x16xi32>
      %61 = arith.cmpi eq, %55, %60 : vector<16x16xi32>
      %62 = arith.extui %61 : vector<16x16xi1> to vector<16x16xi32>
      %63 = arith.sitofp %62 : vector<16x16xi32> to vector<16x16xf32>
      %c-1_i32_24 = arith.constant -1 : i32
      %64 = vector.broadcast %c-1_i32_24 : i32 to vector<16x16xi32>
      %65 = arith.cmpi eq, %55, %64 : vector<16x16xi32>
      %66 = arith.extui %65 : vector<16x16xi1> to vector<16x16xi32>
      %67 = arith.sitofp %66 : vector<16x16xi32> to vector<16x16xf32>
      %c0_i32_25 = arith.constant 0 : i32
      %68 = vector.broadcast %c0_i32_25 : i32 to vector<16x16xi32>
      %69 = arith.cmpi eq, %55, %68 : vector<16x16xi32>
      %70 = arith.extui %69 : vector<16x16xi1> to vector<16x16xi32>
      %71 = arith.sitofp %70 : vector<16x16xi32> to vector<16x16xf32>
      %c1_i32_26 = arith.constant 1 : i32
      %72 = vector.broadcast %c1_i32_26 : i32 to vector<16x16xi32>
      %73 = arith.cmpi eq, %55, %72 : vector<16x16xi32>
      %74 = arith.extui %73 : vector<16x16xi1> to vector<16x16xi32>
      %75 = arith.sitofp %74 : vector<16x16xi32> to vector<16x16xf32>
      %c2_i32_27 = arith.constant 2 : i32
      %76 = vector.broadcast %c2_i32_27 : i32 to vector<16x16xi32>
      %77 = arith.cmpi eq, %55, %76 : vector<16x16xi32>
      %78 = arith.extui %77 : vector<16x16xi1> to vector<16x16xi32>
      %79 = arith.sitofp %78 : vector<16x16xi32> to vector<16x16xf32>
      %c3_i32_28 = arith.constant 3 : i32
      %80 = vector.broadcast %c3_i32_28 : i32 to vector<16x16xi32>
      %81 = arith.cmpi eq, %55, %80 : vector<16x16xi32>
      %82 = arith.extui %81 : vector<16x16xi1> to vector<16x16xi32>
      %83 = arith.sitofp %82 : vector<16x16xi32> to vector<16x16xf32>
      %cst_29 = arith.constant 0.000000e+00 : f32
      %84 = vector.broadcast %cst_29 : f32 to vector<16x16xf32>
      %c0_30 = arith.constant 0 : index
      %85 = memref.load %arg3[%c0_30] : memref<1xf32, #tpu.memory_space<smem>>
      %86 = vector.broadcast %85 : f32 to vector<16x16xf32>
      %87 = arith.addf %84, %86 : vector<16x16xf32>
      %cst_31 = arith.constant 0.000000e+00 : f32
      %88 = vector.broadcast %cst_31 : f32 to vector<16x16xf32>
      %cst_32 = arith.constant 0.000000e+00 : f32
      %89 = vector.broadcast %cst_32 : f32 to vector<16x16xf32>
      %c0_33 = arith.constant 0 : index
      %90 = memref.load %arg2[%c0_33] : memref<98xf32, #tpu.memory_space<smem>>
      %91 = vector.broadcast %90 : f32 to vector<16x16xf32>
      %92 = arith.mulf %91, %28 : vector<16x16xf32>
      %93 = arith.addf %89, %92 : vector<16x16xf32>
      %c1_34 = arith.constant 1 : index
      %94 = memref.load %arg2[%c1_34] : memref<98xf32, #tpu.memory_space<smem>>
      %95 = vector.broadcast %94 : f32 to vector<16x16xf32>
      %96 = arith.mulf %95, %32 : vector<16x16xf32>
      %97 = arith.addf %93, %96 : vector<16x16xf32>
      %c2 = arith.constant 2 : index
      %98 = memref.load %arg2[%c2] : memref<98xf32, #tpu.memory_space<smem>>
      %99 = vector.broadcast %98 : f32 to vector<16x16xf32>
      %100 = arith.mulf %99, %36 : vector<16x16xf32>
      %101 = arith.addf %97, %100 : vector<16x16xf32>
      %c3 = arith.constant 3 : index
      %102 = memref.load %arg2[%c3] : memref<98xf32, #tpu.memory_space<smem>>
      %103 = vector.broadcast %102 : f32 to vector<16x16xf32>
      %104 = arith.mulf %103, %40 : vector<16x16xf32>
      %105 = arith.addf %101, %104 : vector<16x16xf32>
      %c4 = arith.constant 4 : index
      %106 = memref.load %arg2[%c4] : memref<98xf32, #tpu.memory_space<smem>>
      %107 = vector.broadcast %106 : f32 to vector<16x16xf32>
      %108 = arith.mulf %107, %44 : vector<16x16xf32>
      %109 = arith.addf %105, %108 : vector<16x16xf32>
      %c5 = arith.constant 5 : index
      %110 = memref.load %arg2[%c5] : memref<98xf32, #tpu.memory_space<smem>>
      %111 = vector.broadcast %110 : f32 to vector<16x16xf32>
      %112 = arith.mulf %111, %48 : vector<16x16xf32>
      %113 = arith.addf %109, %112 : vector<16x16xf32>
      %c6 = arith.constant 6 : index
      %114 = memref.load %arg2[%c6] : memref<98xf32, #tpu.memory_space<smem>>
      %115 = vector.broadcast %114 : f32 to vector<16x16xf32>
      %116 = arith.mulf %115, %52 : vector<16x16xf32>
      %117 = arith.addf %113, %116 : vector<16x16xf32>
      %cst_35 = arith.constant dense<0.000000e+00> : vector<16x16xf32>
      %118 = tpu.matmul %20, %117, %cst_35 {dimension_numbers = #tpu.dot_dimension_numbers<[1], [0], [0], [1], [0, 0, 1, 1], [], []>} : vector<16x16xf32>, vector<16x16xf32>, vector<16x16xf32> -> vector<16x16xf32>
      %119 = arith.addf %88, %118 : vector<16x16xf32>
      %cst_36 = arith.constant 0.000000e+00 : f32
      %120 = vector.broadcast %cst_36 : f32 to vector<16x16xf32>
      %c49 = arith.constant 49 : index
      %121 = memref.load %arg2[%c49] : memref<98xf32, #tpu.memory_space<smem>>
      %122 = vector.broadcast %121 : f32 to vector<16x16xf32>
      %123 = arith.mulf %122, %28 : vector<16x16xf32>
      %124 = arith.addf %120, %123 : vector<16x16xf32>
      %c50 = arith.constant 50 : index
      %125 = memref.load %arg2[%c50] : memref<98xf32, #tpu.memory_space<smem>>
      %126 = vector.broadcast %125 : f32 to vector<16x16xf32>
      %127 = arith.mulf %126, %32 : vector<16x16xf32>
      %128 = arith.addf %124, %127 : vector<16x16xf32>
      %c51 = arith.constant 51 : index
      %129 = memref.load %arg2[%c51] : memref<98xf32, #tpu.memory_space<smem>>
      %130 = vector.broadcast %129 : f32 to vector<16x16xf32>
      %131 = arith.mulf %130, %36 : vector<16x16xf32>
      %132 = arith.addf %128, %131 : vector<16x16xf32>
      %c52 = arith.constant 52 : index
      %133 = memref.load %arg2[%c52] : memref<98xf32, #tpu.memory_space<smem>>
      %134 = vector.broadcast %133 : f32 to vector<16x16xf32>
      %135 = arith.mulf %134, %40 : vector<16x16xf32>
      %136 = arith.addf %132, %135 : vector<16x16xf32>
      %c53 = arith.constant 53 : index
      %137 = memref.load %arg2[%c53] : memref<98xf32, #tpu.memory_space<smem>>
      %138 = vector.broadcast %137 : f32 to vector<16x16xf32>
      %139 = arith.mulf %138, %44 : vector<16x16xf32>
      %140 = arith.addf %136, %139 : vector<16x16xf32>
      %c54 = arith.constant 54 : index
      %141 = memref.load %arg2[%c54] : memref<98xf32, #tpu.memory_space<smem>>
      %142 = vector.broadcast %141 : f32 to vector<16x16xf32>
      %143 = arith.mulf %142, %48 : vector<16x16xf32>
      %144 = arith.addf %140, %143 : vector<16x16xf32>
      %c55 = arith.constant 55 : index
      %145 = memref.load %arg2[%c55] : memref<98xf32, #tpu.memory_space<smem>>
      %146 = vector.broadcast %145 : f32 to vector<16x16xf32>
      %147 = arith.mulf %146, %52 : vector<16x16xf32>
      %148 = arith.addf %144, %147 : vector<16x16xf32>
      %cst_37 = arith.constant dense<0.000000e+00> : vector<16x16xf32>
      %149 = tpu.matmul %21, %148, %cst_37 {dimension_numbers = #tpu.dot_dimension_numbers<[1], [0], [0], [1], [0, 0, 1, 1], [], []>} : vector<16x16xf32>, vector<16x16xf32>, vector<16x16xf32> -> vector<16x16xf32>
      %150 = arith.addf %119, %149 : vector<16x16xf32>
      %cst_38 = arith.constant dense<0.000000e+00> : vector<16x16xf32>
      %151 = tpu.matmul %59, %150, %cst_38 {dimension_numbers = #tpu.dot_dimension_numbers<[1], [0], [0], [1], [0, 0, 1, 1], [], []>} : vector<16x16xf32>, vector<16x16xf32>, vector<16x16xf32> -> vector<16x16xf32>
      %152 = arith.addf %87, %151 : vector<16x16xf32>
      %cst_39 = arith.constant 0.000000e+00 : f32
      %153 = vector.broadcast %cst_39 : f32 to vector<16x16xf32>
      %cst_40 = arith.constant 0.000000e+00 : f32
      %154 = vector.broadcast %cst_40 : f32 to vector<16x16xf32>
      %c7 = arith.constant 7 : index
      %155 = memref.load %arg2[%c7] : memref<98xf32, #tpu.memory_space<smem>>
      %156 = vector.broadcast %155 : f32 to vector<16x16xf32>
      %157 = arith.mulf %156, %28 : vector<16x16xf32>
      %158 = arith.addf %154, %157 : vector<16x16xf32>
      %c8 = arith.constant 8 : index
      %159 = memref.load %arg2[%c8] : memref<98xf32, #tpu.memory_space<smem>>
      %160 = vector.broadcast %159 : f32 to vector<16x16xf32>
      %161 = arith.mulf %160, %32 : vector<16x16xf32>
      %162 = arith.addf %158, %161 : vector<16x16xf32>
      %c9 = arith.constant 9 : index
      %163 = memref.load %arg2[%c9] : memref<98xf32, #tpu.memory_space<smem>>
      %164 = vector.broadcast %163 : f32 to vector<16x16xf32>
      %165 = arith.mulf %164, %36 : vector<16x16xf32>
      %166 = arith.addf %162, %165 : vector<16x16xf32>
      %c10 = arith.constant 10 : index
      %167 = memref.load %arg2[%c10] : memref<98xf32, #tpu.memory_space<smem>>
      %168 = vector.broadcast %167 : f32 to vector<16x16xf32>
      %169 = arith.mulf %168, %40 : vector<16x16xf32>
      %170 = arith.addf %166, %169 : vector<16x16xf32>
      %c11 = arith.constant 11 : index
      %171 = memref.load %arg2[%c11] : memref<98xf32, #tpu.memory_space<smem>>
      %172 = vector.broadcast %171 : f32 to vector<16x16xf32>
      %173 = arith.mulf %172, %44 : vector<16x16xf32>
      %174 = arith.addf %170, %173 : vector<16x16xf32>
      %c12 = arith.constant 12 : index
      %175 = memref.load %arg2[%c12] : memref<98xf32, #tpu.memory_space<smem>>
      %176 = vector.broadcast %175 : f32 to vector<16x16xf32>
      %177 = arith.mulf %176, %48 : vector<16x16xf32>
      %178 = arith.addf %174, %177 : vector<16x16xf32>
      %c13 = arith.constant 13 : index
      %179 = memref.load %arg2[%c13] : memref<98xf32, #tpu.memory_space<smem>>
      %180 = vector.broadcast %179 : f32 to vector<16x16xf32>
      %181 = arith.mulf %180, %52 : vector<16x16xf32>
      %182 = arith.addf %178, %181 : vector<16x16xf32>
      %cst_41 = arith.constant dense<0.000000e+00> : vector<16x16xf32>
      %183 = tpu.matmul %20, %182, %cst_41 {dimension_numbers = #tpu.dot_dimension_numbers<[1], [0], [0], [1], [0, 0, 1, 1], [], []>} : vector<16x16xf32>, vector<16x16xf32>, vector<16x16xf32> -> vector<16x16xf32>
      %184 = arith.addf %153, %183 : vector<16x16xf32>
      %cst_42 = arith.constant 0.000000e+00 : f32
      %185 = vector.broadcast %cst_42 : f32 to vector<16x16xf32>
      %c56 = arith.constant 56 : index
      %186 = memref.load %arg2[%c56] : memref<98xf32, #tpu.memory_space<smem>>
      %187 = vector.broadcast %186 : f32 to vector<16x16xf32>
      %188 = arith.mulf %187, %28 : vector<16x16xf32>
      %189 = arith.addf %185, %188 : vector<16x16xf32>
      %c57 = arith.constant 57 : index
      %190 = memref.load %arg2[%c57] : memref<98xf32, #tpu.memory_space<smem>>
      %191 = vector.broadcast %190 : f32 to vector<16x16xf32>
      %192 = arith.mulf %191, %32 : vector<16x16xf32>
      %193 = arith.addf %189, %192 : vector<16x16xf32>
      %c58 = arith.constant 58 : index
      %194 = memref.load %arg2[%c58] : memref<98xf32, #tpu.memory_space<smem>>
      %195 = vector.broadcast %194 : f32 to vector<16x16xf32>
      %196 = arith.mulf %195, %36 : vector<16x16xf32>
      %197 = arith.addf %193, %196 : vector<16x16xf32>
      %c59 = arith.constant 59 : index
      %198 = memref.load %arg2[%c59] : memref<98xf32, #tpu.memory_space<smem>>
      %199 = vector.broadcast %198 : f32 to vector<16x16xf32>
      %200 = arith.mulf %199, %40 : vector<16x16xf32>
      %201 = arith.addf %197, %200 : vector<16x16xf32>
      %c60 = arith.constant 60 : index
      %202 = memref.load %arg2[%c60] : memref<98xf32, #tpu.memory_space<smem>>
      %203 = vector.broadcast %202 : f32 to vector<16x16xf32>
      %204 = arith.mulf %203, %44 : vector<16x16xf32>
      %205 = arith.addf %201, %204 : vector<16x16xf32>
      %c61 = arith.constant 61 : index
      %206 = memref.load %arg2[%c61] : memref<98xf32, #tpu.memory_space<smem>>
      %207 = vector.broadcast %206 : f32 to vector<16x16xf32>
      %208 = arith.mulf %207, %48 : vector<16x16xf32>
      %209 = arith.addf %205, %208 : vector<16x16xf32>
      %c62 = arith.constant 62 : index
      %210 = memref.load %arg2[%c62] : memref<98xf32, #tpu.memory_space<smem>>
      %211 = vector.broadcast %210 : f32 to vector<16x16xf32>
      %212 = arith.mulf %211, %52 : vector<16x16xf32>
      %213 = arith.addf %209, %212 : vector<16x16xf32>
      %cst_43 = arith.constant dense<0.000000e+00> : vector<16x16xf32>
      %214 = tpu.matmul %21, %213, %cst_43 {dimension_numbers = #tpu.dot_dimension_numbers<[1], [0], [0], [1], [0, 0, 1, 1], [], []>} : vector<16x16xf32>, vector<16x16xf32>, vector<16x16xf32> -> vector<16x16xf32>
      %215 = arith.addf %184, %214 : vector<16x16xf32>
      %cst_44 = arith.constant dense<0.000000e+00> : vector<16x16xf32>
      %216 = tpu.matmul %63, %215, %cst_44 {dimension_numbers = #tpu.dot_dimension_numbers<[1], [0], [0], [1], [0, 0, 1, 1], [], []>} : vector<16x16xf32>, vector<16x16xf32>, vector<16x16xf32> -> vector<16x16xf32>
      %217 = arith.addf %152, %216 : vector<16x16xf32>
      %cst_45 = arith.constant 0.000000e+00 : f32
      %218 = vector.broadcast %cst_45 : f32 to vector<16x16xf32>
      %cst_46 = arith.constant 0.000000e+00 : f32
      %219 = vector.broadcast %cst_46 : f32 to vector<16x16xf32>
      %c14 = arith.constant 14 : index
      %220 = memref.load %arg2[%c14] : memref<98xf32, #tpu.memory_space<smem>>
      %221 = vector.broadcast %220 : f32 to vector<16x16xf32>
      %222 = arith.mulf %221, %28 : vector<16x16xf32>
      %223 = arith.addf %219, %222 : vector<16x16xf32>
      %c15 = arith.constant 15 : index
      %224 = memref.load %arg2[%c15] : memref<98xf32, #tpu.memory_space<smem>>
      %225 = vector.broadcast %224 : f32 to vector<16x16xf32>
      %226 = arith.mulf %225, %32 : vector<16x16xf32>
      %227 = arith.addf %223, %226 : vector<16x16xf32>
      %c16 = arith.constant 16 : index
      %228 = memref.load %arg2[%c16] : memref<98xf32, #tpu.memory_space<smem>>
      %229 = vector.broadcast %228 : f32 to vector<16x16xf32>
      %230 = arith.mulf %229, %36 : vector<16x16xf32>
      %231 = arith.addf %227, %230 : vector<16x16xf32>
      %c17 = arith.constant 17 : index
      %232 = memref.load %arg2[%c17] : memref<98xf32, #tpu.memory_space<smem>>
      %233 = vector.broadcast %232 : f32 to vector<16x16xf32>
      %234 = arith.mulf %233, %40 : vector<16x16xf32>
      %235 = arith.addf %231, %234 : vector<16x16xf32>
      %c18 = arith.constant 18 : index
      %236 = memref.load %arg2[%c18] : memref<98xf32, #tpu.memory_space<smem>>
      %237 = vector.broadcast %236 : f32 to vector<16x16xf32>
      %238 = arith.mulf %237, %44 : vector<16x16xf32>
      %239 = arith.addf %235, %238 : vector<16x16xf32>
      %c19 = arith.constant 19 : index
      %240 = memref.load %arg2[%c19] : memref<98xf32, #tpu.memory_space<smem>>
      %241 = vector.broadcast %240 : f32 to vector<16x16xf32>
      %242 = arith.mulf %241, %48 : vector<16x16xf32>
      %243 = arith.addf %239, %242 : vector<16x16xf32>
      %c20 = arith.constant 20 : index
      %244 = memref.load %arg2[%c20] : memref<98xf32, #tpu.memory_space<smem>>
      %245 = vector.broadcast %244 : f32 to vector<16x16xf32>
      %246 = arith.mulf %245, %52 : vector<16x16xf32>
      %247 = arith.addf %243, %246 : vector<16x16xf32>
      %cst_47 = arith.constant dense<0.000000e+00> : vector<16x16xf32>
      %248 = tpu.matmul %20, %247, %cst_47 {dimension_numbers = #tpu.dot_dimension_numbers<[1], [0], [0], [1], [0, 0, 1, 1], [], []>} : vector<16x16xf32>, vector<16x16xf32>, vector<16x16xf32> -> vector<16x16xf32>
      %249 = arith.addf %218, %248 : vector<16x16xf32>
      %cst_48 = arith.constant 0.000000e+00 : f32
      %250 = vector.broadcast %cst_48 : f32 to vector<16x16xf32>
      %c63 = arith.constant 63 : index
      %251 = memref.load %arg2[%c63] : memref<98xf32, #tpu.memory_space<smem>>
      %252 = vector.broadcast %251 : f32 to vector<16x16xf32>
      %253 = arith.mulf %252, %28 : vector<16x16xf32>
      %254 = arith.addf %250, %253 : vector<16x16xf32>
      %c64 = arith.constant 64 : index
      %255 = memref.load %arg2[%c64] : memref<98xf32, #tpu.memory_space<smem>>
      %256 = vector.broadcast %255 : f32 to vector<16x16xf32>
      %257 = arith.mulf %256, %32 : vector<16x16xf32>
      %258 = arith.addf %254, %257 : vector<16x16xf32>
      %c65 = arith.constant 65 : index
      %259 = memref.load %arg2[%c65] : memref<98xf32, #tpu.memory_space<smem>>
      %260 = vector.broadcast %259 : f32 to vector<16x16xf32>
      %261 = arith.mulf %260, %36 : vector<16x16xf32>
      %262 = arith.addf %258, %261 : vector<16x16xf32>
      %c66 = arith.constant 66 : index
      %263 = memref.load %arg2[%c66] : memref<98xf32, #tpu.memory_space<smem>>
      %264 = vector.broadcast %263 : f32 to vector<16x16xf32>
      %265 = arith.mulf %264, %40 : vector<16x16xf32>
      %266 = arith.addf %262, %265 : vector<16x16xf32>
      %c67 = arith.constant 67 : index
      %267 = memref.load %arg2[%c67] : memref<98xf32, #tpu.memory_space<smem>>
      %268 = vector.broadcast %267 : f32 to vector<16x16xf32>
      %269 = arith.mulf %268, %44 : vector<16x16xf32>
      %270 = arith.addf %266, %269 : vector<16x16xf32>
      %c68 = arith.constant 68 : index
      %271 = memref.load %arg2[%c68] : memref<98xf32, #tpu.memory_space<smem>>
      %272 = vector.broadcast %271 : f32 to vector<16x16xf32>
      %273 = arith.mulf %272, %48 : vector<16x16xf32>
      %274 = arith.addf %270, %273 : vector<16x16xf32>
      %c69 = arith.constant 69 : index
      %275 = memref.load %arg2[%c69] : memref<98xf32, #tpu.memory_space<smem>>
      %276 = vector.broadcast %275 : f32 to vector<16x16xf32>
      %277 = arith.mulf %276, %52 : vector<16x16xf32>
      %278 = arith.addf %274, %277 : vector<16x16xf32>
      %cst_49 = arith.constant dense<0.000000e+00> : vector<16x16xf32>
      %279 = tpu.matmul %21, %278, %cst_49 {dimension_numbers = #tpu.dot_dimension_numbers<[1], [0], [0], [1], [0, 0, 1, 1], [], []>} : vector<16x16xf32>, vector<16x16xf32>, vector<16x16xf32> -> vector<16x16xf32>
      %280 = arith.addf %249, %279 : vector<16x16xf32>
      %cst_50 = arith.constant dense<0.000000e+00> : vector<16x16xf32>
      %281 = tpu.matmul %67, %280, %cst_50 {dimension_numbers = #tpu.dot_dimension_numbers<[1], [0], [0], [1], [0, 0, 1, 1], [], []>} : vector<16x16xf32>, vector<16x16xf32>, vector<16x16xf32> -> vector<16x16xf32>
      %282 = arith.addf %217, %281 : vector<16x16xf32>
      %cst_51 = arith.constant 0.000000e+00 : f32
      %283 = vector.broadcast %cst_51 : f32 to vector<16x16xf32>
      %cst_52 = arith.constant 0.000000e+00 : f32
      %284 = vector.broadcast %cst_52 : f32 to vector<16x16xf32>
      %c21 = arith.constant 21 : index
      %285 = memref.load %arg2[%c21] : memref<98xf32, #tpu.memory_space<smem>>
      %286 = vector.broadcast %285 : f32 to vector<16x16xf32>
      %287 = arith.mulf %286, %28 : vector<16x16xf32>
      %288 = arith.addf %284, %287 : vector<16x16xf32>
      %c22 = arith.constant 22 : index
      %289 = memref.load %arg2[%c22] : memref<98xf32, #tpu.memory_space<smem>>
      %290 = vector.broadcast %289 : f32 to vector<16x16xf32>
      %291 = arith.mulf %290, %32 : vector<16x16xf32>
      %292 = arith.addf %288, %291 : vector<16x16xf32>
      %c23 = arith.constant 23 : index
      %293 = memref.load %arg2[%c23] : memref<98xf32, #tpu.memory_space<smem>>
      %294 = vector.broadcast %293 : f32 to vector<16x16xf32>
      %295 = arith.mulf %294, %36 : vector<16x16xf32>
      %296 = arith.addf %292, %295 : vector<16x16xf32>
      %c24 = arith.constant 24 : index
      %297 = memref.load %arg2[%c24] : memref<98xf32, #tpu.memory_space<smem>>
      %298 = vector.broadcast %297 : f32 to vector<16x16xf32>
      %299 = arith.mulf %298, %40 : vector<16x16xf32>
      %300 = arith.addf %296, %299 : vector<16x16xf32>
      %c25 = arith.constant 25 : index
      %301 = memref.load %arg2[%c25] : memref<98xf32, #tpu.memory_space<smem>>
      %302 = vector.broadcast %301 : f32 to vector<16x16xf32>
      %303 = arith.mulf %302, %44 : vector<16x16xf32>
      %304 = arith.addf %300, %303 : vector<16x16xf32>
      %c26 = arith.constant 26 : index
      %305 = memref.load %arg2[%c26] : memref<98xf32, #tpu.memory_space<smem>>
      %306 = vector.broadcast %305 : f32 to vector<16x16xf32>
      %307 = arith.mulf %306, %48 : vector<16x16xf32>
      %308 = arith.addf %304, %307 : vector<16x16xf32>
      %c27 = arith.constant 27 : index
      %309 = memref.load %arg2[%c27] : memref<98xf32, #tpu.memory_space<smem>>
      %310 = vector.broadcast %309 : f32 to vector<16x16xf32>
      %311 = arith.mulf %310, %52 : vector<16x16xf32>
      %312 = arith.addf %308, %311 : vector<16x16xf32>
      %cst_53 = arith.constant dense<0.000000e+00> : vector<16x16xf32>
      %313 = tpu.matmul %20, %312, %cst_53 {dimension_numbers = #tpu.dot_dimension_numbers<[1], [0], [0], [1], [0, 0, 1, 1], [], []>} : vector<16x16xf32>, vector<16x16xf32>, vector<16x16xf32> -> vector<16x16xf32>
      %314 = arith.addf %283, %313 : vector<16x16xf32>
      %cst_54 = arith.constant 0.000000e+00 : f32
      %315 = vector.broadcast %cst_54 : f32 to vector<16x16xf32>
      %c70 = arith.constant 70 : index
      %316 = memref.load %arg2[%c70] : memref<98xf32, #tpu.memory_space<smem>>
      %317 = vector.broadcast %316 : f32 to vector<16x16xf32>
      %318 = arith.mulf %317, %28 : vector<16x16xf32>
      %319 = arith.addf %315, %318 : vector<16x16xf32>
      %c71 = arith.constant 71 : index
      %320 = memref.load %arg2[%c71] : memref<98xf32, #tpu.memory_space<smem>>
      %321 = vector.broadcast %320 : f32 to vector<16x16xf32>
      %322 = arith.mulf %321, %32 : vector<16x16xf32>
      %323 = arith.addf %319, %322 : vector<16x16xf32>
      %c72 = arith.constant 72 : index
      %324 = memref.load %arg2[%c72] : memref<98xf32, #tpu.memory_space<smem>>
      %325 = vector.broadcast %324 : f32 to vector<16x16xf32>
      %326 = arith.mulf %325, %36 : vector<16x16xf32>
      %327 = arith.addf %323, %326 : vector<16x16xf32>
      %c73 = arith.constant 73 : index
      %328 = memref.load %arg2[%c73] : memref<98xf32, #tpu.memory_space<smem>>
      %329 = vector.broadcast %328 : f32 to vector<16x16xf32>
      %330 = arith.mulf %329, %40 : vector<16x16xf32>
      %331 = arith.addf %327, %330 : vector<16x16xf32>
      %c74 = arith.constant 74 : index
      %332 = memref.load %arg2[%c74] : memref<98xf32, #tpu.memory_space<smem>>
      %333 = vector.broadcast %332 : f32 to vector<16x16xf32>
      %334 = arith.mulf %333, %44 : vector<16x16xf32>
      %335 = arith.addf %331, %334 : vector<16x16xf32>
      %c75 = arith.constant 75 : index
      %336 = memref.load %arg2[%c75] : memref<98xf32, #tpu.memory_space<smem>>
      %337 = vector.broadcast %336 : f32 to vector<16x16xf32>
      %338 = arith.mulf %337, %48 : vector<16x16xf32>
      %339 = arith.addf %335, %338 : vector<16x16xf32>
      %c76 = arith.constant 76 : index
      %340 = memref.load %arg2[%c76] : memref<98xf32, #tpu.memory_space<smem>>
      %341 = vector.broadcast %340 : f32 to vector<16x16xf32>
      %342 = arith.mulf %341, %52 : vector<16x16xf32>
      %343 = arith.addf %339, %342 : vector<16x16xf32>
      %cst_55 = arith.constant dense<0.000000e+00> : vector<16x16xf32>
      %344 = tpu.matmul %21, %343, %cst_55 {dimension_numbers = #tpu.dot_dimension_numbers<[1], [0], [0], [1], [0, 0, 1, 1], [], []>} : vector<16x16xf32>, vector<16x16xf32>, vector<16x16xf32> -> vector<16x16xf32>
      %345 = arith.addf %314, %344 : vector<16x16xf32>
      %cst_56 = arith.constant dense<0.000000e+00> : vector<16x16xf32>
      %346 = tpu.matmul %71, %345, %cst_56 {dimension_numbers = #tpu.dot_dimension_numbers<[1], [0], [0], [1], [0, 0, 1, 1], [], []>} : vector<16x16xf32>, vector<16x16xf32>, vector<16x16xf32> -> vector<16x16xf32>
      %347 = arith.addf %282, %346 : vector<16x16xf32>
      %cst_57 = arith.constant 0.000000e+00 : f32
      %348 = vector.broadcast %cst_57 : f32 to vector<16x16xf32>
      %cst_58 = arith.constant 0.000000e+00 : f32
      %349 = vector.broadcast %cst_58 : f32 to vector<16x16xf32>
      %c28 = arith.constant 28 : index
      %350 = memref.load %arg2[%c28] : memref<98xf32, #tpu.memory_space<smem>>
      %351 = vector.broadcast %350 : f32 to vector<16x16xf32>
      %352 = arith.mulf %351, %28 : vector<16x16xf32>
      %353 = arith.addf %349, %352 : vector<16x16xf32>
      %c29 = arith.constant 29 : index
      %354 = memref.load %arg2[%c29] : memref<98xf32, #tpu.memory_space<smem>>
      %355 = vector.broadcast %354 : f32 to vector<16x16xf32>
      %356 = arith.mulf %355, %32 : vector<16x16xf32>
      %357 = arith.addf %353, %356 : vector<16x16xf32>
      %c30 = arith.constant 30 : index
      %358 = memref.load %arg2[%c30] : memref<98xf32, #tpu.memory_space<smem>>
      %359 = vector.broadcast %358 : f32 to vector<16x16xf32>
      %360 = arith.mulf %359, %36 : vector<16x16xf32>
      %361 = arith.addf %357, %360 : vector<16x16xf32>
      %c31 = arith.constant 31 : index
      %362 = memref.load %arg2[%c31] : memref<98xf32, #tpu.memory_space<smem>>
      %363 = vector.broadcast %362 : f32 to vector<16x16xf32>
      %364 = arith.mulf %363, %40 : vector<16x16xf32>
      %365 = arith.addf %361, %364 : vector<16x16xf32>
      %c32 = arith.constant 32 : index
      %366 = memref.load %arg2[%c32] : memref<98xf32, #tpu.memory_space<smem>>
      %367 = vector.broadcast %366 : f32 to vector<16x16xf32>
      %368 = arith.mulf %367, %44 : vector<16x16xf32>
      %369 = arith.addf %365, %368 : vector<16x16xf32>
      %c33 = arith.constant 33 : index
      %370 = memref.load %arg2[%c33] : memref<98xf32, #tpu.memory_space<smem>>
      %371 = vector.broadcast %370 : f32 to vector<16x16xf32>
      %372 = arith.mulf %371, %48 : vector<16x16xf32>
      %373 = arith.addf %369, %372 : vector<16x16xf32>
      %c34 = arith.constant 34 : index
      %374 = memref.load %arg2[%c34] : memref<98xf32, #tpu.memory_space<smem>>
      %375 = vector.broadcast %374 : f32 to vector<16x16xf32>
      %376 = arith.mulf %375, %52 : vector<16x16xf32>
      %377 = arith.addf %373, %376 : vector<16x16xf32>
      %cst_59 = arith.constant dense<0.000000e+00> : vector<16x16xf32>
      %378 = tpu.matmul %20, %377, %cst_59 {dimension_numbers = #tpu.dot_dimension_numbers<[1], [0], [0], [1], [0, 0, 1, 1], [], []>} : vector<16x16xf32>, vector<16x16xf32>, vector<16x16xf32> -> vector<16x16xf32>
      %379 = arith.addf %348, %378 : vector<16x16xf32>
      %cst_60 = arith.constant 0.000000e+00 : f32
      %380 = vector.broadcast %cst_60 : f32 to vector<16x16xf32>
      %c77 = arith.constant 77 : index
      %381 = memref.load %arg2[%c77] : memref<98xf32, #tpu.memory_space<smem>>
      %382 = vector.broadcast %381 : f32 to vector<16x16xf32>
      %383 = arith.mulf %382, %28 : vector<16x16xf32>
      %384 = arith.addf %380, %383 : vector<16x16xf32>
      %c78 = arith.constant 78 : index
      %385 = memref.load %arg2[%c78] : memref<98xf32, #tpu.memory_space<smem>>
      %386 = vector.broadcast %385 : f32 to vector<16x16xf32>
      %387 = arith.mulf %386, %32 : vector<16x16xf32>
      %388 = arith.addf %384, %387 : vector<16x16xf32>
      %c79 = arith.constant 79 : index
      %389 = memref.load %arg2[%c79] : memref<98xf32, #tpu.memory_space<smem>>
      %390 = vector.broadcast %389 : f32 to vector<16x16xf32>
      %391 = arith.mulf %390, %36 : vector<16x16xf32>
      %392 = arith.addf %388, %391 : vector<16x16xf32>
      %c80 = arith.constant 80 : index
      %393 = memref.load %arg2[%c80] : memref<98xf32, #tpu.memory_space<smem>>
      %394 = vector.broadcast %393 : f32 to vector<16x16xf32>
      %395 = arith.mulf %394, %40 : vector<16x16xf32>
      %396 = arith.addf %392, %395 : vector<16x16xf32>
      %c81 = arith.constant 81 : index
      %397 = memref.load %arg2[%c81] : memref<98xf32, #tpu.memory_space<smem>>
      %398 = vector.broadcast %397 : f32 to vector<16x16xf32>
      %399 = arith.mulf %398, %44 : vector<16x16xf32>
      %400 = arith.addf %396, %399 : vector<16x16xf32>
      %c82 = arith.constant 82 : index
      %401 = memref.load %arg2[%c82] : memref<98xf32, #tpu.memory_space<smem>>
      %402 = vector.broadcast %401 : f32 to vector<16x16xf32>
      %403 = arith.mulf %402, %48 : vector<16x16xf32>
      %404 = arith.addf %400, %403 : vector<16x16xf32>
      %c83 = arith.constant 83 : index
      %405 = memref.load %arg2[%c83] : memref<98xf32, #tpu.memory_space<smem>>
      %406 = vector.broadcast %405 : f32 to vector<16x16xf32>
      %407 = arith.mulf %406, %52 : vector<16x16xf32>
      %408 = arith.addf %404, %407 : vector<16x16xf32>
      %cst_61 = arith.constant dense<0.000000e+00> : vector<16x16xf32>
      %409 = tpu.matmul %21, %408, %cst_61 {dimension_numbers = #tpu.dot_dimension_numbers<[1], [0], [0], [1], [0, 0, 1, 1], [], []>} : vector<16x16xf32>, vector<16x16xf32>, vector<16x16xf32> -> vector<16x16xf32>
      %410 = arith.addf %379, %409 : vector<16x16xf32>
      %cst_62 = arith.constant dense<0.000000e+00> : vector<16x16xf32>
      %411 = tpu.matmul %75, %410, %cst_62 {dimension_numbers = #tpu.dot_dimension_numbers<[1], [0], [0], [1], [0, 0, 1, 1], [], []>} : vector<16x16xf32>, vector<16x16xf32>, vector<16x16xf32> -> vector<16x16xf32>
      %412 = arith.addf %347, %411 : vector<16x16xf32>
      %cst_63 = arith.constant 0.000000e+00 : f32
      %413 = vector.broadcast %cst_63 : f32 to vector<16x16xf32>
      %cst_64 = arith.constant 0.000000e+00 : f32
      %414 = vector.broadcast %cst_64 : f32 to vector<16x16xf32>
      %c35 = arith.constant 35 : index
      %415 = memref.load %arg2[%c35] : memref<98xf32, #tpu.memory_space<smem>>
      %416 = vector.broadcast %415 : f32 to vector<16x16xf32>
      %417 = arith.mulf %416, %28 : vector<16x16xf32>
      %418 = arith.addf %414, %417 : vector<16x16xf32>
      %c36 = arith.constant 36 : index
      %419 = memref.load %arg2[%c36] : memref<98xf32, #tpu.memory_space<smem>>
      %420 = vector.broadcast %419 : f32 to vector<16x16xf32>
      %421 = arith.mulf %420, %32 : vector<16x16xf32>
      %422 = arith.addf %418, %421 : vector<16x16xf32>
      %c37 = arith.constant 37 : index
      %423 = memref.load %arg2[%c37] : memref<98xf32, #tpu.memory_space<smem>>
      %424 = vector.broadcast %423 : f32 to vector<16x16xf32>
      %425 = arith.mulf %424, %36 : vector<16x16xf32>
      %426 = arith.addf %422, %425 : vector<16x16xf32>
      %c38 = arith.constant 38 : index
      %427 = memref.load %arg2[%c38] : memref<98xf32, #tpu.memory_space<smem>>
      %428 = vector.broadcast %427 : f32 to vector<16x16xf32>
      %429 = arith.mulf %428, %40 : vector<16x16xf32>
      %430 = arith.addf %426, %429 : vector<16x16xf32>
      %c39 = arith.constant 39 : index
      %431 = memref.load %arg2[%c39] : memref<98xf32, #tpu.memory_space<smem>>
      %432 = vector.broadcast %431 : f32 to vector<16x16xf32>
      %433 = arith.mulf %432, %44 : vector<16x16xf32>
      %434 = arith.addf %430, %433 : vector<16x16xf32>
      %c40 = arith.constant 40 : index
      %435 = memref.load %arg2[%c40] : memref<98xf32, #tpu.memory_space<smem>>
      %436 = vector.broadcast %435 : f32 to vector<16x16xf32>
      %437 = arith.mulf %436, %48 : vector<16x16xf32>
      %438 = arith.addf %434, %437 : vector<16x16xf32>
      %c41 = arith.constant 41 : index
      %439 = memref.load %arg2[%c41] : memref<98xf32, #tpu.memory_space<smem>>
      %440 = vector.broadcast %439 : f32 to vector<16x16xf32>
      %441 = arith.mulf %440, %52 : vector<16x16xf32>
      %442 = arith.addf %438, %441 : vector<16x16xf32>
      %cst_65 = arith.constant dense<0.000000e+00> : vector<16x16xf32>
      %443 = tpu.matmul %20, %442, %cst_65 {dimension_numbers = #tpu.dot_dimension_numbers<[1], [0], [0], [1], [0, 0, 1, 1], [], []>} : vector<16x16xf32>, vector<16x16xf32>, vector<16x16xf32> -> vector<16x16xf32>
      %444 = arith.addf %413, %443 : vector<16x16xf32>
      %cst_66 = arith.constant 0.000000e+00 : f32
      %445 = vector.broadcast %cst_66 : f32 to vector<16x16xf32>
      %c84 = arith.constant 84 : index
      %446 = memref.load %arg2[%c84] : memref<98xf32, #tpu.memory_space<smem>>
      %447 = vector.broadcast %446 : f32 to vector<16x16xf32>
      %448 = arith.mulf %447, %28 : vector<16x16xf32>
      %449 = arith.addf %445, %448 : vector<16x16xf32>
      %c85 = arith.constant 85 : index
      %450 = memref.load %arg2[%c85] : memref<98xf32, #tpu.memory_space<smem>>
      %451 = vector.broadcast %450 : f32 to vector<16x16xf32>
      %452 = arith.mulf %451, %32 : vector<16x16xf32>
      %453 = arith.addf %449, %452 : vector<16x16xf32>
      %c86 = arith.constant 86 : index
      %454 = memref.load %arg2[%c86] : memref<98xf32, #tpu.memory_space<smem>>
      %455 = vector.broadcast %454 : f32 to vector<16x16xf32>
      %456 = arith.mulf %455, %36 : vector<16x16xf32>
      %457 = arith.addf %453, %456 : vector<16x16xf32>
      %c87 = arith.constant 87 : index
      %458 = memref.load %arg2[%c87] : memref<98xf32, #tpu.memory_space<smem>>
      %459 = vector.broadcast %458 : f32 to vector<16x16xf32>
      %460 = arith.mulf %459, %40 : vector<16x16xf32>
      %461 = arith.addf %457, %460 : vector<16x16xf32>
      %c88 = arith.constant 88 : index
      %462 = memref.load %arg2[%c88] : memref<98xf32, #tpu.memory_space<smem>>
      %463 = vector.broadcast %462 : f32 to vector<16x16xf32>
      %464 = arith.mulf %463, %44 : vector<16x16xf32>
      %465 = arith.addf %461, %464 : vector<16x16xf32>
      %c89 = arith.constant 89 : index
      %466 = memref.load %arg2[%c89] : memref<98xf32, #tpu.memory_space<smem>>
      %467 = vector.broadcast %466 : f32 to vector<16x16xf32>
      %468 = arith.mulf %467, %48 : vector<16x16xf32>
      %469 = arith.addf %465, %468 : vector<16x16xf32>
      %c90 = arith.constant 90 : index
      %470 = memref.load %arg2[%c90] : memref<98xf32, #tpu.memory_space<smem>>
      %471 = vector.broadcast %470 : f32 to vector<16x16xf32>
      %472 = arith.mulf %471, %52 : vector<16x16xf32>
      %473 = arith.addf %469, %472 : vector<16x16xf32>
      %cst_67 = arith.constant dense<0.000000e+00> : vector<16x16xf32>
      %474 = tpu.matmul %21, %473, %cst_67 {dimension_numbers = #tpu.dot_dimension_numbers<[1], [0], [0], [1], [0, 0, 1, 1], [], []>} : vector<16x16xf32>, vector<16x16xf32>, vector<16x16xf32> -> vector<16x16xf32>
      %475 = arith.addf %444, %474 : vector<16x16xf32>
      %cst_68 = arith.constant dense<0.000000e+00> : vector<16x16xf32>
      %476 = tpu.matmul %79, %475, %cst_68 {dimension_numbers = #tpu.dot_dimension_numbers<[1], [0], [0], [1], [0, 0, 1, 1], [], []>} : vector<16x16xf32>, vector<16x16xf32>, vector<16x16xf32> -> vector<16x16xf32>
      %477 = arith.addf %412, %476 : vector<16x16xf32>
      %cst_69 = arith.constant 0.000000e+00 : f32
      %478 = vector.broadcast %cst_69 : f32 to vector<16x16xf32>
      %cst_70 = arith.constant 0.000000e+00 : f32
      %479 = vector.broadcast %cst_70 : f32 to vector<16x16xf32>
      %c42 = arith.constant 42 : index
      %480 = memref.load %arg2[%c42] : memref<98xf32, #tpu.memory_space<smem>>
      %481 = vector.broadcast %480 : f32 to vector<16x16xf32>
      %482 = arith.mulf %481, %28 : vector<16x16xf32>
      %483 = arith.addf %479, %482 : vector<16x16xf32>
      %c43 = arith.constant 43 : index
      %484 = memref.load %arg2[%c43] : memref<98xf32, #tpu.memory_space<smem>>
      %485 = vector.broadcast %484 : f32 to vector<16x16xf32>
      %486 = arith.mulf %485, %32 : vector<16x16xf32>
      %487 = arith.addf %483, %486 : vector<16x16xf32>
      %c44 = arith.constant 44 : index
      %488 = memref.load %arg2[%c44] : memref<98xf32, #tpu.memory_space<smem>>
      %489 = vector.broadcast %488 : f32 to vector<16x16xf32>
      %490 = arith.mulf %489, %36 : vector<16x16xf32>
      %491 = arith.addf %487, %490 : vector<16x16xf32>
      %c45 = arith.constant 45 : index
      %492 = memref.load %arg2[%c45] : memref<98xf32, #tpu.memory_space<smem>>
      %493 = vector.broadcast %492 : f32 to vector<16x16xf32>
      %494 = arith.mulf %493, %40 : vector<16x16xf32>
      %495 = arith.addf %491, %494 : vector<16x16xf32>
      %c46 = arith.constant 46 : index
      %496 = memref.load %arg2[%c46] : memref<98xf32, #tpu.memory_space<smem>>
      %497 = vector.broadcast %496 : f32 to vector<16x16xf32>
      %498 = arith.mulf %497, %44 : vector<16x16xf32>
      %499 = arith.addf %495, %498 : vector<16x16xf32>
      %c47 = arith.constant 47 : index
      %500 = memref.load %arg2[%c47] : memref<98xf32, #tpu.memory_space<smem>>
      %501 = vector.broadcast %500 : f32 to vector<16x16xf32>
      %502 = arith.mulf %501, %48 : vector<16x16xf32>
      %503 = arith.addf %499, %502 : vector<16x16xf32>
      %c48 = arith.constant 48 : index
      %504 = memref.load %arg2[%c48] : memref<98xf32, #tpu.memory_space<smem>>
      %505 = vector.broadcast %504 : f32 to vector<16x16xf32>
      %506 = arith.mulf %505, %52 : vector<16x16xf32>
      %507 = arith.addf %503, %506 : vector<16x16xf32>
      %cst_71 = arith.constant dense<0.000000e+00> : vector<16x16xf32>
      %508 = tpu.matmul %20, %507, %cst_71 {dimension_numbers = #tpu.dot_dimension_numbers<[1], [0], [0], [1], [0, 0, 1, 1], [], []>} : vector<16x16xf32>, vector<16x16xf32>, vector<16x16xf32> -> vector<16x16xf32>
      %509 = arith.addf %478, %508 : vector<16x16xf32>
      %cst_72 = arith.constant 0.000000e+00 : f32
      %510 = vector.broadcast %cst_72 : f32 to vector<16x16xf32>
      %c91 = arith.constant 91 : index
      %511 = memref.load %arg2[%c91] : memref<98xf32, #tpu.memory_space<smem>>
      %512 = vector.broadcast %511 : f32 to vector<16x16xf32>
      %513 = arith.mulf %512, %28 : vector<16x16xf32>
      %514 = arith.addf %510, %513 : vector<16x16xf32>
      %c92 = arith.constant 92 : index
      %515 = memref.load %arg2[%c92] : memref<98xf32, #tpu.memory_space<smem>>
      %516 = vector.broadcast %515 : f32 to vector<16x16xf32>
      %517 = arith.mulf %516, %32 : vector<16x16xf32>
      %518 = arith.addf %514, %517 : vector<16x16xf32>
      %c93 = arith.constant 93 : index
      %519 = memref.load %arg2[%c93] : memref<98xf32, #tpu.memory_space<smem>>
      %520 = vector.broadcast %519 : f32 to vector<16x16xf32>
      %521 = arith.mulf %520, %36 : vector<16x16xf32>
      %522 = arith.addf %518, %521 : vector<16x16xf32>
      %c94 = arith.constant 94 : index
      %523 = memref.load %arg2[%c94] : memref<98xf32, #tpu.memory_space<smem>>
      %524 = vector.broadcast %523 : f32 to vector<16x16xf32>
      %525 = arith.mulf %524, %40 : vector<16x16xf32>
      %526 = arith.addf %522, %525 : vector<16x16xf32>
      %c95 = arith.constant 95 : index
      %527 = memref.load %arg2[%c95] : memref<98xf32, #tpu.memory_space<smem>>
      %528 = vector.broadcast %527 : f32 to vector<16x16xf32>
      %529 = arith.mulf %528, %44 : vector<16x16xf32>
      %530 = arith.addf %526, %529 : vector<16x16xf32>
      %c96 = arith.constant 96 : index
      %531 = memref.load %arg2[%c96] : memref<98xf32, #tpu.memory_space<smem>>
      %532 = vector.broadcast %531 : f32 to vector<16x16xf32>
      %533 = arith.mulf %532, %48 : vector<16x16xf32>
      %534 = arith.addf %530, %533 : vector<16x16xf32>
      %c97 = arith.constant 97 : index
      %535 = memref.load %arg2[%c97] : memref<98xf32, #tpu.memory_space<smem>>
      %536 = vector.broadcast %535 : f32 to vector<16x16xf32>
      %537 = arith.mulf %536, %52 : vector<16x16xf32>
      %538 = arith.addf %534, %537 : vector<16x16xf32>
      %cst_73 = arith.constant dense<0.000000e+00> : vector<16x16xf32>
      %539 = tpu.matmul %21, %538, %cst_73 {dimension_numbers = #tpu.dot_dimension_numbers<[1], [0], [0], [1], [0, 0, 1, 1], [], []>} : vector<16x16xf32>, vector<16x16xf32>, vector<16x16xf32> -> vector<16x16xf32>
      %540 = arith.addf %509, %539 : vector<16x16xf32>
      %cst_74 = arith.constant dense<0.000000e+00> : vector<16x16xf32>
      %541 = tpu.matmul %83, %540, %cst_74 {dimension_numbers = #tpu.dot_dimension_numbers<[1], [0], [0], [1], [0, 0, 1, 1], [], []>} : vector<16x16xf32>, vector<16x16xf32>, vector<16x16xf32> -> vector<16x16xf32>
      %542 = arith.addf %477, %541 : vector<16x16xf32>
      %cst_75 = arith.constant 0.000000e+00 : f32
      %543 = vector.broadcast %cst_75 : f32 to vector<16x16xf32>
      %544 = arith.subf %543, %542 : vector<16x16xf32>
      %545 = math.exp %544 : vector<16x16xf32>
      %cst_76 = arith.constant 1.000000e+00 : f32
      %546 = vector.broadcast %cst_76 : f32 to vector<16x16xf32>
      %547 = arith.addf %546, %545 : vector<16x16xf32>
      %cst_77 = arith.constant 1.000000e+00 : f32
      %548 = vector.broadcast %cst_77 : f32 to vector<16x16xf32>
      %549 = arith.divf %548, %547 : vector<16x16xf32>
      %c0_78 = arith.constant 0 : index
      %c0_79 = arith.constant 0 : index
      %c0_80 = arith.constant 0 : index
      %c0_81 = arith.constant 0 : index
      %550 = vector.load %arg5[%c0_78, %c0_79, %c0_80, %c0_81] : memref<1x1x16x16xf32, #tpu.memory_space<vmem>>, vector<1x1x16x16xf32>
      %551 = vector.shape_cast %550 : vector<1x1x16x16xf32> to vector<16x16xf32>
      %552 = vector.shape_cast %549 : vector<16x16xf32> to vector<1x1x16x16xf32>
      tpu.vector_store %arg5[%c0_78, %c0_79, %c0_80, %c0_81], %552 {strides = array<i32>} : memref<1x1x16x16xf32, #tpu.memory_space<vmem>>, vector<1x1x16x16xf32>,
    } else {
    }
    return
  }
  func.func @transform_0(%arg0: i32, %arg1: i32) -> i32 {
    %c0_i32 = arith.constant 0 : i32
    %c0_i32_0 = arith.constant 0 : i32
    return %c0_i32 : i32
  }
  func.func @transform_1(%arg0: i32, %arg1: i32) -> i32 {
    %c0_i32 = arith.constant 0 : i32
    %c0_i32_0 = arith.constant 0 : i32
    return %c0_i32 : i32
  }
  func.func @transform_2(%arg0: i32, %arg1: i32) -> (i32, i32, i32, i32) {
    %c0_i32 = arith.constant 0 : i32
    %c0_i32_0 = arith.constant 0 : i32
    %c0_i32_1 = arith.constant 0 : i32
    return %arg0, %arg1, %c0_i32, %c0_i32_0 : i32, i32, i32, i32
  }
  func.func @transform_3(%arg0: i32, %arg1: i32) -> (i32, i32, i32, i32) {
    %c0_i32 = arith.constant 0 : i32
    %c0_i32_0 = arith.constant 0 : i32
    %c0_i32_1 = arith.constant 0 : i32
    %c0_i32_2 = arith.constant 0 : i32
    return %arg0, %c0_i32, %c0_i32_0, %c0_i32_1 : i32, i32, i32, i32
  }
}

</mosaic_0001>

<llo_original>
// kernel: tpu_custom_call.1
$region0: #{tpu_custom_call.1}
  #allocation0 [shape = 'u32[]', space=smem, size = 0x4, offset = 0x4, fixed_abs, tag = 'smem constant byte address 0x4 - core index']
  #allocation1 [shape = 'u32[144,128]{1,0:T(1,128)}', space=vmem, size = 0x12000, scoped, tag = 'internal scratch']
  #allocation2 [shape = 'f32[16,16]{1,0:T(8,128)}', space=vmem, size = 0x2000, scoped, tag = 'scratch operand']
  #allocation3 [shape = 'f32[16,16]{1,0:T(8,128)}', space=vmem, size = 0x2000, scoped, tag = 'scratch operand']
  #allocation4 [shape = 'f32[1]{0:T(128)S(6)}', space=smem, size = 0x200, scoped, tag = 'scoped memory for tpu_custom_call.1']
  %s0 = inlined_call_operand.vmem [shape: f32[98], index: 0, kind: input, shape index: {}]
  %s1 = inlined_call_operand.<no memory space> [shape: f32[1], index: 1, kind: input, shape index: {}]
  %s2 = inlined_call_operand.hbm [shape: f32[2,4,16,16], index: 2, kind: input, shape index: {}]
  %s3 = inlined_call_operand.hbm [shape: f32[2,1,16,16], index: 3, kind: output, shape index: {}]
  %s4 = sld [smem:[#allocation0]]
  $region61: #{tpu_custom_call.1} parent=0
    _
  %s6 = ssub.s32 1, %s4
  %s7 = scalar_select 0, %s6, %s4
  %8 = sst [smem:[#allocation4]] %s1
  $region1: #{tpu_custom_call.1} parent=0
    #allocation5 [shape = 'u8[512]{0}', space=smem, size = 0x200, scoped, tag = 'input window, operand 0, single buffered']
    #allocation6 [shape = 's32[2]{0}', space=sflag, size = 0x8, scoped, tag = 'scoped memory for tpu_custom_call.1']
    #allocation7 [shape = 's32[2]{0}', space=sflag, size = 0x8, scoped, tag = 'scoped memory for tpu_custom_call.1']
    #allocation8 [shape = 's32[2]{0}', space=sflag, size = 0x8, scoped, tag = 'scoped memory for tpu_custom_call.1']
    #allocation9 [shape = 'u8[32768]{0}', space=vmem, size = 0x8000, scoped, tag = 'input window, operand 2']
    #allocation10 [shape = 'u8[16384]{0}', space=vmem, size = 0x4000, scoped, tag = 'output window, operand 0']
    %9 = vsyncpa [#allocation8], 0
    %10 = vsyncpa [#allocation6], 0
    %s11 = scalar_lea.sflag [#allocation6], 1
    %12 = vsyncpa %s11, 0
    %13 = vsyncpa [#allocation7], 0
    %s14 = scalar_lea.sflag [#allocation7], 1
    %15 = vsyncpa %s14, 0
    loop: start=0, step=1, limit=6
    $region2: #{tpu_custom_call.1} parent=1 // loop_pre_header
      _
    $region3: #{tpu_custom_call.1} parent=1 // loop_header
      %s17 = sphi 0, %s21
      %p18 = scmp.ge.s32.totalorder %s17, 6
      %s24 = sphi 0, %s36
      %s25 = sphi 0, %s32
      %s26 = sphi 0, %s24
      %s27 = sphi 0, %s25
      %s28 = sphi 0, %s26
      %s29 = sphi 0, %s27
      %s37 = sphi 0, %s37
      %s39 = sphi 0, %s37
      %s40 = sphi 0, %s39
      %s54 = sphi 0, %s40
      %s58 = sphi 0, %s58
      %s60 = sphi 0, %s58
      %s61 = sphi 0, %s60
      %s75 = sphi 0, %s61
      %s83 = sphi 0, %s85
      %s86 = sphi 0, %s83
      %s87 = sphi 0, %s86
      %s103 = sphi 0, %s87
      %s109 = sphi 0, %s111
      %s112 = sphi 0, %s109
      %s113 = sphi 0, %s112
      %s129 = sphi 0, %s113
    $region4: #{tpu_custom_call.1} parent=1 // loop_header_branch
      %20 = sbr.rel (%p18) target = $region8
    $region5: #{tpu_custom_call.1} parent=1 // loop_body
      %s22 = ssub.s32 %s17, 1
      %s23 = ssub.s32 %s17, 2
      %s30 = sadd.s32 1, %s25
      %p31 = scmp.ge.s32.totalorder %s30, 2
      %s32 = scalar_select %p31, 0, %s30
      %s33 = sadd.s32 1, %s24
      %s34 = scalar_select %p31, %s33, %s24
      %p35 = scmp.ge.s32.totalorder %s34, 2
      %s36 = scalar_select %p35, 0, %s34
      %s38 = sadd.s32 %s37, 1
      %p41 = scmp.eq.s32.totalorder %s17, 3
      %p42 = scmp.ne.s32.totalorder %s37, %s39
      %p43 = scmp.eq.s32.totalorder %s17, 0
      %p44 = por %p42, %p43
      %p45 = scmp.ne.s32.totalorder %s37, %s39
      %p46 = scmp.eq.s32.totalorder %s22, 3
      %p47 = por %p45, %p46
      %p48 = scmp.ne.s32.totalorder %s39, %s40
      %p49 = scmp.eq.s32.totalorder %s22, 0
      %p50 = por %p48, %p49
      %p51 = scmp.ne.s32.totalorder %s39, %s40
      %p52 = scmp.eq.s32.totalorder %s23, 3
      %p53 = por %p51, %p52
      %p55 = scmp.ne.s32.totalorder %s40, %s54
      %p56 = scmp.eq.s32.totalorder %s23, 0
      %p57 = por %p55, %p56
      %s59 = sadd.s32 %s58, 1
      %p62 = scmp.eq.s32.totalorder %s17, 3
      %p63 = scmp.ne.s32.totalorder %s58, %s60
      %p64 = scmp.eq.s32.totalorder %s17, 0
      %p65 = por %p63, %p64
      %p66 = scmp.ne.s32.totalorder %s58, %s60
      %p67 = scmp.eq.s32.totalorder %s22, 3
      %p68 = por %p66, %p67
      %p69 = scmp.ne.s32.totalorder %s60, %s61
      %p70 = scmp.eq.s32.totalorder %s22, 0
      %p71 = por %p69, %p70
      %p72 = scmp.ne.s32.totalorder %s60, %s61
      %p73 = scmp.eq.s32.totalorder %s23, 3
      %p74 = por %p72, %p73
      %p76 = scmp.ne.s32.totalorder %s61, %s75
      %p77 = scmp.eq.s32.totalorder %s23, 0
      %p78 = por %p76, %p77
      %s79 = ssub.s32 %s24, %s36
      %s80 = ssub.s32 %s25, %s32
      %s81 = sor.u32 %s79, %s80
      %p82 = scmp.eq.s32.totalorder %s81, 0
      %s84 = sadd.s32 %s83, 1
      %s85 = scalar_select %p82, %s83, %s84
      %p88 = pneg %p82
      %p89 = scmp.eq.s32.totalorder %s17, 3
      %p90 = por %p88, %p89
      %p91 = scmp.ne.s32.totalorder %s83, %s86
      %p92 = scmp.eq.s32.totalorder %s17, 0
      %p93 = por %p91, %p92
      %p94 = scmp.ne.s32.totalorder %s83, %s86
      %p95 = scmp.eq.s32.totalorder %s22, 3
      %p96 = por %p94, %p95
      %p97 = scmp.ne.s32.totalorder %s86, %s87
      %p98 = scmp.eq.s32.totalorder %s22, 0
      %p99 = por %p97, %p98
      %p100 = scmp.ne.s32.totalorder %s86, %s87
      %p101 = scmp.eq.s32.totalorder %s23, 3
      %p102 = por %p100, %p101
      %p104 = scmp.ne.s32.totalorder %s87, %s103
      %p105 = scmp.eq.s32.totalorder %s23, 0
      %p106 = por %p104, %p105
      %s107 = ssub.s32 %s24, %s36
      %p108 = scmp.eq.s32.totalorder %s107, 0
      %s110 = sadd.s32 %s109, 1
      %s111 = scalar_select %p108, %s109, %s110
      %p114 = pneg %p108
      %p115 = scmp.eq.s32.totalorder %s17, 3
      %p116 = por %p114, %p115
      %p117 = scmp.ne.s32.totalorder %s109, %s112
      %p118 = scmp.eq.s32.totalorder %s17, 0
      %p119 = por %p117, %p118
      %p120 = scmp.ne.s32.totalorder %s109, %s112
      %p121 = scmp.eq.s32.totalorder %s22, 3
      %p122 = por %p120, %p121
      %p123 = scmp.ne.s32.totalorder %s112, %s113
      %p124 = scmp.eq.s32.totalorder %s22, 0
      %p125 = por %p123, %p124
      %p126 = scmp.ne.s32.totalorder %s112, %s113
      %p127 = scmp.eq.s32.totalorder %s23, 3
      %p128 = por %p126, %p127
      %p130 = scmp.ne.s32.totalorder %s113, %s129
      %p131 = scmp.eq.s32.totalorder %s23, 0
      %p132 = por %p130, %p131
      %p133 = scmp.le.s32.totalorder 1, %s17
      %p134 = scmp.lt.s32.totalorder %s17, 5
      %p135 = pnand %p133, %p134
      %p136 = pneg %p135
      // Predicated region
      $region9: #{tpu_custom_call.1} parent=5 // pred_check
        _
      $region10: #{tpu_custom_call.1} parent=5 // pred_check_branch
        %138 = sbr.rel (%p135) target = $region12
      $region11: #{tpu_custom_call.1} parent=5 // pred_region
        %s139 = ssub.s32 %s17, 1
        // Predicated region
        $region13: #{tpu_custom_call.1} parent=11 // pred_check
          %p140 = pneg %p50
        $region14: #{tpu_custom_call.1} parent=11 // pred_check_branch
          %142 = sbr.rel (%p140) target = $region16
        $region15: #{tpu_custom_call.1} parent=11 // pred_region
          %s144 = ssub.s32 16, 16
          %145 = vsyncadd [#allocation8], %s144
          %s147 = sshll.u32 %s0, 4
          %s148 = int_to_ptr.vmem [resolvable:$true] %s147
          %150 = dma.vmem_to_smem %s148, 16, [#allocation5], [#allocation8]
        $region16: #{tpu_custom_call.1} parent=11 // pred_fallthru
          _
        // Predicated region
        $region17: #{tpu_custom_call.1} parent=11 // pred_check
          %p151 = pneg %p71
        $region18: #{tpu_custom_call.1} parent=11 // pred_check_branch
          %153 = sbr.rel (%p151) target = $region20
        $region19: #{tpu_custom_call.1} parent=11 // pred_region
          _
        $region20: #{tpu_custom_call.1} parent=11 // pred_fallthru
          _
      $region12: #{tpu_custom_call.1} parent=5 // pred_fallthru
        _
      %p154 = scmp.lt.s32.totalorder %s17, 4
      // Predicated region
      $region21: #{tpu_custom_call.1} parent=5 // pred_check
        %p155 = pneg %p154
      $region22: #{tpu_custom_call.1} parent=5 // pred_check_branch
        %157 = sbr.rel (%p155) target = $region24
      $region23: #{tpu_custom_call.1} parent=5 // pred_region
        // Predicated region
        $region25: #{tpu_custom_call.1} parent=23 // pred_check
          %p158 = pneg %p93
        $region26: #{tpu_custom_call.1} parent=23 // pred_check_branch
          %160 = sbr.rel (%p158) target = $region28
        $region27: #{tpu_custom_call.1} parent=23 // pred_region
          %s161 = sand.u32 %s83, 1
          %s162 = scalar_lea.sflag [#allocation6], %s161
          %s163 = sand.u32 %s83, 1
          %s164 = smul.addr %s163, 32
          %s165 = scalar_lea.vmem [#allocation9], %s164
          %s166 = smul.u32 2, %s25
          %s168 = ssub.s32 512, 512
          %169 = vsyncadd %s162, %s168
          %s170 = smul.addr %s166, 2
          %s171 = smul.addr %s24, 8
          %s172 = sadd.s32 %s170, %s171
          %s173 = smul.addr %s172, 128
          %s174 = scalar_lea.hbm %s2, %s173
          %s175 = sshll.u32 %s165, 4
          %s176 = int_to_ptr.vmem [resolvable:$true] %s175
          %181 = dma.hbm_to_vmem [thread:$0]  %s174, 512, %s176, %s162, 128, 128, 8
        $region28: #{tpu_custom_call.1} parent=23 // pred_fallthru
          _
      $region24: #{tpu_custom_call.1} parent=5 // pred_fallthru
        _
      %p182 = scmp.le.s32.totalorder 1, %s17
      %p183 = scmp.lt.s32.totalorder %s17, 5
      %p184 = pnand %p182, %p183
      %p185 = pneg %p184
      // Predicated region
      $region29: #{tpu_custom_call.1} parent=5 // pred_check
        _
      $region30: #{tpu_custom_call.1} parent=5 // pred_check_branch
        %187 = sbr.rel (%p184) target = $region32
      $region31: #{tpu_custom_call.1} parent=5 // pred_region
        %s188 = ssub.s32 %s17, 1
        // Predicated region
        $region33: #{tpu_custom_call.1} parent=31 // pred_check
          %p189 = pneg %p50
        $region34: #{tpu_custom_call.1} parent=31 // pred_check_branch
          %191 = sbr.rel (%p189) target = $region36
        $region35: #{tpu_custom_call.1} parent=31 // pred_region
          %192 = dma.done [#allocation8], 16
        $region36: #{tpu_custom_call.1} parent=31 // pred_fallthru
          _
        %s193 = sand.u32 %s86, 1
        %s194 = scalar_lea.sflag [#allocation6], %s193
        %s195 = sand.u32 %s86, 1
        %s196 = smul.addr %s195, 32
        %s197 = scalar_lea.vmem [#allocation9], %s196
        // Predicated region
        $region37: #{tpu_custom_call.1} parent=31 // pred_check
          %p198 = pneg %p99
        $region38: #{tpu_custom_call.1} parent=31 // pred_check_branch
          %200 = sbr.rel (%p198) target = $region40
        $region39: #{tpu_custom_call.1} parent=31 // pred_region
          %201 = dma.done %s194, 512
        $region40: #{tpu_custom_call.1} parent=31 // pred_fallthru
          _
        %202 = sfence
        %p203 = pneg %p50
        %p204 = pneg %p47
        %p205 = pneg %p71
        %p206 = pneg %p68
        %s207 = sand.u32 %s86, 1
        %s208 = scalar_lea.sflag [#allocation6], %s207
        %s209 = sand.u32 %s86, 1
        %s210 = smul.addr %s209, 32
        %s211 = scalar_lea.vmem [#allocation9], %s210
        %p212 = pneg %p99
        %p213 = pneg %p96
        %p214 = pneg %p125
        %p215 = pneg %p122
        %s216 = sand.u32 %s112, 1
        %s217 = scalar_lea.sflag [#allocation7], %s216
        %s218 = sand.u32 %s112, 1
        %s219 = smul.addr %s218, 16
        %s220 = scalar_lea.vmem [#allocation10], %s219
        %s221 = smul.u32 2, %s27
        %p222 = scmp.eq.s32.totalorder %s27, 0
        // Predicated region
        $region41: #{tpu_custom_call.1} parent=31 // pred_check
          %p223 = pneg %p222
        $region42: #{tpu_custom_call.1} parent=31 // pred_check_branch
          %225 = sbr.rel (%p223) target = $region44
        $region43: #{tpu_custom_call.1} parent=31 // pred_region
          %vm226 = vcmask 130048
          %227 = vst.msk [vmem:[#allocation2] sm:$0xff] %vm226, 0.0
          %228 = vst.msk [vmem:[#allocation2 + $0x8] sm:$0xff] %vm226, 0.0
          %229 = vst.msk [vmem:[#allocation3] sm:$0xff] %vm226, -inf
          %230 = vst.msk [vmem:[#allocation3 + $0x8] sm:$0xff] %vm226, -inf
        $region44: #{tpu_custom_call.1} parent=31 // pred_fallthru
          _
        %v231 = vld [vmem:[#allocation2] sm:$0xff]
        %v232 = vld [vmem:[#allocation2 + $0x8] sm:$0xff]
        %v233 = vld [vmem:[#allocation3] sm:$0xff]
        %v234 = vld [vmem:[#allocation3 + $0x8] sm:$0xff]
        %v235 = vld [vmem:[%s197] sm:$0xff]
        %v236 = vld [vmem:[%s197 + $0x8] sm:$0xff]
        %v237 = vadd.f32 %v231, %v235
        %v238 = vadd.f32 %v232, %v236
        %v239 = vmax.f32 %v233, %v235
        %v240 = vmax.f32 %v234, %v236
        %s241 = scalar_lea.vmem %s197, 16 [#allocation9]
        %v242 = vld [vmem:[%s241] sm:$0xff]
        %v243 = vld [vmem:[%s241 + $0x8] sm:$0xff]
        %v244 = vadd.f32 %v237, %v242
        %v245 = vadd.f32 %v238, %v243
        %v246 = vmax.f32 %v239, %v242
        %v247 = vmax.f32 %v240, %v243
        %vm248 = vcmask 130048
        %249 = vst.msk [vmem:[#allocation2] sm:$0xff] %vm248, %v244
        %250 = vst.msk [vmem:[#allocation2 + $0x8] sm:$0xff] %vm248, %v245
        %251 = vst.msk [vmem:[#allocation3] sm:$0xff] %vm248, %v246
        %252 = vst.msk [vmem:[#allocation3 + $0x8] sm:$0xff] %vm248, %v247
        %p253 = scmp.eq.s32.totalorder %s27, 1
        // Predicated region
        $region45: #{tpu_custom_call.1} parent=31 // pred_check
          %p254 = pneg %p253
        $region46: #{tpu_custom_call.1} parent=31 // pred_check_branch
          %256 = sbr.rel (%p254) target = $region48
        $region47: #{tpu_custom_call.1} parent=31 // pred_region
          %v257 = vld [vmem:[#allocation2] sm:$0xff]
          %v258 = vld [vmem:[#allocation2 + $0x8] sm:$0xff]
          %v259 = vmul.f32 %v257, 0.25
          %v260 = vmul.f32 %v258, 0.25
          %v261 = vld [vmem:[#allocation3] sm:$0xff]
          %v262 = vld [vmem:[#allocation3 + $0x8] sm:$0xff]
          %v263 = vlaneseq
          %v264 = vshrl.u32 %v263, 7
          %v265 = vadd.s32 %v264, 8
          %v266 = vlaneseq
          %v267 = vand.u32 %v266, 127
          %v268 = vsub.s32 %v264, %v267
          %v269 = vsub.s32 %v265, %v267
          %vm270 = vcmp.eq.s32.totalorder %v268, 4294967293
          %vm271 = vcmp.eq.s32.totalorder %v269, 4294967293
          %v272 = vsel %vm270, 1, 0
          %v273 = vsel %vm271, 1, 0
          %v274 = vcvt.s32.f32 %v272
          %v275 = vcvt.s32.f32 %v273
          %vm276 = vcmp.eq.s32.totalorder %v268, 4294967294
          %vm277 = vcmp.eq.s32.totalorder %v269, 4294967294
          %v278 = vsel %vm276, 1, 0
          %v279 = vsel %vm277, 1, 0
          %v280 = vcvt.s32.f32 %v278
          %v281 = vcvt.s32.f32 %v279
          %vm282 = vcmp.eq.s32.totalorder %v268, 4294967295
          %vm283 = vcmp.eq.s32.totalorder %v269, 4294967295
          %v284 = vsel %vm282, 1, 0
          %v285 = vsel %vm283, 1, 0
          %v286 = vcvt.s32.f32 %v284
          %v287 = vcvt.s32.f32 %v285
          %vm288 = vcmp.eq.s32.totalorder %v268, 0
          %vm289 = vcmp.eq.s32.totalorder %v269, 0
          %v290 = vsel %vm288, 1, 0
          %v291 = vsel %vm289, 1, 0
          %v292 = vcvt.s32.f32 %v290
          %v293 = vcvt.s32.f32 %v291
          %vm294 = vcmp.eq.s32.totalorder %v268, 1
          %vm295 = vcmp.eq.s32.totalorder %v269, 1
          %v296 = vsel %vm294, 1, 0
          %v297 = vsel %vm295, 1, 0
          %v298 = vcvt.s32.f32 %v296
          %v299 = vcvt.s32.f32 %v297
          %vm300 = vcmp.eq.s32.totalorder %v268, 2
          %vm301 = vcmp.eq.s32.totalorder %v269, 2
          %v302 = vsel %vm300, 1, 0
          %v303 = vsel %vm301, 1, 0
          %v304 = vcvt.s32.f32 %v302
          %v305 = vcvt.s32.f32 %v303
          %vm306 = vcmp.eq.s32.totalorder %v268, 3
          %vm307 = vcmp.eq.s32.totalorder %v269, 3
          %v308 = vsel %vm306, 1, 0
          %v309 = vsel %vm307, 1, 0
          %v310 = vcvt.s32.f32 %v308
          %v311 = vcvt.s32.f32 %v309
          %v312 = vsub.s32 %v267, %v264
          %v313 = vsub.s32 %v267, %v265
          %vm314 = vcmp.eq.s32.totalorder %v312, 4294967293
          %vm315 = vcmp.eq.s32.totalorder %v313, 4294967293
          %v316 = vsel %vm314, 1, 0
          %v317 = vsel %vm315, 1, 0
          %v318 = vcvt.s32.f32 %v316
          %v319 = vcvt.s32.f32 %v317
          %vm320 = vcmp.eq.s32.totalorder %v312, 4294967294
          %vm321 = vcmp.eq.s32.totalorder %v313, 4294967294
          %v322 = vsel %vm320, 1, 0
          %v323 = vsel %vm321, 1, 0
          %v324 = vcvt.s32.f32 %v322
          %v325 = vcvt.s32.f32 %v323
          %vm326 = vcmp.eq.s32.totalorder %v312, 4294967295
          %vm327 = vcmp.eq.s32.totalorder %v313, 4294967295
          %v328 = vsel %vm326, 1, 0
          %v329 = vsel %vm327, 1, 0
          %v330 = vcvt.s32.f32 %v328
          %v331 = vcvt.s32.f32 %v329
          %vm332 = vcmp.eq.s32.totalorder %v312, 0
          %vm333 = vcmp.eq.s32.totalorder %v313, 0
          %v334 = vsel %vm332, 1, 0
          %v335 = vsel %vm333, 1, 0
          %v336 = vcvt.s32.f32 %v334
          %v337 = vcvt.s32.f32 %v335
          %vm338 = vcmp.eq.s32.totalorder %v312, 1
          %vm339 = vcmp.eq.s32.totalorder %v313, 1
          %v340 = vsel %vm338, 1, 0
          %v341 = vsel %vm339, 1, 0
          %v342 = vcvt.s32.f32 %v340
          %v343 = vcvt.s32.f32 %v341
          %vm344 = vcmp.eq.s32.totalorder %v312, 2
          %vm345 = vcmp.eq.s32.totalorder %v313, 2
          %v346 = vsel %vm344, 1, 0
          %v347 = vsel %vm345, 1, 0
          %v348 = vcvt.s32.f32 %v346
          %v349 = vcvt.s32.f32 %v347
          %vm350 = vcmp.eq.s32.totalorder %v312, 3
          %vm351 = vcmp.eq.s32.totalorder %v313, 3
          %v352 = vsel %vm350, 1, 0
          %v353 = vsel %vm351, 1, 0
          %v354 = vcvt.s32.f32 %v352
          %v355 = vcvt.s32.f32 %v353
          %s356 = sld [smem:[#allocation4]]
          %v357 = vstv %s356
          %v358 = vadd.f32 %v357, 0.0
          %s359 = sld [smem:[#allocation5]]
          %v360 = vstv %s359
          %v361 = vmul.f32 %v360, %v274
          %v362 = vmul.f32 %v360, %v275
          %v363 = vadd.f32 %v361, 0.0
          %v364 = vadd.f32 %v362, 0.0
          %s365 = sld [smem:[#allocation5 + $0x1]]
          %v366 = vstv %s365
          %v367 = vmul.f32 %v366, %v280
          %v368 = vmul.f32 %v366, %v281
          %v369 = vadd.f32 %v363, %v367
          %v370 = vadd.f32 %v364, %v368
          %s371 = sld [smem:[#allocation5 + $0x2]]
          %v372 = vstv %s371
          %v373 = vmul.f32 %v372, %v286
          %v374 = vmul.f32 %v372, %v287
          %v375 = vadd.f32 %v369, %v373
          %v376 = vadd.f32 %v370, %v374
          %s377 = sld [smem:[#allocation5 + $0x3]]
          %v378 = vstv %s377
          %v379 = vmul.f32 %v378, %v292
          %v380 = vmul.f32 %v378, %v293
          %v381 = vadd.f32 %v375, %v379
          %v382 = vadd.f32 %v376, %v380
          %s383 = sld [smem:[#allocation5 + $0x4]]
          %v384 = vstv %s383
          %v385 = vmul.f32 %v384, %v298
          %v386 = vmul.f32 %v384, %v299
          %v387 = vadd.f32 %v381, %v385
          %v388 = vadd.f32 %v382, %v386
          %s389 = sld [smem:[#allocation5 + $0x5]]
          %v390 = vstv %s389
          %v391 = vmul.f32 %v390, %v304
          %v392 = vmul.f32 %v390, %v305
          %v393 = vadd.f32 %v387, %v391
          %v394 = vadd.f32 %v388, %v392
          %s395 = sld [smem:[#allocation5 + $0x6]]
          %v396 = vstv %s395
          %v397 = vmul.f32 %v396, %v310
          %v398 = vmul.f32 %v396, %v311
          %v399 = vadd.f32 %v393, %v397
          %v400 = vadd.f32 %v394, %v398
          %s401 = sld [smem:[#allocation5 + $0x31]]
          %v402 = vstv %s401
          %v403 = vmul.f32 %v402, %v274
          %v404 = vmul.f32 %v402, %v275
          %v405 = vadd.f32 %v403, 0.0
          %v406 = vadd.f32 %v404, 0.0
          %s407 = sld [smem:[#allocation5 + $0x32]]
          %v408 = vstv %s407
          %v409 = vmul.f32 %v408, %v280
          %v410 = vmul.f32 %v408, %v281
          %v411 = vadd.f32 %v405, %v409
          %v412 = vadd.f32 %v406, %v410
          %s413 = sld [smem:[#allocation5 + $0x33]]
          %v414 = vstv %s413
          %v415 = vmul.f32 %v414, %v286
          %v416 = vmul.f32 %v414, %v287
          %v417 = vadd.f32 %v411, %v415
          %v418 = vadd.f32 %v412, %v416
          %s419 = sld [smem:[#allocation5 + $0x34]]
          %v420 = vstv %s419
          %v421 = vmul.f32 %v420, %v292
          %v422 = vmul.f32 %v420, %v293
          %v423 = vadd.f32 %v417, %v421
          %v424 = vadd.f32 %v418, %v422
          %s425 = sld [smem:[#allocation5 + $0x35]]
          %v426 = vstv %s425
          %v427 = vmul.f32 %v426, %v298
          %v428 = vmul.f32 %v426, %v299
          %v429 = vadd.f32 %v423, %v427
          %v430 = vadd.f32 %v424, %v428
          %s431 = sld [smem:[#allocation5 + $0x36]]
          %v432 = vstv %s431
          %v433 = vmul.f32 %v432, %v304
          %v434 = vmul.f32 %v432, %v305
          %v435 = vadd.f32 %v429, %v433
          %v436 = vadd.f32 %v430, %v434
          %s437 = sld [smem:[#allocation5 + $0x37]]
          %v438 = vstv %s437
          %v439 = vmul.f32 %v438, %v310
          %v440 = vmul.f32 %v438, %v311
          %v441 = vadd.f32 %v435, %v439
          %v442 = vadd.f32 %v436, %v440
          %v444 = vsel %vm248, %v261, 0
          %v447 = vsel %vm248, %v262, 0
          %449 = vmatprep.subr.mxu0 0.0
          %450 = vmatpush1.msra.mxu0 %v441
          %451 = vmatprep.subr.mxu0 0.0
          %452 = vmatpush1.msra.mxu0 %v442
          %453 = vmatprep.subr.mxu0 0.0
          %454 = vmatpush1.msra.mxu0 0.0
          %455 = vmatprep.subr.mxu0 0.0
          %456 = vmatpush1.msra.mxu0 0.0
          %457 = vmatprep.subr.mxu0 0.0
          %458 = vmatpush1.msra.mxu0 0.0
          %459 = vmatprep.subr.mxu0 0.0
          %460 = vmatpush1.msra.mxu0 0.0
          %461 = vmatprep.subr.mxu0 0.0
          %462 = vmatpush1.msra.mxu0 0.0
          %463 = vmatprep.subr.mxu0 0.0
          %464 = vmatpush1.msra.mxu0 0.0
          %465 = vmatprep.subr.mxu0 0.0
          %466 = vmatpush1.msra.mxu0 0.0
          %467 = vmatprep.subr.mxu0 0.0
          %468 = vmatpush1.msra.mxu0 0.0
          %469 = vmatprep.subr.mxu0 0.0
          %470 = vmatpush1.msra.mxu0 0.0
          %471 = vmatprep.subr.mxu0 0.0
          %472 = vmatpush1.msra.mxu0 0.0
          %473 = vmatprep.subr.mxu0 0.0
          %474 = vmatpush1.msra.mxu0 0.0
          %475 = vmatprep.subr.mxu0 0.0
          %476 = vmatpush1.msra.mxu0 0.0
          %477 = vmatprep.subr.mxu0 0.0
          %478 = vmatpush1.msra.mxu0 0.0
          %479 = vmatprep.subr.mxu0 0.0
          %480 = vmatpush1.msra.mxu0 0.0
          %481 = vmatprep.subr.mxu0 0.0
          %482 = vmatpush1.msra.mxu0 0.0
          %483 = vmatprep.subr.mxu0 0.0
          %484 = vmatpush1.msra.mxu0 0.0
          %485 = vmatprep.subr.mxu0 0.0
          %486 = vmatpush1.msra.mxu0 0.0
          %487 = vmatprep.subr.mxu0 0.0
          %488 = vmatpush1.msra.mxu0 0.0
          %489 = vmatprep.subr.mxu0 0.0
          %490 = vmatpush1.msra.mxu0 0.0
          %491 = vmatprep.subr.mxu0 0.0
          %492 = vmatpush1.msra.mxu0 0.0
          %493 = vmatprep.subr.mxu0 0.0
          %494 = vmatpush1.msra.mxu0 0.0
          %495 = vmatprep.subr.mxu0 0.0
          %496 = vmatpush1.msra.mxu0 0.0
          %497 = vmatprep.subr.mxu0 0.0
          %498 = vmatpush1.msra.mxu0 0.0
          %499 = vmatprep.subr.mxu0 0.0
          %500 = vmatpush1.msra.mxu0 0.0
          %501 = vmatprep.subr.mxu0 0.0
          %502 = vmatpush1.msra.mxu0 0.0
          %503 = vmatprep.subr.mxu0 0.0
          %504 = vmatpush1.msra.mxu0 0.0
          %505 = vmatprep.subr.mxu0 0.0
          %506 = vmatpush1.msra.mxu0 0.0
          %507 = vmatprep.subr.mxu0 0.0
          %508 = vmatpush1.msra.mxu0 0.0
          %509 = vmatprep.subr.mxu0 0.0
          %510 = vmatpush1.msra.mxu0 0.0
          %511 = vmatprep.subr.mxu0 0.0
          %512 = vmatpush1.msra.mxu0 0.0
          %513 = vmatprep.mubr.f32.mxu0 0.0
          %514 = vmatmul.mubr.f32.gmra.mrb[0].mxu0 %v444
          %v515 = vpop.f32.mrb[0].mxu0
          %v516 = vadd.f32 0.0, %v515
          %v517 = vpop.f32.mrb[0].mxu0
          %518 = vmatprep.mubr.f32.mxu0 0.0
          %519 = vmatmul.mubr.f32.gmra.mrb[0].mxu0 %v447
          %v520 = vpop.f32.mrb[0].mxu0
          %v521 = vadd.f32 0.0, %v520
          %v522 = vpop.f32.mrb[0].mxu0
          %523 = vdwg.mxu0
          %v525 = vsel %vm248, %v259, 0
          %v528 = vsel %vm248, %v260, 0
          %530 = vmatprep.subr.mxu0 0.0
          %531 = vmatpush1.msra.mxu0 %v399
          %532 = vmatprep.subr.mxu0 0.0
          %533 = vmatpush1.msra.mxu0 %v400
          %534 = vmatprep.subr.mxu0 0.0
          %535 = vmatpush1.msra.mxu0 0.0
          %536 = vmatprep.subr.mxu0 0.0
          %537 = vmatpush1.msra.mxu0 0.0
          %538 = vmatprep.subr.mxu0 0.0
          %539 = vmatpush1.msra.mxu0 0.0
          %540 = vmatprep.subr.mxu0 0.0
          %541 = vmatpush1.msra.mxu0 0.0
          %542 = vmatprep.subr.mxu0 0.0
          %543 = vmatpush1.msra.mxu0 0.0
          %544 = vmatprep.subr.mxu0 0.0
          %545 = vmatpush1.msra.mxu0 0.0
          %546 = vmatprep.subr.mxu0 0.0
          %547 = vmatpush1.msra.mxu0 0.0
          %548 = vmatprep.subr.mxu0 0.0
          %549 = vmatpush1.msra.mxu0 0.0
          %550 = vmatprep.subr.mxu0 0.0
          %551 = vmatpush1.msra.mxu0 0.0
          %552 = vmatprep.subr.mxu0 0.0
          %553 = vmatpush1.msra.mxu0 0.0
          %554 = vmatprep.subr.mxu0 0.0
          %555 = vmatpush1.msra.mxu0 0.0
          %556 = vmatprep.subr.mxu0 0.0
          %557 = vmatpush1.msra.mxu0 0.0
          %558 = vmatprep.subr.mxu0 0.0
          %559 = vmatpush1.msra.mxu0 0.0
          %560 = vmatprep.subr.mxu0 0.0
          %561 = vmatpush1.msra.mxu0 0.0
          %562 = vmatprep.subr.mxu0 0.0
          %563 = vmatpush1.msra.mxu0 0.0
          %564 = vmatprep.subr.mxu0 0.0
          %565 = vmatpush1.msra.mxu0 0.0
          %566 = vmatprep.subr.mxu0 0.0
          %567 = vmatpush1.msra.mxu0 0.0
          %568 = vmatprep.subr.mxu0 0.0
          %569 = vmatpush1.msra.mxu0 0.0
          %570 = vmatprep.subr.mxu0 0.0
          %571 = vmatpush1.msra.mxu0 0.0
          %572 = vmatprep.subr.mxu0 0.0
          %573 = vmatpush1.msra.mxu0 0.0
          %574 = vmatprep.subr.mxu0 0.0
          %575 = vmatpush1.msra.mxu0 0.0
          %576 = vmatprep.subr.mxu0 0.0
          %577 = vmatpush1.msra.mxu0 0.0
          %578 = vmatprep.subr.mxu0 0.0
          %579 = vmatpush1.msra.mxu0 0.0
          %580 = vmatprep.subr.mxu0 0.0
          %581 = vmatpush1.msra.mxu0 0.0
          %582 = vmatprep.subr.mxu0 0.0
          %583 = vmatpush1.msra.mxu0 0.0
          %584 = vmatprep.subr.mxu0 0.0
          %585 = vmatpush1.msra.mxu0 0.0
          %586 = vmatprep.subr.mxu0 0.0
          %587 = vmatpush1.msra.mxu0 0.0
          %588 = vmatprep.subr.mxu0 0.0
          %589 = vmatpush1.msra.mxu0 0.0
          %590 = vmatprep.subr.mxu0 0.0
          %591 = vmatpush1.msra.mxu0 0.0
          %592 = vmatprep.subr.mxu0 0.0
          %593 = vmatpush1.msra.mxu0 0.0
          %594 = vmatprep.mubr.f32.mxu0 0.0
          %595 = vmatmul.mubr.f32.gmra.mrb[0].mxu0 %v525
          %v596 = vpop.f32.mrb[0].mxu0
          %v597 = vadd.f32 %v516, %v596
          %v598 = vpop.f32.mrb[0].mxu0
          %599 = vmatprep.mubr.f32.mxu0 0.0
          %600 = vmatmul.mubr.f32.gmra.mrb[0].mxu0 %v528
          %v601 = vpop.f32.mrb[0].mxu0
          %v602 = vadd.f32 %v521, %v601
          %v603 = vpop.f32.mrb[0].mxu0
          %604 = vdwg.mxu0
          %v606 = vsel %vm248, %v318, 0
          %v609 = vsel %vm248, %v319, 0
          %611 = vmatprep.subr.mxu0 0.0
          %612 = vmatpush1.msra.mxu0 %v597
          %613 = vmatprep.subr.mxu0 0.0
          %614 = vmatpush1.msra.mxu0 %v602
          %615 = vmatprep.subr.mxu0 0.0
          %616 = vmatpush1.msra.mxu0 0.0
          %617 = vmatprep.subr.mxu0 0.0
          %618 = vmatpush1.msra.mxu0 0.0
          %619 = vmatprep.subr.mxu0 0.0
          %620 = vmatpush1.msra.mxu0 0.0
          %621 = vmatprep.subr.mxu0 0.0
          %622 = vmatpush1.msra.mxu0 0.0
          %623 = vmatprep.subr.mxu0 0.0
          %624 = vmatpush1.msra.mxu0 0.0
          %625 = vmatprep.subr.mxu0 0.0
          %626 = vmatpush1.msra.mxu0 0.0
          %627 = vmatprep.subr.mxu0 0.0
          %628 = vmatpush1.msra.mxu0 0.0
          %629 = vmatprep.subr.mxu0 0.0
          %630 = vmatpush1.msra.mxu0 0.0
          %631 = vmatprep.subr.mxu0 0.0
          %632 = vmatpush1.msra.mxu0 0.0
          %633 = vmatprep.subr.mxu0 0.0
          %634 = vmatpush1.msra.mxu0 0.0
          %635 = vmatprep.subr.mxu0 0.0
          %636 = vmatpush1.msra.mxu0 0.0
          %637 = vmatprep.subr.mxu0 0.0
          %638 = vmatpush1.msra.mxu0 0.0
          %639 = vmatprep.subr.mxu0 0.0
          %640 = vmatpush1.msra.mxu0 0.0
          %641 = vmatprep.subr.mxu0 0.0
          %642 = vmatpush1.msra.mxu0 0.0
          %643 = vmatprep.subr.mxu0 0.0
          %644 = vmatpush1.msra.mxu0 0.0
          %645 = vmatprep.subr.mxu0 0.0
          %646 = vmatpush1.msra.mxu0 0.0
          %647 = vmatprep.subr.mxu0 0.0
          %648 = vmatpush1.msra.mxu0 0.0
          %649 = vmatprep.subr.mxu0 0.0
          %650 = vmatpush1.msra.mxu0 0.0
          %651 = vmatprep.subr.mxu0 0.0
          %652 = vmatpush1.msra.mxu0 0.0
          %653 = vmatprep.subr.mxu0 0.0
          %654 = vmatpush1.msra.mxu0 0.0
          %655 = vmatprep.subr.mxu0 0.0
          %656 = vmatpush1.msra.mxu0 0.0
          %657 = vmatprep.subr.mxu0 0.0
          %658 = vmatpush1.msra.mxu0 0.0
          %659 = vmatprep.subr.mxu0 0.0
          %660 = vmatpush1.msra.mxu0 0.0
          %661 = vmatprep.subr.mxu0 0.0
          %662 = vmatpush1.msra.mxu0 0.0
          %663 = vmatprep.subr.mxu0 0.0
          %664 = vmatpush1.msra.mxu0 0.0
          %665 = vmatprep.subr.mxu0 0.0
          %666 = vmatpush1.msra.mxu0 0.0
          %667 = vmatprep.subr.mxu0 0.0
          %668 = vmatpush1.msra.mxu0 0.0
          %669 = vmatprep.subr.mxu0 0.0
          %670 = vmatpush1.msra.mxu0 0.0
          %671 = vmatprep.subr.mxu0 0.0
          %672 = vmatpush1.msra.mxu0 0.0
          %673 = vmatprep.subr.mxu0 0.0
          %674 = vmatpush1.msra.mxu0 0.0
          %675 = vmatprep.mubr.f32.mxu0 0.0
          %676 = vmatmul.mubr.f32.gmra.mrb[0].mxu0 %v606
          %v677 = vpop.f32.mrb[0].mxu0
          %v678 = vadd.f32 0.0, %v677
          %v679 = vpop.f32.mrb[0].mxu0
          %680 = vmatprep.mubr.f32.mxu0 0.0
          %681 = vmatmul.mubr.f32.gmra.mrb[0].mxu0 %v609
          %v682 = vpop.f32.mrb[0].mxu0
          %v683 = vadd.f32 0.0, %v682
          %v684 = vpop.f32.mrb[0].mxu0
          %685 = vdwg.mxu0
          %v686 = vadd.f32 %v358, %v678
          %v687 = vadd.f32 %v358, %v683
          %s688 = sld [smem:[#allocation5 + $0x7]]
          %v689 = vstv %s688
          %v690 = vmul.f32 %v689, %v274
          %v691 = vmul.f32 %v689, %v275
          %v692 = vadd.f32 %v690, 0.0
          %v693 = vadd.f32 %v691, 0.0
          %s694 = sld [smem:[#allocation5 + $0x8]]
          %v695 = vstv %s694
          %v696 = vmul.f32 %v695, %v280
          %v697 = vmul.f32 %v695, %v281
          %v698 = vadd.f32 %v692, %v696
          %v699 = vadd.f32 %v693, %v697
          %s700 = sld [smem:[#allocation5 + $0x9]]
          %v701 = vstv %s700
          %v702 = vmul.f32 %v701, %v286
          %v703 = vmul.f32 %v701, %v287
          %v704 = vadd.f32 %v698, %v702
          %v705 = vadd.f32 %v699, %v703
          %s706 = sld [smem:[#allocation5 + $0xa]]
          %v707 = vstv %s706
          %v708 = vmul.f32 %v707, %v292
          %v709 = vmul.f32 %v707, %v293
          %v710 = vadd.f32 %v704, %v708
          %v711 = vadd.f32 %v705, %v709
          %s712 = sld [smem:[#allocation5 + $0xb]]
          %v713 = vstv %s712
          %v714 = vmul.f32 %v713, %v298
          %v715 = vmul.f32 %v713, %v299
          %v716 = vadd.f32 %v710, %v714
          %v717 = vadd.f32 %v711, %v715
          %s718 = sld [smem:[#allocation5 + $0xc]]
          %v719 = vstv %s718
          %v720 = vmul.f32 %v719, %v304
          %v721 = vmul.f32 %v719, %v305
          %v722 = vadd.f32 %v716, %v720
          %v723 = vadd.f32 %v717, %v721
          %s724 = sld [smem:[#allocation5 + $0xd]]
          %v725 = vstv %s724
          %v726 = vmul.f32 %v725, %v310
          %v727 = vmul.f32 %v725, %v311
          %v728 = vadd.f32 %v722, %v726
          %v729 = vadd.f32 %v723, %v727
          %s730 = sld [smem:[#allocation5 + $0x38]]
          %v731 = vstv %s730
          %v732 = vmul.f32 %v731, %v274
          %v733 = vmul.f32 %v731, %v275
          %v734 = vadd.f32 %v732, 0.0
          %v735 = vadd.f32 %v733, 0.0
          %s736 = sld [smem:[#allocation5 + $0x39]]
          %v737 = vstv %s736
          %v738 = vmul.f32 %v737, %v280
          %v739 = vmul.f32 %v737, %v281
          %v740 = vadd.f32 %v734, %v738
          %v741 = vadd.f32 %v735, %v739
          %s742 = sld [smem:[#allocation5 + $0x3a]]
          %v743 = vstv %s742
          %v744 = vmul.f32 %v743, %v286
          %v745 = vmul.f32 %v743, %v287
          %v746 = vadd.f32 %v740, %v744
          %v747 = vadd.f32 %v741, %v745
          %s748 = sld [smem:[#allocation5 + $0x3b]]
          %v749 = vstv %s748
          %v750 = vmul.f32 %v749, %v292
          %v751 = vmul.f32 %v749, %v293
          %v752 = vadd.f32 %v746, %v750
          %v753 = vadd.f32 %v747, %v751
          %s754 = sld [smem:[#allocation5 + $0x3c]]
          %v755 = vstv %s754
          %v756 = vmul.f32 %v755, %v298
          %v757 = vmul.f32 %v755, %v299
          %v758 = vadd.f32 %v752, %v756
          %v759 = vadd.f32 %v753, %v757
          %s760 = sld [smem:[#allocation5 + $0x3d]]
          %v761 = vstv %s760
          %v762 = vmul.f32 %v761, %v304
          %v763 = vmul.f32 %v761, %v305
          %v764 = vadd.f32 %v758, %v762
          %v765 = vadd.f32 %v759, %v763
          %s766 = sld [smem:[#allocation5 + $0x3e]]
          %v767 = vstv %s766
          %v768 = vmul.f32 %v767, %v310
          %v769 = vmul.f32 %v767, %v311
          %v770 = vadd.f32 %v764, %v768
          %v771 = vadd.f32 %v765, %v769
          %772 = vmatprep.subr.mxu0 0.0
          %773 = vmatpush1.msra.mxu0 %v770
          %774 = vmatprep.subr.mxu0 0.0
          %775 = vmatpush1.msra.mxu0 %v771
          %776 = vmatprep.subr.mxu0 0.0
          %777 = vmatpush1.msra.mxu0 0.0
          %778 = vmatprep.subr.mxu0 0.0
          %779 = vmatpush1.msra.mxu0 0.0
          %780 = vmatprep.subr.mxu0 0.0
          %781 = vmatpush1.msra.mxu0 0.0
          %782 = vmatprep.subr.mxu0 0.0
          %783 = vmatpush1.msra.mxu0 0.0
          %784 = vmatprep.subr.mxu0 0.0
          %785 = vmatpush1.msra.mxu0 0.0
          %786 = vmatprep.subr.mxu0 0.0
          %787 = vmatpush1.msra.mxu0 0.0
          %788 = vmatprep.subr.mxu0 0.0
          %789 = vmatpush1.msra.mxu0 0.0
          %790 = vmatprep.subr.mxu0 0.0
          %791 = vmatpush1.msra.mxu0 0.0
          %792 = vmatprep.subr.mxu0 0.0
          %793 = vmatpush1.msra.mxu0 0.0
          %794 = vmatprep.subr.mxu0 0.0
          %795 = vmatpush1.msra.mxu0 0.0
          %796 = vmatprep.subr.mxu0 0.0
          %797 = vmatpush1.msra.mxu0 0.0
          %798 = vmatprep.subr.mxu0 0.0
          %799 = vmatpush1.msra.mxu0 0.0
          %800 = vmatprep.subr.mxu0 0.0
          %801 = vmatpush1.msra.mxu0 0.0
          %802 = vmatprep.subr.mxu0 0.0
          %803 = vmatpush1.msra.mxu0 0.0
          %804 = vmatprep.subr.mxu0 0.0
          %805 = vmatpush1.msra.mxu0 0.0
          %806 = vmatprep.subr.mxu0 0.0
          %807 = vmatpush1.msra.mxu0 0.0
          %808 = vmatprep.subr.mxu0 0.0
          %809 = vmatpush1.msra.mxu0 0.0
          %810 = vmatprep.subr.mxu0 0.0
          %811 = vmatpush1.msra.mxu0 0.0
          %812 = vmatprep.subr.mxu0 0.0
          %813 = vmatpush1.msra.mxu0 0.0
          %814 = vmatprep.subr.mxu0 0.0
          %815 = vmatpush1.msra.mxu0 0.0
          %816 = vmatprep.subr.mxu0 0.0
          %817 = vmatpush1.msra.mxu0 0.0
          %818 = vmatprep.subr.mxu0 0.0
          %819 = vmatpush1.msra.mxu0 0.0
          %820 = vmatprep.subr.mxu0 0.0
          %821 = vmatpush1.msra.mxu0 0.0
          %822 = vmatprep.subr.mxu0 0.0
          %823 = vmatpush1.msra.mxu0 0.0
          %824 = vmatprep.subr.mxu0 0.0
          %825 = vmatpush1.msra.mxu0 0.0
          %826 = vmatprep.subr.mxu0 0.0
          %827 = vmatpush1.msra.mxu0 0.0
          %828 = vmatprep.subr.mxu0 0.0
          %829 = vmatpush1.msra.mxu0 0.0
          %830 = vmatprep.subr.mxu0 0.0
          %831 = vmatpush1.msra.mxu0 0.0
          %832 = vmatprep.subr.mxu0 0.0
          %833 = vmatpush1.msra.mxu0 0.0
          %834 = vmatprep.subr.mxu0 0.0
          %835 = vmatpush1.msra.mxu0 0.0
          %836 = vmatprep.mubr.f32.mxu0 0.0
          %837 = vmatmul.mubr.f32.gmra.mrb[0].mxu0 %v444
          %v838 = vpop.f32.mrb[0].mxu0
          %v839 = vadd.f32 0.0, %v838
          %v840 = vpop.f32.mrb[0].mxu0
          %841 = vmatprep.mubr.f32.mxu0 0.0
          %842 = vmatmul.mubr.f32.gmra.mrb[0].mxu0 %v447
          %v843 = vpop.f32.mrb[0].mxu0
          %v844 = vadd.f32 0.0, %v843
          %v845 = vpop.f32.mrb[0].mxu0
          %846 = vdwg.mxu0
          %847 = vmatprep.subr.mxu0 0.0
          %848 = vmatpush1.msra.mxu0 %v728
          %849 = vmatprep.subr.mxu0 0.0
          %850 = vmatpush1.msra.mxu0 %v729
          %851 = vmatprep.subr.mxu0 0.0
          %852 = vmatpush1.msra.mxu0 0.0
          %853 = vmatprep.subr.mxu0 0.0
          %854 = vmatpush1.msra.mxu0 0.0
          %855 = vmatprep.subr.mxu0 0.0
          %856 = vmatpush1.msra.mxu0 0.0
          %857 = vmatprep.subr.mxu0 0.0
          %858 = vmatpush1.msra.mxu0 0.0
          %859 = vmatprep.subr.mxu0 0.0
          %860 = vmatpush1.msra.mxu0 0.0
          %861 = vmatprep.subr.mxu0 0.0
          %862 = vmatpush1.msra.mxu0 0.0
          %863 = vmatprep.subr.mxu0 0.0
          %864 = vmatpush1.msra.mxu0 0.0
          %865 = vmatprep.subr.mxu0 0.0
          %866 = vmatpush1.msra.mxu0 0.0
          %867 = vmatprep.subr.mxu0 0.0
          %868 = vmatpush1.msra.mxu0 0.0
          %869 = vmatprep.subr.mxu0 0.0
          %870 = vmatpush1.msra.mxu0 0.0
          %871 = vmatprep.subr.mxu0 0.0
          %872 = vmatpush1.msra.mxu0 0.0
          %873 = vmatprep.subr.mxu0 0.0
          %874 = vmatpush1.msra.mxu0 0.0
          %875 = vmatprep.subr.mxu0 0.0
          %876 = vmatpush1.msra.mxu0 0.0
          %877 = vmatprep.subr.mxu0 0.0
          %878 = vmatpush1.msra.mxu0 0.0
          %879 = vmatprep.subr.mxu0 0.0
          %880 = vmatpush1.msra.mxu0 0.0
          %881 = vmatprep.subr.mxu0 0.0
          %882 = vmatpush1.msra.mxu0 0.0
          %883 = vmatprep.subr.mxu0 0.0
          %884 = vmatpush1.msra.mxu0 0.0
          %885 = vmatprep.subr.mxu0 0.0
          %886 = vmatpush1.msra.mxu0 0.0
          %887 = vmatprep.subr.mxu0 0.0
          %888 = vmatpush1.msra.mxu0 0.0
          %889 = vmatprep.subr.mxu0 0.0
          %890 = vmatpush1.msra.mxu0 0.0
          %891 = vmatprep.subr.mxu0 0.0
          %892 = vmatpush1.msra.mxu0 0.0
          %893 = vmatprep.subr.mxu0 0.0
          %894 = vmatpush1.msra.mxu0 0.0
          %895 = vmatprep.subr.mxu0 0.0
          %896 = vmatpush1.msra.mxu0 0.0
          %897 = vmatprep.subr.mxu0 0.0
          %898 = vmatpush1.msra.mxu0 0.0
          %899 = vmatprep.subr.mxu0 0.0
          %900 = vmatpush1.msra.mxu0 0.0
          %901 = vmatprep.subr.mxu0 0.0
          %902 = vmatpush1.msra.mxu0 0.0
          %903 = vmatprep.subr.mxu0 0.0
          %904 = vmatpush1.msra.mxu0 0.0
          %905 = vmatprep.subr.mxu0 0.0
          %906 = vmatpush1.msra.mxu0 0.0
          %907 = vmatprep.subr.mxu0 0.0
          %908 = vmatpush1.msra.mxu0 0.0
          %909 = vmatprep.subr.mxu0 0.0
          %910 = vmatpush1.msra.mxu0 0.0
          %911 = vmatprep.mubr.f32.mxu0 0.0
          %912 = vmatmul.mubr.f32.gmra.mrb[0].mxu0 %v525
          %v913 = vpop.f32.mrb[0].mxu0
          %v914 = vadd.f32 %v839, %v913
          %v915 = vpop.f32.mrb[0].mxu0
          %916 = vmatprep.mubr.f32.mxu0 0.0
          %917 = vmatmul.mubr.f32.gmra.mrb[0].mxu0 %v528
          %v918 = vpop.f32.mrb[0].mxu0
          %v919 = vadd.f32 %v844, %v918
          %v920 = vpop.f32.mrb[0].mxu0
          %921 = vdwg.mxu0
          %v923 = vsel %vm248, %v324, 0
          %v926 = vsel %vm248, %v325, 0
          %928 = vmatprep.subr.mxu0 0.0
          %929 = vmatpush1.msra.mxu0 %v914
          %930 = vmatprep.subr.mxu0 0.0
          %931 = vmatpush1.msra.mxu0 %v919
          %932 = vmatprep.subr.mxu0 0.0
          %933 = vmatpush1.msra.mxu0 0.0
          %934 = vmatprep.subr.mxu0 0.0
          %935 = vmatpush1.msra.mxu0 0.0
          %936 = vmatprep.subr.mxu0 0.0
          %937 = vmatpush1.msra.mxu0 0.0
          %938 = vmatprep.subr.mxu0 0.0
          %939 = vmatpush1.msra.mxu0 0.0
          %940 = vmatprep.subr.mxu0 0.0
          %941 = vmatpush1.msra.mxu0 0.0
          %942 = vmatprep.subr.mxu0 0.0
          %943 = vmatpush1.msra.mxu0 0.0
          %944 = vmatprep.subr.mxu0 0.0
          %945 = vmatpush1.msra.mxu0 0.0
          %946 = vmatprep.subr.mxu0 0.0
          %947 = vmatpush1.msra.mxu0 0.0
          %948 = vmatprep.subr.mxu0 0.0
          %949 = vmatpush1.msra.mxu0 0.0
          %950 = vmatprep.subr.mxu0 0.0
          %951 = vmatpush1.msra.mxu0 0.0
          %952 = vmatprep.subr.mxu0 0.0
          %953 = vmatpush1.msra.mxu0 0.0
          %954 = vmatprep.subr.mxu0 0.0
          %955 = vmatpush1.msra.mxu0 0.0
          %956 = vmatprep.subr.mxu0 0.0
          %957 = vmatpush1.msra.mxu0 0.0
          %958 = vmatprep.subr.mxu0 0.0
          %959 = vmatpush1.msra.mxu0 0.0
          %960 = vmatprep.subr.mxu0 0.0
          %961 = vmatpush1.msra.mxu0 0.0
          %962 = vmatprep.subr.mxu0 0.0
          %963 = vmatpush1.msra.mxu0 0.0
          %964 = vmatprep.subr.mxu0 0.0
          %965 = vmatpush1.msra.mxu0 0.0
          %966 = vmatprep.subr.mxu0 0.0
          %967 = vmatpush1.msra.mxu0 0.0
          %968 = vmatprep.subr.mxu0 0.0
          %969 = vmatpush1.msra.mxu0 0.0
          %970 = vmatprep.subr.mxu0 0.0
          %971 = vmatpush1.msra.mxu0 0.0
          %972 = vmatprep.subr.mxu0 0.0
          %973 = vmatpush1.msra.mxu0 0.0
          %974 = vmatprep.subr.mxu0 0.0
          %975 = vmatpush1.msra.mxu0 0.0
          %976 = vmatprep.subr.mxu0 0.0
          %977 = vmatpush1.msra.mxu0 0.0
          %978 = vmatprep.subr.mxu0 0.0
          %979 = vmatpush1.msra.mxu0 0.0
          %980 = vmatprep.subr.mxu0 0.0
          %981 = vmatpush1.msra.mxu0 0.0
          %982 = vmatprep.subr.mxu0 0.0
          %983 = vmatpush1.msra.mxu0 0.0
          %984 = vmatprep.subr.mxu0 0.0
          %985 = vmatpush1.msra.mxu0 0.0
          %986 = vmatprep.subr.mxu0 0.0
          %987 = vmatpush1.msra.mxu0 0.0
          %988 = vmatprep.subr.mxu0 0.0
          %989 = vmatpush1.msra.mxu0 0.0
          %990 = vmatprep.subr.mxu0 0.0
          %991 = vmatpush1.msra.mxu0 0.0
          %992 = vmatprep.mubr.f32.mxu0 0.0
          %993 = vmatmul.mubr.f32.gmra.mrb[0].mxu0 %v923
          %v994 = vpop.f32.mrb[0].mxu0
          %v995 = vadd.f32 0.0, %v994
          %v996 = vpop.f32.mrb[0].mxu0
          %997 = vmatprep.mubr.f32.mxu0 0.0
          %998 = vmatmul.mubr.f32.gmra.mrb[0].mxu0 %v926
          %v999 = vpop.f32.mrb[0].mxu0
          %v1000 = vadd.f32 0.0, %v999
          %v1001 = vpop.f32.mrb[0].mxu0
          %1002 = vdwg.mxu0
          %v1003 = vadd.f32 %v686, %v995
          %v1004 = vadd.f32 %v687, %v1000
          %s1005 = sld [smem:[#allocation5 + $0xe]]
          %v1006 = vstv %s1005
          %v1007 = vmul.f32 %v1006, %v274
          %v1008 = vmul.f32 %v1006, %v275
          %v1009 = vadd.f32 %v1007, 0.0
          %v1010 = vadd.f32 %v1008, 0.0
          %s1011 = sld [smem:[#allocation5 + $0xf]]
          %v1012 = vstv %s1011
          %v1013 = vmul.f32 %v1012, %v280
          %v1014 = vmul.f32 %v1012, %v281
          %v1015 = vadd.f32 %v1009, %v1013
          %v1016 = vadd.f32 %v1010, %v1014
          %s1017 = sld [smem:[#allocation5 + $0x10]]
          %v1018 = vstv %s1017
          %v1019 = vmul.f32 %v1018, %v286
          %v1020 = vmul.f32 %v1018, %v287
          %v1021 = vadd.f32 %v1015, %v1019
          %v1022 = vadd.f32 %v1016, %v1020
          %s1023 = sld [smem:[#allocation5 + $0x11]]
          %v1024 = vstv %s1023
          %v1025 = vmul.f32 %v1024, %v292
          %v1026 = vmul.f32 %v1024, %v293
          %v1027 = vadd.f32 %v1021, %v1025
          %v1028 = vadd.f32 %v1022, %v1026
          %s1029 = sld [smem:[#allocation5 + $0x12]]
          %v1030 = vstv %s1029
          %v1031 = vmul.f32 %v1030, %v298
          %v1032 = vmul.f32 %v1030, %v299
          %v1033 = vadd.f32 %v1027, %v1031
          %v1034 = vadd.f32 %v1028, %v1032
          %s1035 = sld [smem:[#allocation5 + $0x13]]
          %v1036 = vstv %s1035
          %v1037 = vmul.f32 %v1036, %v304
          %v1038 = vmul.f32 %v1036, %v305
          %v1039 = vadd.f32 %v1033, %v1037
          %v1040 = vadd.f32 %v1034, %v1038
          %s1041 = sld [smem:[#allocation5 + $0x14]]
          %v1042 = vstv %s1041
          %v1043 = vmul.f32 %v1042, %v310
          %v1044 = vmul.f32 %v1042, %v311
          %v1045 = vadd.f32 %v1039, %v1043
          %v1046 = vadd.f32 %v1040, %v1044
          %s1047 = sld [smem:[#allocation5 + $0x3f]]
          %v1048 = vstv %s1047
          %v1049 = vmul.f32 %v1048, %v274
          %v1050 = vmul.f32 %v1048, %v275
          %v1051 = vadd.f32 %v1049, 0.0
          %v1052 = vadd.f32 %v1050, 0.0
          %s1053 = sld [smem:[#allocation5 + $0x40]]
          %v1054 = vstv %s1053
          %v1055 = vmul.f32 %v1054, %v280
          %v1056 = vmul.f32 %v1054, %v281
          %v1057 = vadd.f32 %v1051, %v1055
          %v1058 = vadd.f32 %v1052, %v1056
          %s1059 = sld [smem:[#allocation5 + $0x41]]
          %v1060 = vstv %s1059
          %v1061 = vmul.f32 %v1060, %v286
          %v1062 = vmul.f32 %v1060, %v287
          %v1063 = vadd.f32 %v1057, %v1061
          %v1064 = vadd.f32 %v1058, %v1062
          %s1065 = sld [smem:[#allocation5 + $0x42]]
          %v1066 = vstv %s1065
          %v1067 = vmul.f32 %v1066, %v292
          %v1068 = vmul.f32 %v1066, %v293
          %v1069 = vadd.f32 %v1063, %v1067
          %v1070 = vadd.f32 %v1064, %v1068
          %s1071 = sld [smem:[#allocation5 + $0x43]]
          %v1072 = vstv %s1071
          %v1073 = vmul.f32 %v1072, %v298
          %v1074 = vmul.f32 %v1072, %v299
          %v1075 = vadd.f32 %v1069, %v1073
          %v1076 = vadd.f32 %v1070, %v1074
          %s1077 = sld [smem:[#allocation5 + $0x44]]
          %v1078 = vstv %s1077
          %v1079 = vmul.f32 %v1078, %v304
          %v1080 = vmul.f32 %v1078, %v305
          %v1081 = vadd.f32 %v1075, %v1079
          %v1082 = vadd.f32 %v1076, %v1080
          %s1083 = sld [smem:[#allocation5 + $0x45]]
          %v1084 = vstv %s1083
          %v1085 = vmul.f32 %v1084, %v310
          %v1086 = vmul.f32 %v1084, %v311
          %v1087 = vadd.f32 %v1081, %v1085
          %v1088 = vadd.f32 %v1082, %v1086
          %1089 = vmatprep.subr.mxu0 0.0
          %1090 = vmatpush1.msra.mxu0 %v1087
          %1091 = vmatprep.subr.mxu0 0.0
          %1092 = vmatpush1.msra.mxu0 %v1088
          %1093 = vmatprep.subr.mxu0 0.0
          %1094 = vmatpush1.msra.mxu0 0.0
          %1095 = vmatprep.subr.mxu0 0.0
          %1096 = vmatpush1.msra.mxu0 0.0
          %1097 = vmatprep.subr.mxu0 0.0
          %1098 = vmatpush1.msra.mxu0 0.0
          %1099 = vmatprep.subr.mxu0 0.0
          %1100 = vmatpush1.msra.mxu0 0.0
          %1101 = vmatprep.subr.mxu0 0.0
          %1102 = vmatpush1.msra.mxu0 0.0
          %1103 = vmatprep.subr.mxu0 0.0
          %1104 = vmatpush1.msra.mxu0 0.0
          %1105 = vmatprep.subr.mxu0 0.0
          %1106 = vmatpush1.msra.mxu0 0.0
          %1107 = vmatprep.subr.mxu0 0.0
          %1108 = vmatpush1.msra.mxu0 0.0
          %1109 = vmatprep.subr.mxu0 0.0
          %1110 = vmatpush1.msra.mxu0 0.0
          %1111 = vmatprep.subr.mxu0 0.0
          %1112 = vmatpush1.msra.mxu0 0.0
          %1113 = vmatprep.subr.mxu0 0.0
          %1114 = vmatpush1.msra.mxu0 0.0
          %1115 = vmatprep.subr.mxu0 0.0
          %1116 = vmatpush1.msra.mxu0 0.0
          %1117 = vmatprep.subr.mxu0 0.0
          %1118 = vmatpush1.msra.mxu0 0.0
          %1119 = vmatprep.subr.mxu0 0.0
          %1120 = vmatpush1.msra.mxu0 0.0
          %1121 = vmatprep.subr.mxu0 0.0
          %1122 = vmatpush1.msra.mxu0 0.0
          %1123 = vmatprep.subr.mxu0 0.0
          %1124 = vmatpush1.msra.mxu0 0.0
          %1125 = vmatprep.subr.mxu0 0.0
          %1126 = vmatpush1.msra.mxu0 0.0
          %1127 = vmatprep.subr.mxu0 0.0
          %1128 = vmatpush1.msra.mxu0 0.0
          %1129 = vmatprep.subr.mxu0 0.0
          %1130 = vmatpush1.msra.mxu0 0.0
          %1131 = vmatprep.subr.mxu0 0.0
          %1132 = vmatpush1.msra.mxu0 0.0
          %1133 = vmatprep.subr.mxu0 0.0
          %1134 = vmatpush1.msra.mxu0 0.0
          %1135 = vmatprep.subr.mxu0 0.0
          %1136 = vmatpush1.msra.mxu0 0.0
          %1137 = vmatprep.subr.mxu0 0.0
          %1138 = vmatpush1.msra.mxu0 0.0
          %1139 = vmatprep.subr.mxu0 0.0
          %1140 = vmatpush1.msra.mxu0 0.0
          %1141 = vmatprep.subr.mxu0 0.0
          %1142 = vmatpush1.msra.mxu0 0.0
          %1143 = vmatprep.subr.mxu0 0.0
          %1144 = vmatpush1.msra.mxu0 0.0
          %1145 = vmatprep.subr.mxu0 0.0
          %1146 = vmatpush1.msra.mxu0 0.0
          %1147 = vmatprep.subr.mxu0 0.0
          %1148 = vmatpush1.msra.mxu0 0.0
          %1149 = vmatprep.subr.mxu0 0.0
          %1150 = vmatpush1.msra.mxu0 0.0
          %1151 = vmatprep.subr.mxu0 0.0
          %1152 = vmatpush1.msra.mxu0 0.0
          %1153 = vmatprep.mubr.f32.mxu0 0.0
          %1154 = vmatmul.mubr.f32.gmra.mrb[0].mxu0 %v444
          %v1155 = vpop.f32.mrb[0].mxu0
          %v1156 = vadd.f32 0.0, %v1155
          %v1157 = vpop.f32.mrb[0].mxu0
          %1158 = vmatprep.mubr.f32.mxu0 0.0
          %1159 = vmatmul.mubr.f32.gmra.mrb[0].mxu0 %v447
          %v1160 = vpop.f32.mrb[0].mxu0
          %v1161 = vadd.f32 0.0, %v1160
          %v1162 = vpop.f32.mrb[0].mxu0
          %1163 = vdwg.mxu0
          %1164 = vmatprep.subr.mxu0 0.0
          %1165 = vmatpush1.msra.mxu0 %v1045
          %1166 = vmatprep.subr.mxu0 0.0
          %1167 = vmatpush1.msra.mxu0 %v1046
          %1168 = vmatprep.subr.mxu0 0.0
          %1169 = vmatpush1.msra.mxu0 0.0
          %1170 = vmatprep.subr.mxu0 0.0
          %1171 = vmatpush1.msra.mxu0 0.0
          %1172 = vmatprep.subr.mxu0 0.0
          %1173 = vmatpush1.msra.mxu0 0.0
          %1174 = vmatprep.subr.mxu0 0.0
          %1175 = vmatpush1.msra.mxu0 0.0
          %1176 = vmatprep.subr.mxu0 0.0
          %1177 = vmatpush1.msra.mxu0 0.0
          %1178 = vmatprep.subr.mxu0 0.0
          %1179 = vmatpush1.msra.mxu0 0.0
          %1180 = vmatprep.subr.mxu0 0.0
          %1181 = vmatpush1.msra.mxu0 0.0
          %1182 = vmatprep.subr.mxu0 0.0
          %1183 = vmatpush1.msra.mxu0 0.0
          %1184 = vmatprep.subr.mxu0 0.0
          %1185 = vmatpush1.msra.mxu0 0.0
          %1186 = vmatprep.subr.mxu0 0.0
          %1187 = vmatpush1.msra.mxu0 0.0
          %1188 = vmatprep.subr.mxu0 0.0
          %1189 = vmatpush1.msra.mxu0 0.0
          %1190 = vmatprep.subr.mxu0 0.0
          %1191 = vmatpush1.msra.mxu0 0.0
          %1192 = vmatprep.subr.mxu0 0.0
          %1193 = vmatpush1.msra.mxu0 0.0
          %1194 = vmatprep.subr.mxu0 0.0
          %1195 = vmatpush1.msra.mxu0 0.0
          %1196 = vmatprep.subr.mxu0 0.0
          %1197 = vmatpush1.msra.mxu0 0.0
          %1198 = vmatprep.subr.mxu0 0.0
          %1199 = vmatpush1.msra.mxu0 0.0
          %1200 = vmatprep.subr.mxu0 0.0
          %1201 = vmatpush1.msra.mxu0 0.0
          %1202 = vmatprep.subr.mxu0 0.0
          %1203 = vmatpush1.msra.mxu0 0.0
          %1204 = vmatprep.subr.mxu0 0.0
          %1205 = vmatpush1.msra.mxu0 0.0
          %1206 = vmatprep.subr.mxu0 0.0
          %1207 = vmatpush1.msra.mxu0 0.0
          %1208 = vmatprep.subr.mxu0 0.0
          %1209 = vmatpush1.msra.mxu0 0.0
          %1210 = vmatprep.subr.mxu0 0.0
          %1211 = vmatpush1.msra.mxu0 0.0
          %1212 = vmatprep.subr.mxu0 0.0
          %1213 = vmatpush1.msra.mxu0 0.0
          %1214 = vmatprep.subr.mxu0 0.0
          %1215 = vmatpush1.msra.mxu0 0.0
          %1216 = vmatprep.subr.mxu0 0.0
          %1217 = vmatpush1.msra.mxu0 0.0
          %1218 = vmatprep.subr.mxu0 0.0
          %1219 = vmatpush1.msra.mxu0 0.0
          %1220 = vmatprep.subr.mxu0 0.0
          %1221 = vmatpush1.msra.mxu0 0.0
          %1222 = vmatprep.subr.mxu0 0.0
          %1223 = vmatpush1.msra.mxu0 0.0
          %1224 = vmatprep.subr.mxu0 0.0
          %1225 = vmatpush1.msra.mxu0 0.0
          %1226 = vmatprep.subr.mxu0 0.0
          %1227 = vmatpush1.msra.mxu0 0.0
          %1228 = vmatprep.mubr.f32.mxu0 0.0
          %1229 = vmatmul.mubr.f32.gmra.mrb[0].mxu0 %v525
          %v1230 = vpop.f32.mrb[0].mxu0
          %v1231 = vadd.f32 %v1156, %v1230
          %v1232 = vpop.f32.mrb[0].mxu0
          %1233 = vmatprep.mubr.f32.mxu0 0.0
          %1234 = vmatmul.mubr.f32.gmra.mrb[0].mxu0 %v528
          %v1235 = vpop.f32.mrb[0].mxu0
          %v1236 = vadd.f32 %v1161, %v1235
          %v1237 = vpop.f32.mrb[0].mxu0
          %1238 = vdwg.mxu0
          %v1240 = vsel %vm248, %v330, 0
          %v1243 = vsel %vm248, %v331, 0
          %1245 = vmatprep.subr.mxu0 0.0
          %1246 = vmatpush1.msra.mxu0 %v1231
          %1247 = vmatprep.subr.mxu0 0.0
          %1248 = vmatpush1.msra.mxu0 %v1236
          %1249 = vmatprep.subr.mxu0 0.0
          %1250 = vmatpush1.msra.mxu0 0.0
          %1251 = vmatprep.subr.mxu0 0.0
          %1252 = vmatpush1.msra.mxu0 0.0
          %1253 = vmatprep.subr.mxu0 0.0
          %1254 = vmatpush1.msra.mxu0 0.0
          %1255 = vmatprep.subr.mxu0 0.0
          %1256 = vmatpush1.msra.mxu0 0.0
          %1257 = vmatprep.subr.mxu0 0.0
          %1258 = vmatpush1.msra.mxu0 0.0
          %1259 = vmatprep.subr.mxu0 0.0
          %1260 = vmatpush1.msra.mxu0 0.0
          %1261 = vmatprep.subr.mxu0 0.0
          %1262 = vmatpush1.msra.mxu0 0.0
          %1263 = vmatprep.subr.mxu0 0.0
          %1264 = vmatpush1.msra.mxu0 0.0
          %1265 = vmatprep.subr.mxu0 0.0
          %1266 = vmatpush1.msra.mxu0 0.0
          %1267 = vmatprep.subr.mxu0 0.0
          %1268 = vmatpush1.msra.mxu0 0.0
          %1269 = vmatprep.subr.mxu0 0.0
          %1270 = vmatpush1.msra.mxu0 0.0
          %1271 = vmatprep.subr.mxu0 0.0
          %1272 = vmatpush1.msra.mxu0 0.0
          %1273 = vmatprep.subr.mxu0 0.0
          %1274 = vmatpush1.msra.mxu0 0.0
          %1275 = vmatprep.subr.mxu0 0.0
          %1276 = vmatpush1.msra.mxu0 0.0
          %1277 = vmatprep.subr.mxu0 0.0
          %1278 = vmatpush1.msra.mxu0 0.0
          %1279 = vmatprep.subr.mxu0 0.0
          %1280 = vmatpush1.msra.mxu0 0.0
          %1281 = vmatprep.subr.mxu0 0.0
          %1282 = vmatpush1.msra.mxu0 0.0
          %1283 = vmatprep.subr.mxu0 0.0
          %1284 = vmatpush1.msra.mxu0 0.0
          %1285 = vmatprep.subr.mxu0 0.0
          %1286 = vmatpush1.msra.mxu0 0.0
          %1287 = vmatprep.subr.mxu0 0.0
          %1288 = vmatpush1.msra.mxu0 0.0
          %1289 = vmatprep.subr.mxu0 0.0
          %1290 = vmatpush1.msra.mxu0 0.0
          %1291 = vmatprep.subr.mxu0 0.0
          %1292 = vmatpush1.msra.mxu0 0.0
          %1293 = vmatprep.subr.mxu0 0.0
          %1294 = vmatpush1.msra.mxu0 0.0
          %1295 = vmatprep.subr.mxu0 0.0
          %1296 = vmatpush1.msra.mxu0 0.0
          %1297 = vmatprep.subr.mxu0 0.0
          %1298 = vmatpush1.msra.mxu0 0.0
          %1299 = vmatprep.subr.mxu0 0.0
          %1300 = vmatpush1.msra.mxu0 0.0
          %1301 = vmatprep.subr.mxu0 0.0
          %1302 = vmatpush1.msra.mxu0 0.0
          %1303 = vmatprep.subr.mxu0 0.0
          %1304 = vmatpush1.msra.mxu0 0.0
          %1305 = vmatprep.subr.mxu0 0.0
          %1306 = vmatpush1.msra.mxu0 0.0
          %1307 = vmatprep.subr.mxu0 0.0
          %1308 = vmatpush1.msra.mxu0 0.0
          %1309 = vmatprep.mubr.f32.mxu0 0.0
          %1310 = vmatmul.mubr.f32.gmra.mrb[0].mxu0 %v1240
          %v1311 = vpop.f32.mrb[0].mxu0
          %v1312 = vadd.f32 0.0, %v1311
          %v1313 = vpop.f32.mrb[0].mxu0
          %1314 = vmatprep.mubr.f32.mxu0 0.0
          %1315 = vmatmul.mubr.f32.gmra.mrb[0].mxu0 %v1243
          %v1316 = vpop.f32.mrb[0].mxu0
          %v1317 = vadd.f32 0.0, %v1316
          %v1318 = vpop.f32.mrb[0].mxu0
          %1319 = vdwg.mxu0
          %v1320 = vadd.f32 %v1003, %v1312
          %v1321 = vadd.f32 %v1004, %v1317
          %s1322 = sld [smem:[#allocation5 + $0x15]]
          %v1323 = vstv %s1322
          %v1324 = vmul.f32 %v1323, %v274
          %v1325 = vmul.f32 %v1323, %v275
          %v1326 = vadd.f32 %v1324, 0.0
          %v1327 = vadd.f32 %v1325, 0.0
          %s1328 = sld [smem:[#allocation5 + $0x16]]
          %v1329 = vstv %s1328
          %v1330 = vmul.f32 %v1329, %v280
          %v1331 = vmul.f32 %v1329, %v281
          %v1332 = vadd.f32 %v1326, %v1330
          %v1333 = vadd.f32 %v1327, %v1331
          %s1334 = sld [smem:[#allocation5 + $0x17]]
          %v1335 = vstv %s1334
          %v1336 = vmul.f32 %v1335, %v286
          %v1337 = vmul.f32 %v1335, %v287
          %v1338 = vadd.f32 %v1332, %v1336
          %v1339 = vadd.f32 %v1333, %v1337
          %s1340 = sld [smem:[#allocation5 + $0x18]]
          %v1341 = vstv %s1340
          %v1342 = vmul.f32 %v1341, %v292
          %v1343 = vmul.f32 %v1341, %v293
          %v1344 = vadd.f32 %v1338, %v1342
          %v1345 = vadd.f32 %v1339, %v1343
          %s1346 = sld [smem:[#allocation5 + $0x19]]
          %v1347 = vstv %s1346
          %v1348 = vmul.f32 %v1347, %v298
          %v1349 = vmul.f32 %v1347, %v299
          %v1350 = vadd.f32 %v1344, %v1348
          %v1351 = vadd.f32 %v1345, %v1349
          %s1352 = sld [smem:[#allocation5 + $0x1a]]
          %v1353 = vstv %s1352
          %v1354 = vmul.f32 %v1353, %v304
          %v1355 = vmul.f32 %v1353, %v305
          %v1356 = vadd.f32 %v1350, %v1354
          %v1357 = vadd.f32 %v1351, %v1355
          %s1358 = sld [smem:[#allocation5 + $0x1b]]
          %v1359 = vstv %s1358
          %v1360 = vmul.f32 %v1359, %v310
          %v1361 = vmul.f32 %v1359, %v311
          %v1362 = vadd.f32 %v1356, %v1360
          %v1363 = vadd.f32 %v1357, %v1361
          %s1364 = sld [smem:[#allocation5 + $0x46]]
          %v1365 = vstv %s1364
          %v1366 = vmul.f32 %v1365, %v274
          %v1367 = vmul.f32 %v1365, %v275
          %v1368 = vadd.f32 %v1366, 0.0
          %v1369 = vadd.f32 %v1367, 0.0
          %s1370 = sld [smem:[#allocation5 + $0x47]]
          %v1371 = vstv %s1370
          %v1372 = vmul.f32 %v1371, %v280
          %v1373 = vmul.f32 %v1371, %v281
          %v1374 = vadd.f32 %v1368, %v1372
          %v1375 = vadd.f32 %v1369, %v1373
          %s1376 = sld [smem:[#allocation5 + $0x48]]
          %v1377 = vstv %s1376
          %v1378 = vmul.f32 %v1377, %v286
          %v1379 = vmul.f32 %v1377, %v287
          %v1380 = vadd.f32 %v1374, %v1378
          %v1381 = vadd.f32 %v1375, %v1379
          %s1382 = sld [smem:[#allocation5 + $0x49]]
          %v1383 = vstv %s1382
          %v1384 = vmul.f32 %v1383, %v292
          %v1385 = vmul.f32 %v1383, %v293
          %v1386 = vadd.f32 %v1380, %v1384
          %v1387 = vadd.f32 %v1381, %v1385
          %s1388 = sld [smem:[#allocation5 + $0x4a]]
          %v1389 = vstv %s1388
          %v1390 = vmul.f32 %v1389, %v298
          %v1391 = vmul.f32 %v1389, %v299
          %v1392 = vadd.f32 %v1386, %v1390
          %v1393 = vadd.f32 %v1387, %v1391
          %s1394 = sld [smem:[#allocation5 + $0x4b]]
          %v1395 = vstv %s1394
          %v1396 = vmul.f32 %v1395, %v304
          %v1397 = vmul.f32 %v1395, %v305
          %v1398 = vadd.f32 %v1392, %v1396
          %v1399 = vadd.f32 %v1393, %v1397
          %s1400 = sld [smem:[#allocation5 + $0x4c]]
          %v1401 = vstv %s1400
          %v1402 = vmul.f32 %v1401, %v310
          %v1403 = vmul.f32 %v1401, %v311
          %v1404 = vadd.f32 %v1398, %v1402
          %v1405 = vadd.f32 %v1399, %v1403
          %1406 = vmatprep.subr.mxu0 0.0
          %1407 = vmatpush1.msra.mxu0 %v1404
          %1408 = vmatprep.subr.mxu0 0.0
          %1409 = vmatpush1.msra.mxu0 %v1405
          %1410 = vmatprep.subr.mxu0 0.0
          %1411 = vmatpush1.msra.mxu0 0.0
          %1412 = vmatprep.subr.mxu0 0.0
          %1413 = vmatpush1.msra.mxu0 0.0
          %1414 = vmatprep.subr.mxu0 0.0
          %1415 = vmatpush1.msra.mxu0 0.0
          %1416 = vmatprep.subr.mxu0 0.0
          %1417 = vmatpush1.msra.mxu0 0.0
          %1418 = vmatprep.subr.mxu0 0.0
          %1419 = vmatpush1.msra.mxu0 0.0
          %1420 = vmatprep.subr.mxu0 0.0
          %1421 = vmatpush1.msra.mxu0 0.0
          %1422 = vmatprep.subr.mxu0 0.0
          %1423 = vmatpush1.msra.mxu0 0.0
          %1424 = vmatprep.subr.mxu0 0.0
          %1425 = vmatpush1.msra.mxu0 0.0
          %1426 = vmatprep.subr.mxu0 0.0
          %1427 = vmatpush1.msra.mxu0 0.0
          %1428 = vmatprep.subr.mxu0 0.0
          %1429 = vmatpush1.msra.mxu0 0.0
          %1430 = vmatprep.subr.mxu0 0.0
          %1431 = vmatpush1.msra.mxu0 0.0
          %1432 = vmatprep.subr.mxu0 0.0
          %1433 = vmatpush1.msra.mxu0 0.0
          %1434 = vmatprep.subr.mxu0 0.0
          %1435 = vmatpush1.msra.mxu0 0.0
          %1436 = vmatprep.subr.mxu0 0.0
          %1437 = vmatpush1.msra.mxu0 0.0
          %1438 = vmatprep.subr.mxu0 0.0
          %1439 = vmatpush1.msra.mxu0 0.0
          %1440 = vmatprep.subr.mxu0 0.0
          %1441 = vmatpush1.msra.mxu0 0.0
          %1442 = vmatprep.subr.mxu0 0.0
          %1443 = vmatpush1.msra.mxu0 0.0
          %1444 = vmatprep.subr.mxu0 0.0
          %1445 = vmatpush1.msra.mxu0 0.0
          %1446 = vmatprep.subr.mxu0 0.0
          %1447 = vmatpush1.msra.mxu0 0.0
          %1448 = vmatprep.subr.mxu0 0.0
          %1449 = vmatpush1.msra.mxu0 0.0
          %1450 = vmatprep.subr.mxu0 0.0
          %1451 = vmatpush1.msra.mxu0 0.0
          %1452 = vmatprep.subr.mxu0 0.0
          %1453 = vmatpush1.msra.mxu0 0.0
          %1454 = vmatprep.subr.mxu0 0.0
          %1455 = vmatpush1.msra.mxu0 0.0
          %1456 = vmatprep.subr.mxu0 0.0
          %1457 = vmatpush1.msra.mxu0 0.0
          %1458 = vmatprep.subr.mxu0 0.0
          %1459 = vmatpush1.msra.mxu0 0.0
          %1460 = vmatprep.subr.mxu0 0.0
          %1461 = vmatpush1.msra.mxu0 0.0
          %1462 = vmatprep.subr.mxu0 0.0
          %1463 = vmatpush1.msra.mxu0 0.0
          %1464 = vmatprep.subr.mxu0 0.0
          %1465 = vmatpush1.msra.mxu0 0.0
          %1466 = vmatprep.subr.mxu0 0.0
          %1467 = vmatpush1.msra.mxu0 0.0
          %1468 = vmatprep.subr.mxu0 0.0
          %1469 = vmatpush1.msra.mxu0 0.0
          %1470 = vmatprep.mubr.f32.mxu0 0.0
          %1471 = vmatmul.mubr.f32.gmra.mrb[0].mxu0 %v444
          %v1472 = vpop.f32.mrb[0].mxu0
          %v1473 = vadd.f32 0.0, %v1472
          %v1474 = vpop.f32.mrb[0].mxu0
          %1475 = vmatprep.mubr.f32.mxu0 0.0
          %1476 = vmatmul.mubr.f32.gmra.mrb[0].mxu0 %v447
          %v1477 = vpop.f32.mrb[0].mxu0
          %v1478 = vadd.f32 0.0, %v1477
          %v1479 = vpop.f32.mrb[0].mxu0
          %1480 = vdwg.mxu0
          %1481 = vmatprep.subr.mxu0 0.0
          %1482 = vmatpush1.msra.mxu0 %v1362
          %1483 = vmatprep.subr.mxu0 0.0
          %1484 = vmatpush1.msra.mxu0 %v1363
          %1485 = vmatprep.subr.mxu0 0.0
          %1486 = vmatpush1.msra.mxu0 0.0
          %1487 = vmatprep.subr.mxu0 0.0
          %1488 = vmatpush1.msra.mxu0 0.0
          %1489 = vmatprep.subr.mxu0 0.0
          %1490 = vmatpush1.msra.mxu0 0.0
          %1491 = vmatprep.subr.mxu0 0.0
          %1492 = vmatpush1.msra.mxu0 0.0
          %1493 = vmatprep.subr.mxu0 0.0
          %1494 = vmatpush1.msra.mxu0 0.0
          %1495 = vmatprep.subr.mxu0 0.0
          %1496 = vmatpush1.msra.mxu0 0.0
          %1497 = vmatprep.subr.mxu0 0.0
          %1498 = vmatpush1.msra.mxu0 0.0
          %1499 = vmatprep.subr.mxu0 0.0
          %1500 = vmatpush1.msra.mxu0 0.0
          %1501 = vmatprep.subr.mxu0 0.0
          %1502 = vmatpush1.msra.mxu0 0.0
          %1503 = vmatprep.subr.mxu0 0.0
          %1504 = vmatpush1.msra.mxu0 0.0
          %1505 = vmatprep.subr.mxu0 0.0
          %1506 = vmatpush1.msra.mxu0 0.0
          %1507 = vmatprep.subr.mxu0 0.0
          %1508 = vmatpush1.msra.mxu0 0.0
          %1509 = vmatprep.subr.mxu0 0.0
          %1510 = vmatpush1.msra.mxu0 0.0
          %1511 = vmatprep.subr.mxu0 0.0
          %1512 = vmatpush1.msra.mxu0 0.0
          %1513 = vmatprep.subr.mxu0 0.0
          %1514 = vmatpush1.msra.mxu0 0.0
          %1515 = vmatprep.subr.mxu0 0.0
          %1516 = vmatpush1.msra.mxu0 0.0
          %1517 = vmatprep.subr.mxu0 0.0
          %1518 = vmatpush1.msra.mxu0 0.0
          %1519 = vmatprep.subr.mxu0 0.0
          %1520 = vmatpush1.msra.mxu0 0.0
          %1521 = vmatprep.subr.mxu0 0.0
          %1522 = vmatpush1.msra.mxu0 0.0
          %1523 = vmatprep.subr.mxu0 0.0
          %1524 = vmatpush1.msra.mxu0 0.0
          %1525 = vmatprep.subr.mxu0 0.0
          %1526 = vmatpush1.msra.mxu0 0.0
          %1527 = vmatprep.subr.mxu0 0.0
          %1528 = vmatpush1.msra.mxu0 0.0
          %1529 = vmatprep.subr.mxu0 0.0
          %1530 = vmatpush1.msra.mxu0 0.0
          %1531 = vmatprep.subr.mxu0 0.0
          %1532 = vmatpush1.msra.mxu0 0.0
          %1533 = vmatprep.subr.mxu0 0.0
          %1534 = vmatpush1.msra.mxu0 0.0
          %1535 = vmatprep.subr.mxu0 0.0
          %1536 = vmatpush1.msra.mxu0 0.0
          %1537 = vmatprep.subr.mxu0 0.0
          %1538 = vmatpush1.msra.mxu0 0.0
          %1539 = vmatprep.subr.mxu0 0.0
          %1540 = vmatpush1.msra.mxu0 0.0
          %1541 = vmatprep.subr.mxu0 0.0
          %1542 = vmatpush1.msra.mxu0 0.0
          %1543 = vmatprep.subr.mxu0 0.0
          %1544 = vmatpush1.msra.mxu0 0.0
          %1545 = vmatprep.mubr.f32.mxu0 0.0
          %1546 = vmatmul.mubr.f32.gmra.mrb[0].mxu0 %v525
          %v1547 = vpop.f32.mrb[0].mxu0
          %v1548 = vadd.f32 %v1473, %v1547
          %v1549 = vpop.f32.mrb[0].mxu0
          %1550 = vmatprep.mubr.f32.mxu0 0.0
          %1551 = vmatmul.mubr.f32.gmra.mrb[0].mxu0 %v528
          %v1552 = vpop.f32.mrb[0].mxu0
          %v1553 = vadd.f32 %v1478, %v1552
          %v1554 = vpop.f32.mrb[0].mxu0
          %1555 = vdwg.mxu0
          %v1557 = vsel %vm248, %v336, 0
          %v1560 = vsel %vm248, %v337, 0
          %1562 = vmatprep.subr.mxu0 0.0
          %1563 = vmatpush1.msra.mxu0 %v1548
          %1564 = vmatprep.subr.mxu0 0.0
          %1565 = vmatpush1.msra.mxu0 %v1553
          %1566 = vmatprep.subr.mxu0 0.0
          %1567 = vmatpush1.msra.mxu0 0.0
          %1568 = vmatprep.subr.mxu0 0.0
          %1569 = vmatpush1.msra.mxu0 0.0
          %1570 = vmatprep.subr.mxu0 0.0
          %1571 = vmatpush1.msra.mxu0 0.0
          %1572 = vmatprep.subr.mxu0 0.0
          %1573 = vmatpush1.msra.mxu0 0.0
          %1574 = vmatprep.subr.mxu0 0.0
          %1575 = vmatpush1.msra.mxu0 0.0
          %1576 = vmatprep.subr.mxu0 0.0
          %1577 = vmatpush1.msra.mxu0 0.0
          %1578 = vmatprep.subr.mxu0 0.0
          %1579 = vmatpush1.msra.mxu0 0.0
          %1580 = vmatprep.subr.mxu0 0.0
          %1581 = vmatpush1.msra.mxu0 0.0
          %1582 = vmatprep.subr.mxu0 0.0
          %1583 = vmatpush1.msra.mxu0 0.0
          %1584 = vmatprep.subr.mxu0 0.0
          %1585 = vmatpush1.msra.mxu0 0.0
          %1586 = vmatprep.subr.mxu0 0.0
          %1587 = vmatpush1.msra.mxu0 0.0
          %1588 = vmatprep.subr.mxu0 0.0
          %1589 = vmatpush1.msra.mxu0 0.0
          %1590 = vmatprep.subr.mxu0 0.0
          %1591 = vmatpush1.msra.mxu0 0.0
          %1592 = vmatprep.subr.mxu0 0.0
          %1593 = vmatpush1.msra.mxu0 0.0
          %1594 = vmatprep.subr.mxu0 0.0
          %1595 = vmatpush1.msra.mxu0 0.0
          %1596 = vmatprep.subr.mxu0 0.0
          %1597 = vmatpush1.msra.mxu0 0.0
          %1598 = vmatprep.subr.mxu0 0.0
          %1599 = vmatpush1.msra.mxu0 0.0
          %1600 = vmatprep.subr.mxu0 0.0
          %1601 = vmatpush1.msra.mxu0 0.0
          %1602 = vmatprep.subr.mxu0 0.0
          %1603 = vmatpush1.msra.mxu0 0.0
          %1604 = vmatprep.subr.mxu0 0.0
          %1605 = vmatpush1.msra.mxu0 0.0
          %1606 = vmatprep.subr.mxu0 0.0
          %1607 = vmatpush1.msra.mxu0 0.0
          %1608 = vmatprep.subr.mxu0 0.0
          %1609 = vmatpush1.msra.mxu0 0.0
          %1610 = vmatprep.subr.mxu0 0.0
          %1611 = vmatpush1.msra.mxu0 0.0
          %1612 = vmatprep.subr.mxu0 0.0
          %1613 = vmatpush1.msra.mxu0 0.0
          %1614 = vmatprep.subr.mxu0 0.0
          %1615 = vmatpush1.msra.mxu0 0.0
          %1616 = vmatprep.subr.mxu0 0.0
          %1617 = vmatpush1.msra.mxu0 0.0
          %1618 = vmatprep.subr.mxu0 0.0
          %1619 = vmatpush1.msra.mxu0 0.0
          %1620 = vmatprep.subr.mxu0 0.0
          %1621 = vmatpush1.msra.mxu0 0.0
          %1622 = vmatprep.subr.mxu0 0.0
          %1623 = vmatpush1.msra.mxu0 0.0
          %1624 = vmatprep.subr.mxu0 0.0
          %1625 = vmatpush1.msra.mxu0 0.0
          %1626 = vmatprep.mubr.f32.mxu0 0.0
          %1627 = vmatmul.mubr.f32.gmra.mrb[0].mxu0 %v1557
          %v1628 = vpop.f32.mrb[0].mxu0
          %v1629 = vadd.f32 0.0, %v1628
          %v1630 = vpop.f32.mrb[0].mxu0
          %1631 = vmatprep.mubr.f32.mxu0 0.0
          %1632 = vmatmul.mubr.f32.gmra.mrb[0].mxu0 %v1560
          %v1633 = vpop.f32.mrb[0].mxu0
          %v1634 = vadd.f32 0.0, %v1633
          %v1635 = vpop.f32.mrb[0].mxu0
          %1636 = vdwg.mxu0
          %v1637 = vadd.f32 %v1320, %v1629
          %v1638 = vadd.f32 %v1321, %v1634
          %s1639 = sld [smem:[#allocation5 + $0x1c]]
          %v1640 = vstv %s1639
          %v1641 = vmul.f32 %v1640, %v274
          %v1642 = vmul.f32 %v1640, %v275
          %v1643 = vadd.f32 %v1641, 0.0
          %v1644 = vadd.f32 %v1642, 0.0
          %s1645 = sld [smem:[#allocation5 + $0x1d]]
          %v1646 = vstv %s1645
          %v1647 = vmul.f32 %v1646, %v280
          %v1648 = vmul.f32 %v1646, %v281
          %v1649 = vadd.f32 %v1643, %v1647
          %v1650 = vadd.f32 %v1644, %v1648
          %s1651 = sld [smem:[#allocation5 + $0x1e]]
          %v1652 = vstv %s1651
          %v1653 = vmul.f32 %v1652, %v286
          %v1654 = vmul.f32 %v1652, %v287
          %v1655 = vadd.f32 %v1649, %v1653
          %v1656 = vadd.f32 %v1650, %v1654
          %s1657 = sld [smem:[#allocation5 + $0x1f]]
          %v1658 = vstv %s1657
          %v1659 = vmul.f32 %v1658, %v292
          %v1660 = vmul.f32 %v1658, %v293
          %v1661 = vadd.f32 %v1655, %v1659
          %v1662 = vadd.f32 %v1656, %v1660
          %s1663 = sld [smem:[#allocation5 + $0x20]]
          %v1664 = vstv %s1663
          %v1665 = vmul.f32 %v1664, %v298
          %v1666 = vmul.f32 %v1664, %v299
          %v1667 = vadd.f32 %v1661, %v1665
          %v1668 = vadd.f32 %v1662, %v1666
          %s1669 = sld [smem:[#allocation5 + $0x21]]
          %v1670 = vstv %s1669
          %v1671 = vmul.f32 %v1670, %v304
          %v1672 = vmul.f32 %v1670, %v305
          %v1673 = vadd.f32 %v1667, %v1671
          %v1674 = vadd.f32 %v1668, %v1672
          %s1675 = sld [smem:[#allocation5 + $0x22]]
          %v1676 = vstv %s1675
          %v1677 = vmul.f32 %v1676, %v310
          %v1678 = vmul.f32 %v1676, %v311
          %v1679 = vadd.f32 %v1673, %v1677
          %v1680 = vadd.f32 %v1674, %v1678
          %s1681 = sld [smem:[#allocation5 + $0x4d]]
          %v1682 = vstv %s1681
          %v1683 = vmul.f32 %v1682, %v274
          %v1684 = vmul.f32 %v1682, %v275
          %v1685 = vadd.f32 %v1683, 0.0
          %v1686 = vadd.f32 %v1684, 0.0
          %s1687 = sld [smem:[#allocation5 + $0x4e]]
          %v1688 = vstv %s1687
          %v1689 = vmul.f32 %v1688, %v280
          %v1690 = vmul.f32 %v1688, %v281
          %v1691 = vadd.f32 %v1685, %v1689
          %v1692 = vadd.f32 %v1686, %v1690
          %s1693 = sld [smem:[#allocation5 + $0x4f]]
          %v1694 = vstv %s1693
          %v1695 = vmul.f32 %v1694, %v286
          %v1696 = vmul.f32 %v1694, %v287
          %v1697 = vadd.f32 %v1691, %v1695
          %v1698 = vadd.f32 %v1692, %v1696
          %s1699 = sld [smem:[#allocation5 + $0x50]]
          %v1700 = vstv %s1699
          %v1701 = vmul.f32 %v1700, %v292
          %v1702 = vmul.f32 %v1700, %v293
          %v1703 = vadd.f32 %v1697, %v1701
          %v1704 = vadd.f32 %v1698, %v1702
          %s1705 = sld [smem:[#allocation5 + $0x51]]
          %v1706 = vstv %s1705
          %v1707 = vmul.f32 %v1706, %v298
          %v1708 = vmul.f32 %v1706, %v299
          %v1709 = vadd.f32 %v1703, %v1707
          %v1710 = vadd.f32 %v1704, %v1708
          %s1711 = sld [smem:[#allocation5 + $0x52]]
          %v1712 = vstv %s1711
          %v1713 = vmul.f32 %v1712, %v304
          %v1714 = vmul.f32 %v1712, %v305
          %v1715 = vadd.f32 %v1709, %v1713
          %v1716 = vadd.f32 %v1710, %v1714
          %s1717 = sld [smem:[#allocation5 + $0x53]]
          %v1718 = vstv %s1717
          %v1719 = vmul.f32 %v1718, %v310
          %v1720 = vmul.f32 %v1718, %v311
          %v1721 = vadd.f32 %v1715, %v1719
          %v1722 = vadd.f32 %v1716, %v1720
          %1723 = vmatprep.subr.mxu0 0.0
          %1724 = vmatpush1.msra.mxu0 %v1721
          %1725 = vmatprep.subr.mxu0 0.0
          %1726 = vmatpush1.msra.mxu0 %v1722
          %1727 = vmatprep.subr.mxu0 0.0
          %1728 = vmatpush1.msra.mxu0 0.0
          %1729 = vmatprep.subr.mxu0 0.0
          %1730 = vmatpush1.msra.mxu0 0.0
          %1731 = vmatprep.subr.mxu0 0.0
          %1732 = vmatpush1.msra.mxu0 0.0
          %1733 = vmatprep.subr.mxu0 0.0
          %1734 = vmatpush1.msra.mxu0 0.0
          %1735 = vmatprep.subr.mxu0 0.0
          %1736 = vmatpush1.msra.mxu0 0.0
          %1737 = vmatprep.subr.mxu0 0.0
          %1738 = vmatpush1.msra.mxu0 0.0
          %1739 = vmatprep.subr.mxu0 0.0
          %1740 = vmatpush1.msra.mxu0 0.0
          %1741 = vmatprep.subr.mxu0 0.0
          %1742 = vmatpush1.msra.mxu0 0.0
          %1743 = vmatprep.subr.mxu0 0.0
          %1744 = vmatpush1.msra.mxu0 0.0
          %1745 = vmatprep.subr.mxu0 0.0
          %1746 = vmatpush1.msra.mxu0 0.0
          %1747 = vmatprep.subr.mxu0 0.0
          %1748 = vmatpush1.msra.mxu0 0.0
          %1749 = vmatprep.subr.mxu0 0.0
          %1750 = vmatpush1.msra.mxu0 0.0
          %1751 = vmatprep.subr.mxu0 0.0
          %1752 = vmatpush1.msra.mxu0 0.0
          %1753 = vmatprep.subr.mxu0 0.0
          %1754 = vmatpush1.msra.mxu0 0.0
          %1755 = vmatprep.subr.mxu0 0.0
          %1756 = vmatpush1.msra.mxu0 0.0
          %1757 = vmatprep.subr.mxu0 0.0
          %1758 = vmatpush1.msra.mxu0 0.0
          %1759 = vmatprep.subr.mxu0 0.0
          %1760 = vmatpush1.msra.mxu0 0.0
          %1761 = vmatprep.subr.mxu0 0.0
          %1762 = vmatpush1.msra.mxu0 0.0
          %1763 = vmatprep.subr.mxu0 0.0
          %1764 = vmatpush1.msra.mxu0 0.0
          %1765 = vmatprep.subr.mxu0 0.0
          %1766 = vmatpush1.msra.mxu0 0.0
          %1767 = vmatprep.subr.mxu0 0.0
          %1768 = vmatpush1.msra.mxu0 0.0
          %1769 = vmatprep.subr.mxu0 0.0
          %1770 = vmatpush1.msra.mxu0 0.0
          %1771 = vmatprep.subr.mxu0 0.0
          %1772 = vmatpush1.msra.mxu0 0.0
          %1773 = vmatprep.subr.mxu0 0.0
          %1774 = vmatpush1.msra.mxu0 0.0
          %1775 = vmatprep.subr.mxu0 0.0
          %1776 = vmatpush1.msra.mxu0 0.0
          %1777 = vmatprep.subr.mxu0 0.0
          %1778 = vmatpush1.msra.mxu0 0.0
          %1779 = vmatprep.subr.mxu0 0.0
          %1780 = vmatpush1.msra.mxu0 0.0
          %1781 = vmatprep.subr.mxu0 0.0
          %1782 = vmatpush1.msra.mxu0 0.0
          %1783 = vmatprep.subr.mxu0 0.0
          %1784 = vmatpush1.msra.mxu0 0.0
          %1785 = vmatprep.subr.mxu0 0.0
          %1786 = vmatpush1.msra.mxu0 0.0
          %1787 = vmatprep.mubr.f32.mxu0 0.0
          %1788 = vmatmul.mubr.f32.gmra.mrb[0].mxu0 %v444
          %v1789 = vpop.f32.mrb[0].mxu0
          %v1790 = vadd.f32 0.0, %v1789
          %v1791 = vpop.f32.mrb[0].mxu0
          %1792 = vmatprep.mubr.f32.mxu0 0.0
          %1793 = vmatmul.mubr.f32.gmra.mrb[0].mxu0 %v447
          %v1794 = vpop.f32.mrb[0].mxu0
          %v1795 = vadd.f32 0.0, %v1794
          %v1796 = vpop.f32.mrb[0].mxu0
          %1797 = vdwg.mxu0
          %1798 = vmatprep.subr.mxu0 0.0
          %1799 = vmatpush1.msra.mxu0 %v1679
          %1800 = vmatprep.subr.mxu0 0.0
          %1801 = vmatpush1.msra.mxu0 %v1680
          %1802 = vmatprep.subr.mxu0 0.0
          %1803 = vmatpush1.msra.mxu0 0.0
          %1804 = vmatprep.subr.mxu0 0.0
          %1805 = vmatpush1.msra.mxu0 0.0
          %1806 = vmatprep.subr.mxu0 0.0
          %1807 = vmatpush1.msra.mxu0 0.0
          %1808 = vmatprep.subr.mxu0 0.0
          %1809 = vmatpush1.msra.mxu0 0.0
          %1810 = vmatprep.subr.mxu0 0.0
          %1811 = vmatpush1.msra.mxu0 0.0
          %1812 = vmatprep.subr.mxu0 0.0
          %1813 = vmatpush1.msra.mxu0 0.0
          %1814 = vmatprep.subr.mxu0 0.0
          %1815 = vmatpush1.msra.mxu0 0.0
          %1816 = vmatprep.subr.mxu0 0.0
          %1817 = vmatpush1.msra.mxu0 0.0
          %1818 = vmatprep.subr.mxu0 0.0
          %1819 = vmatpush1.msra.mxu0 0.0
          %1820 = vmatprep.subr.mxu0 0.0
          %1821 = vmatpush1.msra.mxu0 0.0
          %1822 = vmatprep.subr.mxu0 0.0
          %1823 = vmatpush1.msra.mxu0 0.0
          %1824 = vmatprep.subr.mxu0 0.0
          %1825 = vmatpush1.msra.mxu0 0.0
          %1826 = vmatprep.subr.mxu0 0.0
          %1827 = vmatpush1.msra.mxu0 0.0
          %1828 = vmatprep.subr.mxu0 0.0
          %1829 = vmatpush1.msra.mxu0 0.0
          %1830 = vmatprep.subr.mxu0 0.0
          %1831 = vmatpush1.msra.mxu0 0.0
          %1832 = vmatprep.subr.mxu0 0.0
          %1833 = vmatpush1.msra.mxu0 0.0
          %1834 = vmatprep.subr.mxu0 0.0
          %1835 = vmatpush1.msra.mxu0 0.0
          %1836 = vmatprep.subr.mxu0 0.0
          %1837 = vmatpush1.msra.mxu0 0.0
          %1838 = vmatprep.subr.mxu0 0.0
          %1839 = vmatpush1.msra.mxu0 0.0
          %1840 = vmatprep.subr.mxu0 0.0
          %1841 = vmatpush1.msra.mxu0 0.0
          %1842 = vmatprep.subr.mxu0 0.0
          %1843 = vmatpush1.msra.mxu0 0.0
          %1844 = vmatprep.subr.mxu0 0.0
          %1845 = vmatpush1.msra.mxu0 0.0
          %1846 = vmatprep.subr.mxu0 0.0
          %1847 = vmatpush1.msra.mxu0 0.0
          %1848 = vmatprep.subr.mxu0 0.0
          %1849 = vmatpush1.msra.mxu0 0.0
          %1850 = vmatprep.subr.mxu0 0.0
          %1851 = vmatpush1.msra.mxu0 0.0
          %1852 = vmatprep.subr.mxu0 0.0
          %1853 = vmatpush1.msra.mxu0 0.0
          %1854 = vmatprep.subr.mxu0 0.0
          %1855 = vmatpush1.msra.mxu0 0.0
          %1856 = vmatprep.subr.mxu0 0.0
          %1857 = vmatpush1.msra.mxu0 0.0
          %1858 = vmatprep.subr.mxu0 0.0
          %1859 = vmatpush1.msra.mxu0 0.0
          %1860 = vmatprep.subr.mxu0 0.0
          %1861 = vmatpush1.msra.mxu0 0.0
          %1862 = vmatprep.mubr.f32.mxu0 0.0
          %1863 = vmatmul.mubr.f32.gmra.mrb[0].mxu0 %v525
          %v1864 = vpop.f32.mrb[0].mxu0
          %v1865 = vadd.f32 %v1790, %v1864
          %v1866 = vpop.f32.mrb[0].mxu0
          %1867 = vmatprep.mubr.f32.mxu0 0.0
          %1868 = vmatmul.mubr.f32.gmra.mrb[0].mxu0 %v528
          %v1869 = vpop.f32.mrb[0].mxu0
          %v1870 = vadd.f32 %v1795, %v1869
          %v1871 = vpop.f32.mrb[0].mxu0
          %1872 = vdwg.mxu0
          %v1874 = vsel %vm248, %v342, 0
          %v1877 = vsel %vm248, %v343, 0
          %1879 = vmatprep.subr.mxu0 0.0
          %1880 = vmatpush1.msra.mxu0 %v1865
          %1881 = vmatprep.subr.mxu0 0.0
          %1882 = vmatpush1.msra.mxu0 %v1870
          %1883 = vmatprep.subr.mxu0 0.0
          %1884 = vmatpush1.msra.mxu0 0.0
          %1885 = vmatprep.subr.mxu0 0.0
          %1886 = vmatpush1.msra.mxu0 0.0
          %1887 = vmatprep.subr.mxu0 0.0
          %1888 = vmatpush1.msra.mxu0 0.0
          %1889 = vmatprep.subr.mxu0 0.0
          %1890 = vmatpush1.msra.mxu0 0.0
          %1891 = vmatprep.subr.mxu0 0.0
          %1892 = vmatpush1.msra.mxu0 0.0
          %1893 = vmatprep.subr.mxu0 0.0
          %1894 = vmatpush1.msra.mxu0 0.0
          %1895 = vmatprep.subr.mxu0 0.0
          %1896 = vmatpush1.msra.mxu0 0.0
          %1897 = vmatprep.subr.mxu0 0.0
          %1898 = vmatpush1.msra.mxu0 0.0
          %1899 = vmatprep.subr.mxu0 0.0
          %1900 = vmatpush1.msra.mxu0 0.0
          %1901 = vmatprep.subr.mxu0 0.0
          %1902 = vmatpush1.msra.mxu0 0.0
          %1903 = vmatprep.subr.mxu0 0.0
          %1904 = vmatpush1.msra.mxu0 0.0
          %1905 = vmatprep.subr.mxu0 0.0
          %1906 = vmatpush1.msra.mxu0 0.0
          %1907 = vmatprep.subr.mxu0 0.0
          %1908 = vmatpush1.msra.mxu0 0.0
          %1909 = vmatprep.subr.mxu0 0.0
          %1910 = vmatpush1.msra.mxu0 0.0
          %1911 = vmatprep.subr.mxu0 0.0
          %1912 = vmatpush1.msra.mxu0 0.0
          %1913 = vmatprep.subr.mxu0 0.0
          %1914 = vmatpush1.msra.mxu0 0.0
          %1915 = vmatprep.subr.mxu0 0.0
          %1916 = vmatpush1.msra.mxu0 0.0
          %1917 = vmatprep.subr.mxu0 0.0
          %1918 = vmatpush1.msra.mxu0 0.0
          %1919 = vmatprep.subr.mxu0 0.0
          %1920 = vmatpush1.msra.mxu0 0.0
          %1921 = vmatprep.subr.mxu0 0.0
          %1922 = vmatpush1.msra.mxu0 0.0
          %1923 = vmatprep.subr.mxu0 0.0
          %1924 = vmatpush1.msra.mxu0 0.0
          %1925 = vmatprep.subr.mxu0 0.0
          %1926 = vmatpush1.msra.mxu0 0.0
          %1927 = vmatprep.subr.mxu0 0.0
          %1928 = vmatpush1.msra.mxu0 0.0
          %1929 = vmatprep.subr.mxu0 0.0
          %1930 = vmatpush1.msra.mxu0 0.0
          %1931 = vmatprep.subr.mxu0 0.0
          %1932 = vmatpush1.msra.mxu0 0.0
          %1933 = vmatprep.subr.mxu0 0.0
          %1934 = vmatpush1.msra.mxu0 0.0
          %1935 = vmatprep.subr.mxu0 0.0
          %1936 = vmatpush1.msra.mxu0 0.0
          %1937 = vmatprep.subr.mxu0 0.0
          %1938 = vmatpush1.msra.mxu0 0.0
          %1939 = vmatprep.subr.mxu0 0.0
          %1940 = vmatpush1.msra.mxu0 0.0
          %1941 = vmatprep.subr.mxu0 0.0
          %1942 = vmatpush1.msra.mxu0 0.0
          %1943 = vmatprep.mubr.f32.mxu0 0.0
          %1944 = vmatmul.mubr.f32.gmra.mrb[0].mxu0 %v1874
          %v1945 = vpop.f32.mrb[0].mxu0
          %v1946 = vadd.f32 0.0, %v1945
          %v1947 = vpop.f32.mrb[0].mxu0
          %1948 = vmatprep.mubr.f32.mxu0 0.0
          %1949 = vmatmul.mubr.f32.gmra.mrb[0].mxu0 %v1877
          %v1950 = vpop.f32.mrb[0].mxu0
          %v1951 = vadd.f32 0.0, %v1950
          %v1952 = vpop.f32.mrb[0].mxu0
          %1953 = vdwg.mxu0
          %v1954 = vadd.f32 %v1637, %v1946
          %v1955 = vadd.f32 %v1638, %v1951
          %s1956 = sld [smem:[#allocation5 + $0x23]]
          %v1957 = vstv %s1956
          %v1958 = vmul.f32 %v1957, %v274
          %v1959 = vmul.f32 %v1957, %v275
          %v1960 = vadd.f32 %v1958, 0.0
          %v1961 = vadd.f32 %v1959, 0.0
          %s1962 = sld [smem:[#allocation5 + $0x24]]
          %v1963 = vstv %s1962
          %v1964 = vmul.f32 %v1963, %v280
          %v1965 = vmul.f32 %v1963, %v281
          %v1966 = vadd.f32 %v1960, %v1964
          %v1967 = vadd.f32 %v1961, %v1965
          %s1968 = sld [smem:[#allocation5 + $0x25]]
          %v1969 = vstv %s1968
          %v1970 = vmul.f32 %v1969, %v286
          %v1971 = vmul.f32 %v1969, %v287
          %v1972 = vadd.f32 %v1966, %v1970
          %v1973 = vadd.f32 %v1967, %v1971
          %s1974 = sld [smem:[#allocation5 + $0x26]]
          %v1975 = vstv %s1974
          %v1976 = vmul.f32 %v1975, %v292
          %v1977 = vmul.f32 %v1975, %v293
          %v1978 = vadd.f32 %v1972, %v1976
          %v1979 = vadd.f32 %v1973, %v1977
          %s1980 = sld [smem:[#allocation5 + $0x27]]
          %v1981 = vstv %s1980
          %v1982 = vmul.f32 %v1981, %v298
          %v1983 = vmul.f32 %v1981, %v299
          %v1984 = vadd.f32 %v1978, %v1982
          %v1985 = vadd.f32 %v1979, %v1983
          %s1986 = sld [smem:[#allocation5 + $0x28]]
          %v1987 = vstv %s1986
          %v1988 = vmul.f32 %v1987, %v304
          %v1989 = vmul.f32 %v1987, %v305
          %v1990 = vadd.f32 %v1984, %v1988
          %v1991 = vadd.f32 %v1985, %v1989
          %s1992 = sld [smem:[#allocation5 + $0x29]]
          %v1993 = vstv %s1992
          %v1994 = vmul.f32 %v1993, %v310
          %v1995 = vmul.f32 %v1993, %v311
          %v1996 = vadd.f32 %v1990, %v1994
          %v1997 = vadd.f32 %v1991, %v1995
          %s1998 = sld [smem:[#allocation5 + $0x54]]
          %v1999 = vstv %s1998
          %v2000 = vmul.f32 %v1999, %v274
          %v2001 = vmul.f32 %v1999, %v275
          %v2002 = vadd.f32 %v2000, 0.0
          %v2003 = vadd.f32 %v2001, 0.0
          %s2004 = sld [smem:[#allocation5 + $0x55]]
          %v2005 = vstv %s2004
          %v2006 = vmul.f32 %v2005, %v280
          %v2007 = vmul.f32 %v2005, %v281
          %v2008 = vadd.f32 %v2002, %v2006
          %v2009 = vadd.f32 %v2003, %v2007
          %s2010 = sld [smem:[#allocation5 + $0x56]]
          %v2011 = vstv %s2010
          %v2012 = vmul.f32 %v2011, %v286
          %v2013 = vmul.f32 %v2011, %v287
          %v2014 = vadd.f32 %v2008, %v2012
          %v2015 = vadd.f32 %v2009, %v2013
          %s2016 = sld [smem:[#allocation5 + $0x57]]
          %v2017 = vstv %s2016
          %v2018 = vmul.f32 %v2017, %v292
          %v2019 = vmul.f32 %v2017, %v293
          %v2020 = vadd.f32 %v2014, %v2018
          %v2021 = vadd.f32 %v2015, %v2019
          %s2022 = sld [smem:[#allocation5 + $0x58]]
          %v2023 = vstv %s2022
          %v2024 = vmul.f32 %v2023, %v298
          %v2025 = vmul.f32 %v2023, %v299
          %v2026 = vadd.f32 %v2020, %v2024
          %v2027 = vadd.f32 %v2021, %v2025
          %s2028 = sld [smem:[#allocation5 + $0x59]]
          %v2029 = vstv %s2028
          %v2030 = vmul.f32 %v2029, %v304
          %v2031 = vmul.f32 %v2029, %v305
          %v2032 = vadd.f32 %v2026, %v2030
          %v2033 = vadd.f32 %v2027, %v2031
          %s2034 = sld [smem:[#allocation5 + $0x5a]]
          %v2035 = vstv %s2034
          %v2036 = vmul.f32 %v2035, %v310
          %v2037 = vmul.f32 %v2035, %v311
          %v2038 = vadd.f32 %v2032, %v2036
          %v2039 = vadd.f32 %v2033, %v2037
          %2040 = vmatprep.subr.mxu0 0.0
          %2041 = vmatpush1.msra.mxu0 %v2038
          %2042 = vmatprep.subr.mxu0 0.0
          %2043 = vmatpush1.msra.mxu0 %v2039
          %2044 = vmatprep.subr.mxu0 0.0
          %2045 = vmatpush1.msra.mxu0 0.0
          %2046 = vmatprep.subr.mxu0 0.0
          %2047 = vmatpush1.msra.mxu0 0.0
          %2048 = vmatprep.subr.mxu0 0.0
          %2049 = vmatpush1.msra.mxu0 0.0
          %2050 = vmatprep.subr.mxu0 0.0
          %2051 = vmatpush1.msra.mxu0 0.0
          %2052 = vmatprep.subr.mxu0 0.0
          %2053 = vmatpush1.msra.mxu0 0.0
          %2054 = vmatprep.subr.mxu0 0.0
          %2055 = vmatpush1.msra.mxu0 0.0
          %2056 = vmatprep.subr.mxu0 0.0
          %2057 = vmatpush1.msra.mxu0 0.0
          %2058 = vmatprep.subr.mxu0 0.0
          %2059 = vmatpush1.msra.mxu0 0.0
          %2060 = vmatprep.subr.mxu0 0.0
          %2061 = vmatpush1.msra.mxu0 0.0
          %2062 = vmatprep.subr.mxu0 0.0
          %2063 = vmatpush1.msra.mxu0 0.0
          %2064 = vmatprep.subr.mxu0 0.0
          %2065 = vmatpush1.msra.mxu0 0.0
          %2066 = vmatprep.subr.mxu0 0.0
          %2067 = vmatpush1.msra.mxu0 0.0
          %2068 = vmatprep.subr.mxu0 0.0
          %2069 = vmatpush1.msra.mxu0 0.0
          %2070 = vmatprep.subr.mxu0 0.0
          %2071 = vmatpush1.msra.mxu0 0.0
          %2072 = vmatprep.subr.mxu0 0.0
          %2073 = vmatpush1.msra.mxu0 0.0
          %2074 = vmatprep.subr.mxu0 0.0
          %2075 = vmatpush1.msra.mxu0 0.0
          %2076 = vmatprep.subr.mxu0 0.0
          %2077 = vmatpush1.msra.mxu0 0.0
          %2078 = vmatprep.subr.mxu0 0.0
          %2079 = vmatpush1.msra.mxu0 0.0
          %2080 = vmatprep.subr.mxu0 0.0
          %2081 = vmatpush1.msra.mxu0 0.0
          %2082 = vmatprep.subr.mxu0 0.0
          %2083 = vmatpush1.msra.mxu0 0.0
          %2084 = vmatprep.subr.mxu0 0.0
          %2085 = vmatpush1.msra.mxu0 0.0
          %2086 = vmatprep.subr.mxu0 0.0
          %2087 = vmatpush1.msra.mxu0 0.0
          %2088 = vmatprep.subr.mxu0 0.0
          %2089 = vmatpush1.msra.mxu0 0.0
          %2090 = vmatprep.subr.mxu0 0.0
          %2091 = vmatpush1.msra.mxu0 0.0
          %2092 = vmatprep.subr.mxu0 0.0
          %2093 = vmatpush1.msra.mxu0 0.0
          %2094 = vmatprep.subr.mxu0 0.0
          %2095 = vmatpush1.msra.mxu0 0.0
          %2096 = vmatprep.subr.mxu0 0.0
          %2097 = vmatpush1.msra.mxu0 0.0
          %2098 = vmatprep.subr.mxu0 0.0
          %2099 = vmatpush1.msra.mxu0 0.0
          %2100 = vmatprep.subr.mxu0 0.0
          %2101 = vmatpush1.msra.mxu0 0.0
          %2102 = vmatprep.subr.mxu0 0.0
          %2103 = vmatpush1.msra.mxu0 0.0
          %2104 = vmatprep.mubr.f32.mxu0 0.0
          %2105 = vmatmul.mubr.f32.gmra.mrb[0].mxu0 %v444
          %v2106 = vpop.f32.mrb[0].mxu0
          %v2107 = vadd.f32 0.0, %v2106
          %v2108 = vpop.f32.mrb[0].mxu0
          %2109 = vmatprep.mubr.f32.mxu0 0.0
          %2110 = vmatmul.mubr.f32.gmra.mrb[0].mxu0 %v447
          %v2111 = vpop.f32.mrb[0].mxu0
          %v2112 = vadd.f32 0.0, %v2111
          %v2113 = vpop.f32.mrb[0].mxu0
          %2114 = vdwg.mxu0
          %2115 = vmatprep.subr.mxu0 0.0
          %2116 = vmatpush1.msra.mxu0 %v1996
          %2117 = vmatprep.subr.mxu0 0.0
          %2118 = vmatpush1.msra.mxu0 %v1997
          %2119 = vmatprep.subr.mxu0 0.0
          %2120 = vmatpush1.msra.mxu0 0.0
          %2121 = vmatprep.subr.mxu0 0.0
          %2122 = vmatpush1.msra.mxu0 0.0
          %2123 = vmatprep.subr.mxu0 0.0
          %2124 = vmatpush1.msra.mxu0 0.0
          %2125 = vmatprep.subr.mxu0 0.0
          %2126 = vmatpush1.msra.mxu0 0.0
          %2127 = vmatprep.subr.mxu0 0.0
          %2128 = vmatpush1.msra.mxu0 0.0
          %2129 = vmatprep.subr.mxu0 0.0
          %2130 = vmatpush1.msra.mxu0 0.0
          %2131 = vmatprep.subr.mxu0 0.0
          %2132 = vmatpush1.msra.mxu0 0.0
          %2133 = vmatprep.subr.mxu0 0.0
          %2134 = vmatpush1.msra.mxu0 0.0
          %2135 = vmatprep.subr.mxu0 0.0
          %2136 = vmatpush1.msra.mxu0 0.0
          %2137 = vmatprep.subr.mxu0 0.0
          %2138 = vmatpush1.msra.mxu0 0.0
          %2139 = vmatprep.subr.mxu0 0.0
          %2140 = vmatpush1.msra.mxu0 0.0
          %2141 = vmatprep.subr.mxu0 0.0
          %2142 = vmatpush1.msra.mxu0 0.0
          %2143 = vmatprep.subr.mxu0 0.0
          %2144 = vmatpush1.msra.mxu0 0.0
          %2145 = vmatprep.subr.mxu0 0.0
          %2146 = vmatpush1.msra.mxu0 0.0
          %2147 = vmatprep.subr.mxu0 0.0
          %2148 = vmatpush1.msra.mxu0 0.0
          %2149 = vmatprep.subr.mxu0 0.0
          %2150 = vmatpush1.msra.mxu0 0.0
          %2151 = vmatprep.subr.mxu0 0.0
          %2152 = vmatpush1.msra.mxu0 0.0
          %2153 = vmatprep.subr.mxu0 0.0
          %2154 = vmatpush1.msra.mxu0 0.0
          %2155 = vmatprep.subr.mxu0 0.0
          %2156 = vmatpush1.msra.mxu0 0.0
          %2157 = vmatprep.subr.mxu0 0.0
          %2158 = vmatpush1.msra.mxu0 0.0
          %2159 = vmatprep.subr.mxu0 0.0
          %2160 = vmatpush1.msra.mxu0 0.0
          %2161 = vmatprep.subr.mxu0 0.0
          %2162 = vmatpush1.msra.mxu0 0.0
          %2163 = vmatprep.subr.mxu0 0.0
          %2164 = vmatpush1.msra.mxu0 0.0
          %2165 = vmatprep.subr.mxu0 0.0
          %2166 = vmatpush1.msra.mxu0 0.0
          %2167 = vmatprep.subr.mxu0 0.0
          %2168 = vmatpush1.msra.mxu0 0.0
          %2169 = vmatprep.subr.mxu0 0.0
          %2170 = vmatpush1.msra.mxu0 0.0
          %2171 = vmatprep.subr.mxu0 0.0
          %2172 = vmatpush1.msra.mxu0 0.0
          %2173 = vmatprep.subr.mxu0 0.0
          %2174 = vmatpush1.msra.mxu0 0.0
          %2175 = vmatprep.subr.mxu0 0.0
          %2176 = vmatpush1.msra.mxu0 0.0
          %2177 = vmatprep.subr.mxu0 0.0
          %2178 = vmatpush1.msra.mxu0 0.0
          %2179 = vmatprep.mubr.f32.mxu0 0.0
          %2180 = vmatmul.mubr.f32.gmra.mrb[0].mxu0 %v525
          %v2181 = vpop.f32.mrb[0].mxu0
          %v2182 = vadd.f32 %v2107, %v2181
          %v2183 = vpop.f32.mrb[0].mxu0
          %2184 = vmatprep.mubr.f32.mxu0 0.0
          %2185 = vmatmul.mubr.f32.gmra.mrb[0].mxu0 %v528
          %v2186 = vpop.f32.mrb[0].mxu0
          %v2187 = vadd.f32 %v2112, %v2186
          %v2188 = vpop.f32.mrb[0].mxu0
          %2189 = vdwg.mxu0
          %v2191 = vsel %vm248, %v348, 0
          %v2194 = vsel %vm248, %v349, 0
          %2196 = vmatprep.subr.mxu0 0.0
          %2197 = vmatpush1.msra.mxu0 %v2182
          %2198 = vmatprep.subr.mxu0 0.0
          %2199 = vmatpush1.msra.mxu0 %v2187
          %2200 = vmatprep.subr.mxu0 0.0
          %2201 = vmatpush1.msra.mxu0 0.0
          %2202 = vmatprep.subr.mxu0 0.0
          %2203 = vmatpush1.msra.mxu0 0.0
          %2204 = vmatprep.subr.mxu0 0.0
          %2205 = vmatpush1.msra.mxu0 0.0
          %2206 = vmatprep.subr.mxu0 0.0
          %2207 = vmatpush1.msra.mxu0 0.0
          %2208 = vmatprep.subr.mxu0 0.0
          %2209 = vmatpush1.msra.mxu0 0.0
          %2210 = vmatprep.subr.mxu0 0.0
          %2211 = vmatpush1.msra.mxu0 0.0
          %2212 = vmatprep.subr.mxu0 0.0
          %2213 = vmatpush1.msra.mxu0 0.0
          %2214 = vmatprep.subr.mxu0 0.0
          %2215 = vmatpush1.msra.mxu0 0.0
          %2216 = vmatprep.subr.mxu0 0.0
          %2217 = vmatpush1.msra.mxu0 0.0
          %2218 = vmatprep.subr.mxu0 0.0
          %2219 = vmatpush1.msra.mxu0 0.0
          %2220 = vmatprep.subr.mxu0 0.0
          %2221 = vmatpush1.msra.mxu0 0.0
          %2222 = vmatprep.subr.mxu0 0.0
          %2223 = vmatpush1.msra.mxu0 0.0
          %2224 = vmatprep.subr.mxu0 0.0
          %2225 = vmatpush1.msra.mxu0 0.0
          %2226 = vmatprep.subr.mxu0 0.0
          %2227 = vmatpush1.msra.mxu0 0.0
          %2228 = vmatprep.subr.mxu0 0.0
          %2229 = vmatpush1.msra.mxu0 0.0
          %2230 = vmatprep.subr.mxu0 0.0
          %2231 = vmatpush1.msra.mxu0 0.0
          %2232 = vmatprep.subr.mxu0 0.0
          %2233 = vmatpush1.msra.mxu0 0.0
          %2234 = vmatprep.subr.mxu0 0.0
          %2235 = vmatpush1.msra.mxu0 0.0
          %2236 = vmatprep.subr.mxu0 0.0
          %2237 = vmatpush1.msra.mxu0 0.0
          %2238 = vmatprep.subr.mxu0 0.0
          %2239 = vmatpush1.msra.mxu0 0.0
          %2240 = vmatprep.subr.mxu0 0.0
          %2241 = vmatpush1.msra.mxu0 0.0
          %2242 = vmatprep.subr.mxu0 0.0
          %2243 = vmatpush1.msra.mxu0 0.0
          %2244 = vmatprep.subr.mxu0 0.0
          %2245 = vmatpush1.msra.mxu0 0.0
          %2246 = vmatprep.subr.mxu0 0.0
          %2247 = vmatpush1.msra.mxu0 0.0
          %2248 = vmatprep.subr.mxu0 0.0
          %2249 = vmatpush1.msra.mxu0 0.0
          %2250 = vmatprep.subr.mxu0 0.0
          %2251 = vmatpush1.msra.mxu0 0.0
          %2252 = vmatprep.subr.mxu0 0.0
          %2253 = vmatpush1.msra.mxu0 0.0
          %2254 = vmatprep.subr.mxu0 0.0
          %2255 = vmatpush1.msra.mxu0 0.0
          %2256 = vmatprep.subr.mxu0 0.0
          %2257 = vmatpush1.msra.mxu0 0.0
          %2258 = vmatprep.subr.mxu0 0.0
          %2259 = vmatpush1.msra.mxu0 0.0
          %2260 = vmatprep.mubr.f32.mxu0 0.0
          %2261 = vmatmul.mubr.f32.gmra.mrb[0].mxu0 %v2191
          %v2262 = vpop.f32.mrb[0].mxu0
          %v2263 = vadd.f32 0.0, %v2262
          %v2264 = vpop.f32.mrb[0].mxu0
          %2265 = vmatprep.mubr.f32.mxu0 0.0
          %2266 = vmatmul.mubr.f32.gmra.mrb[0].mxu0 %v2194
          %v2267 = vpop.f32.mrb[0].mxu0
          %v2268 = vadd.f32 0.0, %v2267
          %v2269 = vpop.f32.mrb[0].mxu0
          %2270 = vdwg.mxu0
          %v2271 = vadd.f32 %v1954, %v2263
          %v2272 = vadd.f32 %v1955, %v2268
          %s2273 = sld [smem:[#allocation5 + $0x2a]]
          %v2274 = vstv %s2273
          %v2275 = vmul.f32 %v2274, %v274
          %v2276 = vmul.f32 %v2274, %v275
          %v2277 = vadd.f32 %v2275, 0.0
          %v2278 = vadd.f32 %v2276, 0.0
          %s2279 = sld [smem:[#allocation5 + $0x2b]]
          %v2280 = vstv %s2279
          %v2281 = vmul.f32 %v2280, %v280
          %v2282 = vmul.f32 %v2280, %v281
          %v2283 = vadd.f32 %v2277, %v2281
          %v2284 = vadd.f32 %v2278, %v2282
          %s2285 = sld [smem:[#allocation5 + $0x2c]]
          %v2286 = vstv %s2285
          %v2287 = vmul.f32 %v2286, %v286
          %v2288 = vmul.f32 %v2286, %v287
          %v2289 = vadd.f32 %v2283, %v2287
          %v2290 = vadd.f32 %v2284, %v2288
          %s2291 = sld [smem:[#allocation5 + $0x2d]]
          %v2292 = vstv %s2291
          %v2293 = vmul.f32 %v2292, %v292
          %v2294 = vmul.f32 %v2292, %v293
          %v2295 = vadd.f32 %v2289, %v2293
          %v2296 = vadd.f32 %v2290, %v2294
          %s2297 = sld [smem:[#allocation5 + $0x2e]]
          %v2298 = vstv %s2297
          %v2299 = vmul.f32 %v2298, %v298
          %v2300 = vmul.f32 %v2298, %v299
          %v2301 = vadd.f32 %v2295, %v2299
          %v2302 = vadd.f32 %v2296, %v2300
          %s2303 = sld [smem:[#allocation5 + $0x2f]]
          %v2304 = vstv %s2303
          %v2305 = vmul.f32 %v2304, %v304
          %v2306 = vmul.f32 %v2304, %v305
          %v2307 = vadd.f32 %v2301, %v2305
          %v2308 = vadd.f32 %v2302, %v2306
          %s2309 = sld [smem:[#allocation5 + $0x30]]
          %v2310 = vstv %s2309
          %v2311 = vmul.f32 %v2310, %v310
          %v2312 = vmul.f32 %v2310, %v311
          %v2313 = vadd.f32 %v2307, %v2311
          %v2314 = vadd.f32 %v2308, %v2312
          %s2315 = sld [smem:[#allocation5 + $0x5b]]
          %v2316 = vstv %s2315
          %v2317 = vmul.f32 %v2316, %v274
          %v2318 = vmul.f32 %v2316, %v275
          %v2319 = vadd.f32 %v2317, 0.0
          %v2320 = vadd.f32 %v2318, 0.0
          %s2321 = sld [smem:[#allocation5 + $0x5c]]
          %v2322 = vstv %s2321
          %v2323 = vmul.f32 %v2322, %v280
          %v2324 = vmul.f32 %v2322, %v281
          %v2325 = vadd.f32 %v2319, %v2323
          %v2326 = vadd.f32 %v2320, %v2324
          %s2327 = sld [smem:[#allocation5 + $0x5d]]
          %v2328 = vstv %s2327
          %v2329 = vmul.f32 %v2328, %v286
          %v2330 = vmul.f32 %v2328, %v287
          %v2331 = vadd.f32 %v2325, %v2329
          %v2332 = vadd.f32 %v2326, %v2330
          %s2333 = sld [smem:[#allocation5 + $0x5e]]
          %v2334 = vstv %s2333
          %v2335 = vmul.f32 %v2334, %v292
          %v2336 = vmul.f32 %v2334, %v293
          %v2337 = vadd.f32 %v2331, %v2335
          %v2338 = vadd.f32 %v2332, %v2336
          %s2339 = sld [smem:[#allocation5 + $0x5f]]
          %v2340 = vstv %s2339
          %v2341 = vmul.f32 %v2340, %v298
          %v2342 = vmul.f32 %v2340, %v299
          %v2343 = vadd.f32 %v2337, %v2341
          %v2344 = vadd.f32 %v2338, %v2342
          %s2345 = sld [smem:[#allocation5 + $0x60]]
          %v2346 = vstv %s2345
          %v2347 = vmul.f32 %v2346, %v304
          %v2348 = vmul.f32 %v2346, %v305
          %v2349 = vadd.f32 %v2343, %v2347
          %v2350 = vadd.f32 %v2344, %v2348
          %s2351 = sld [smem:[#allocation5 + $0x61]]
          %v2352 = vstv %s2351
          %v2353 = vmul.f32 %v2352, %v310
          %v2354 = vmul.f32 %v2352, %v311
          %v2355 = vadd.f32 %v2349, %v2353
          %v2356 = vadd.f32 %v2350, %v2354
          %2357 = vmatprep.subr.mxu0 0.0
          %2358 = vmatpush1.msra.mxu0 %v2355
          %2359 = vmatprep.subr.mxu0 0.0
          %2360 = vmatpush1.msra.mxu0 %v2356
          %2361 = vmatprep.subr.mxu0 0.0
          %2362 = vmatpush1.msra.mxu0 0.0
          %2363 = vmatprep.subr.mxu0 0.0
          %2364 = vmatpush1.msra.mxu0 0.0
          %2365 = vmatprep.subr.mxu0 0.0
          %2366 = vmatpush1.msra.mxu0 0.0
          %2367 = vmatprep.subr.mxu0 0.0
          %2368 = vmatpush1.msra.mxu0 0.0
          %2369 = vmatprep.subr.mxu0 0.0
          %2370 = vmatpush1.msra.mxu0 0.0
          %2371 = vmatprep.subr.mxu0 0.0
          %2372 = vmatpush1.msra.mxu0 0.0
          %2373 = vmatprep.subr.mxu0 0.0
          %2374 = vmatpush1.msra.mxu0 0.0
          %2375 = vmatprep.subr.mxu0 0.0
          %2376 = vmatpush1.msra.mxu0 0.0
          %2377 = vmatprep.subr.mxu0 0.0
          %2378 = vmatpush1.msra.mxu0 0.0
          %2379 = vmatprep.subr.mxu0 0.0
          %2380 = vmatpush1.msra.mxu0 0.0
          %2381 = vmatprep.subr.mxu0 0.0
          %2382 = vmatpush1.msra.mxu0 0.0
          %2383 = vmatprep.subr.mxu0 0.0
          %2384 = vmatpush1.msra.mxu0 0.0
          %2385 = vmatprep.subr.mxu0 0.0
          %2386 = vmatpush1.msra.mxu0 0.0
          %2387 = vmatprep.subr.mxu0 0.0
          %2388 = vmatpush1.msra.mxu0 0.0
          %2389 = vmatprep.subr.mxu0 0.0
          %2390 = vmatpush1.msra.mxu0 0.0
          %2391 = vmatprep.subr.mxu0 0.0
          %2392 = vmatpush1.msra.mxu0 0.0
          %2393 = vmatprep.subr.mxu0 0.0
          %2394 = vmatpush1.msra.mxu0 0.0
          %2395 = vmatprep.subr.mxu0 0.0
          %2396 = vmatpush1.msra.mxu0 0.0
          %2397 = vmatprep.subr.mxu0 0.0
          %2398 = vmatpush1.msra.mxu0 0.0
          %2399 = vmatprep.subr.mxu0 0.0
          %2400 = vmatpush1.msra.mxu0 0.0
          %2401 = vmatprep.subr.mxu0 0.0
          %2402 = vmatpush1.msra.mxu0 0.0
          %2403 = vmatprep.subr.mxu0 0.0
          %2404 = vmatpush1.msra.mxu0 0.0
          %2405 = vmatprep.subr.mxu0 0.0
          %2406 = vmatpush1.msra.mxu0 0.0
          %2407 = vmatprep.subr.mxu0 0.0
          %2408 = vmatpush1.msra.mxu0 0.0
          %2409 = vmatprep.subr.mxu0 0.0
          %2410 = vmatpush1.msra.mxu0 0.0
          %2411 = vmatprep.subr.mxu0 0.0
          %2412 = vmatpush1.msra.mxu0 0.0
          %2413 = vmatprep.subr.mxu0 0.0
          %2414 = vmatpush1.msra.mxu0 0.0
          %2415 = vmatprep.subr.mxu0 0.0
          %2416 = vmatpush1.msra.mxu0 0.0
          %2417 = vmatprep.subr.mxu0 0.0
          %2418 = vmatpush1.msra.mxu0 0.0
          %2419 = vmatprep.subr.mxu0 0.0
          %2420 = vmatpush1.msra.mxu0 0.0
          %2421 = vmatprep.mubr.f32.mxu0 0.0
          %2422 = vmatmul.mubr.f32.gmra.mrb[0].mxu0 %v444
          %v2423 = vpop.f32.mrb[0].mxu0
          %v2424 = vadd.f32 0.0, %v2423
          %v2425 = vpop.f32.mrb[0].mxu0
          %2426 = vmatprep.mubr.f32.mxu0 0.0
          %2427 = vmatmul.mubr.f32.gmra.mrb[0].mxu0 %v447
          %v2428 = vpop.f32.mrb[0].mxu0
          %v2429 = vadd.f32 0.0, %v2428
          %v2430 = vpop.f32.mrb[0].mxu0
          %2431 = vdwg.mxu0
          %2432 = vmatprep.subr.mxu0 0.0
          %2433 = vmatpush1.msra.mxu0 %v2313
          %2434 = vmatprep.subr.mxu0 0.0
          %2435 = vmatpush1.msra.mxu0 %v2314
          %2436 = vmatprep.subr.mxu0 0.0
          %2437 = vmatpush1.msra.mxu0 0.0
          %2438 = vmatprep.subr.mxu0 0.0
          %2439 = vmatpush1.msra.mxu0 0.0
          %2440 = vmatprep.subr.mxu0 0.0
          %2441 = vmatpush1.msra.mxu0 0.0
          %2442 = vmatprep.subr.mxu0 0.0
          %2443 = vmatpush1.msra.mxu0 0.0
          %2444 = vmatprep.subr.mxu0 0.0
          %2445 = vmatpush1.msra.mxu0 0.0
          %2446 = vmatprep.subr.mxu0 0.0
          %2447 = vmatpush1.msra.mxu0 0.0
          %2448 = vmatprep.subr.mxu0 0.0
          %2449 = vmatpush1.msra.mxu0 0.0
          %2450 = vmatprep.subr.mxu0 0.0
          %2451 = vmatpush1.msra.mxu0 0.0
          %2452 = vmatprep.subr.mxu0 0.0
          %2453 = vmatpush1.msra.mxu0 0.0
          %2454 = vmatprep.subr.mxu0 0.0
          %2455 = vmatpush1.msra.mxu0 0.0
          %2456 = vmatprep.subr.mxu0 0.0
          %2457 = vmatpush1.msra.mxu0 0.0
          %2458 = vmatprep.subr.mxu0 0.0
          %2459 = vmatpush1.msra.mxu0 0.0
          %2460 = vmatprep.subr.mxu0 0.0
          %2461 = vmatpush1.msra.mxu0 0.0
          %2462 = vmatprep.subr.mxu0 0.0
          %2463 = vmatpush1.msra.mxu0 0.0
          %2464 = vmatprep.subr.mxu0 0.0
          %2465 = vmatpush1.msra.mxu0 0.0
          %2466 = vmatprep.subr.mxu0 0.0
          %2467 = vmatpush1.msra.mxu0 0.0
          %2468 = vmatprep.subr.mxu0 0.0
          %2469 = vmatpush1.msra.mxu0 0.0
          %2470 = vmatprep.subr.mxu0 0.0
          %2471 = vmatpush1.msra.mxu0 0.0
          %2472 = vmatprep.subr.mxu0 0.0
          %2473 = vmatpush1.msra.mxu0 0.0
          %2474 = vmatprep.subr.mxu0 0.0
          %2475 = vmatpush1.msra.mxu0 0.0
          %2476 = vmatprep.subr.mxu0 0.0
          %2477 = vmatpush1.msra.mxu0 0.0
          %2478 = vmatprep.subr.mxu0 0.0
          %2479 = vmatpush1.msra.mxu0 0.0
          %2480 = vmatprep.subr.mxu0 0.0
          %2481 = vmatpush1.msra.mxu0 0.0
          %2482 = vmatprep.subr.mxu0 0.0
          %2483 = vmatpush1.msra.mxu0 0.0
          %2484 = vmatprep.subr.mxu0 0.0
          %2485 = vmatpush1.msra.mxu0 0.0
          %2486 = vmatprep.subr.mxu0 0.0
          %2487 = vmatpush1.msra.mxu0 0.0
          %2488 = vmatprep.subr.mxu0 0.0
          %2489 = vmatpush1.msra.mxu0 0.0
          %2490 = vmatprep.subr.mxu0 0.0
          %2491 = vmatpush1.msra.mxu0 0.0
          %2492 = vmatprep.subr.mxu0 0.0
          %2493 = vmatpush1.msra.mxu0 0.0
          %2494 = vmatprep.subr.mxu0 0.0
          %2495 = vmatpush1.msra.mxu0 0.0
          %2496 = vmatprep.mubr.f32.mxu0 0.0
          %2497 = vmatmul.mubr.f32.gmra.mrb[0].mxu0 %v525
          %v2498 = vpop.f32.mrb[0].mxu0
          %v2499 = vadd.f32 %v2424, %v2498
          %v2500 = vpop.f32.mrb[0].mxu0
          %2501 = vmatprep.mubr.f32.mxu0 0.0
          %2502 = vmatmul.mubr.f32.gmra.mrb[0].mxu0 %v528
          %v2503 = vpop.f32.mrb[0].mxu0
          %v2504 = vadd.f32 %v2429, %v2503
          %v2505 = vpop.f32.mrb[0].mxu0
          %2506 = vdwg.mxu0
          %v2508 = vsel %vm248, %v354, 0
          %v2511 = vsel %vm248, %v355, 0
          %2513 = vmatprep.subr.mxu0 0.0
          %2514 = vmatpush1.msra.mxu0 %v2499
          %2515 = vmatprep.subr.mxu0 0.0
          %2516 = vmatpush1.msra.mxu0 %v2504
          %2517 = vmatprep.subr.mxu0 0.0
          %2518 = vmatpush1.msra.mxu0 0.0
          %2519 = vmatprep.subr.mxu0 0.0
          %2520 = vmatpush1.msra.mxu0 0.0
          %2521 = vmatprep.subr.mxu0 0.0
          %2522 = vmatpush1.msra.mxu0 0.0
          %2523 = vmatprep.subr.mxu0 0.0
          %2524 = vmatpush1.msra.mxu0 0.0
          %2525 = vmatprep.subr.mxu0 0.0
          %2526 = vmatpush1.msra.mxu0 0.0
          %2527 = vmatprep.subr.mxu0 0.0
          %2528 = vmatpush1.msra.mxu0 0.0
          %2529 = vmatprep.subr.mxu0 0.0
          %2530 = vmatpush1.msra.mxu0 0.0
          %2531 = vmatprep.subr.mxu0 0.0
          %2532 = vmatpush1.msra.mxu0 0.0
          %2533 = vmatprep.subr.mxu0 0.0
          %2534 = vmatpush1.msra.mxu0 0.0
          %2535 = vmatprep.subr.mxu0 0.0
          %2536 = vmatpush1.msra.mxu0 0.0
          %2537 = vmatprep.subr.mxu0 0.0
          %2538 = vmatpush1.msra.mxu0 0.0
          %2539 = vmatprep.subr.mxu0 0.0
          %2540 = vmatpush1.msra.mxu0 0.0
          %2541 = vmatprep.subr.mxu0 0.0
          %2542 = vmatpush1.msra.mxu0 0.0
          %2543 = vmatprep.subr.mxu0 0.0
          %2544 = vmatpush1.msra.mxu0 0.0
          %2545 = vmatprep.subr.mxu0 0.0
          %2546 = vmatpush1.msra.mxu0 0.0
          %2547 = vmatprep.subr.mxu0 0.0
          %2548 = vmatpush1.msra.mxu0 0.0
          %2549 = vmatprep.subr.mxu0 0.0
          %2550 = vmatpush1.msra.mxu0 0.0
          %2551 = vmatprep.subr.mxu0 0.0
          %2552 = vmatpush1.msra.mxu0 0.0
          %2553 = vmatprep.subr.mxu0 0.0
          %2554 = vmatpush1.msra.mxu0 0.0
          %2555 = vmatprep.subr.mxu0 0.0
          %2556 = vmatpush1.msra.mxu0 0.0
          %2557 = vmatprep.subr.mxu0 0.0
          %2558 = vmatpush1.msra.mxu0 0.0
          %2559 = vmatprep.subr.mxu0 0.0
          %2560 = vmatpush1.msra.mxu0 0.0
          %2561 = vmatprep.subr.mxu0 0.0
          %2562 = vmatpush1.msra.mxu0 0.0
          %2563 = vmatprep.subr.mxu0 0.0
          %2564 = vmatpush1.msra.mxu0 0.0
          %2565 = vmatprep.subr.mxu0 0.0
          %2566 = vmatpush1.msra.mxu0 0.0
          %2567 = vmatprep.subr.mxu0 0.0
          %2568 = vmatpush1.msra.mxu0 0.0
          %2569 = vmatprep.subr.mxu0 0.0
          %2570 = vmatpush1.msra.mxu0 0.0
          %2571 = vmatprep.subr.mxu0 0.0
          %2572 = vmatpush1.msra.mxu0 0.0
          %2573 = vmatprep.subr.mxu0 0.0
          %2574 = vmatpush1.msra.mxu0 0.0
          %2575 = vmatprep.subr.mxu0 0.0
          %2576 = vmatpush1.msra.mxu0 0.0
          %2577 = vmatprep.mubr.f32.mxu0 0.0
          %2578 = vmatmul.mubr.f32.gmra.mrb[0].mxu0 %v2508
          %v2579 = vpop.f32.mrb[0].mxu0
          %v2580 = vadd.f32 0.0, %v2579
          %v2581 = vpop.f32.mrb[0].mxu0
          %2582 = vmatprep.mubr.f32.mxu0 0.0
          %2583 = vmatmul.mubr.f32.gmra.mrb[0].mxu0 %v2511
          %v2584 = vpop.f32.mrb[0].mxu0
          %v2585 = vadd.f32 0.0, %v2584
          %v2586 = vpop.f32.mrb[0].mxu0
          %2587 = vdwg.mxu0
          %v2588 = vadd.f32 %v2271, %v2580
          %v2589 = vadd.f32 %v2272, %v2585
          %v2590 = vsub.f32 0.0, %v2588
          %v2591 = vsub.f32 0.0, %v2589
          %v2592 = vmul.f32 %v2590, 1.442695
          %v2593 = vpow.pop %v2592
          %v2594 = vmul.f32 %v2591, 1.442695
          %v2595 = vpow.pop %v2594
          %v2596 = vadd.f32 %v2593, 1.0
          %v2597 = vadd.f32 %v2595, 1.0
          %v2598 = vrcp.pop %v2596
          %v2599 = vmul.f32 1.0, %v2598
          %v2600 = vrcp.pop %v2597
          %v2601 = vmul.f32 1.0, %v2600
          %2602 = vst.msk [vmem:[%s220] sm:$0xff] %vm248, %v2599
          %2603 = vst.msk [vmem:[%s220 + $0x8] sm:$0xff] %vm248, %v2601
        $region48: #{tpu_custom_call.1} parent=31 // pred_fallthru
          _
        %s2604 = sand.u32 %s112, 1
        %s2605 = scalar_lea.sflag [#allocation7], %s2604
        %s2606 = sand.u32 %s112, 1
        %s2607 = smul.addr %s2606, 16
        %s2608 = scalar_lea.vmem [#allocation10], %s2607
        // Predicated region
        $region49: #{tpu_custom_call.1} parent=31 // pred_check
          %p2609 = pneg %p122
        $region50: #{tpu_custom_call.1} parent=31 // pred_check_branch
          %2611 = sbr.rel (%p2609) target = $region52
        $region51: #{tpu_custom_call.1} parent=31 // pred_region
          %s2613 = ssub.s32 256, 256
          %2614 = vsyncadd %s2605, %s2613
          %s2615 = smul.addr %s26, 2
          %s2616 = smul.addr %s2615, 128
          %s2617 = scalar_lea.hbm %s3, %s2616
          %s2618 = sshll.u32 %s2608, 4
          %s2619 = int_to_ptr.vmem [resolvable:$true] %s2618
          %2624 = dma.vmem_to_hbm [thread:$0]  %s2619, 256, %s2617, %s2605, 128, 128, 8
        $region52: #{tpu_custom_call.1} parent=31 // pred_fallthru
          _
      $region32: #{tpu_custom_call.1} parent=5 // pred_fallthru
        _
      %p2625 = scmp.le.s32.totalorder 2, %s17
      // Predicated region
      $region53: #{tpu_custom_call.1} parent=5 // pred_check
        %p2626 = pneg %p2625
      $region54: #{tpu_custom_call.1} parent=5 // pred_check_branch
        %2628 = sbr.rel (%p2626) target = $region56
      $region55: #{tpu_custom_call.1} parent=5 // pred_region
        %s2629 = ssub.s32 %s17, 2
        // Predicated region
        $region57: #{tpu_custom_call.1} parent=55 // pred_check
          %p2630 = pneg %p128
        $region58: #{tpu_custom_call.1} parent=55 // pred_check_branch
          %2632 = sbr.rel (%p2630) target = $region60
        $region59: #{tpu_custom_call.1} parent=55 // pred_region
          %s2633 = sand.u32 %s113, 1
          %s2634 = scalar_lea.sflag [#allocation7], %s2633
          %s2635 = sand.u32 %s113, 1
          %s2636 = smul.addr %s2635, 16
          %s2637 = scalar_lea.vmem [#allocation10], %s2636
          %2638 = dma.done %s2634, 256
        $region60: #{tpu_custom_call.1} parent=55 // pred_fallthru
          _
      $region56: #{tpu_custom_call.1} parent=5 // pred_fallthru
        _
    $region6: #{tpu_custom_call.1} parent=1 // loop_footer
      %s21 = sadd.s32 1, %s17
    $region7: #{tpu_custom_call.1} parent=1 // loop_footer_branch
      %16 = sbr.rel target = $region3
    $region8: #{tpu_custom_call.1} parent=1 // loop_exit
      _
    %2639 = vsyncpa [#allocation6], 1
    %s2640 = scalar_lea.sflag [#allocation6], 1
    %2641 = vsyncpa %s2640, 1
    %2642 = vsyncpa [#allocation7], 1
    %s2643 = scalar_lea.sflag [#allocation7], 1
    %2644 = vsyncpa %s2643, 1
    %2645 = vsyncpa [#allocation8], 1
    %s2646 = scalar_lea.sflag [#allocation8], 1
    %2647 = vsyncpa %s2646, 1

</llo_original>
